<compile_context>
chip_gen: v7x
topology: tpu7x:2x2x1
jax: 0.10.0
libtpu: 0.0.40
codegen_flags: <defaults>
</compile_context>

<pallas_src>
import functools

import jax
import jax.numpy as jnp
from jax.experimental import pallas as pl
from jax.experimental.pallas import tpu as pltpu


def _pick_row_tile(oh: int, max_rows: int) -> int:
    """Largest multiple-of-8 divisor of `oh` that is <= max_rows (else full oh)."""
    best = None
    t = 8
    while t <= min(oh, max_rows):
        if oh % t == 0:
            best = t
        t += 8
    return best if best is not None else oh


def _upsample_conv_kernel(x_ref, w_ref, b_ref, o_ref, *, KH, KW, stride, TH, OW,
                          Cin, Cout, TH_in):
    """One (batch n, output-row-tile r) step.

    x_ref : (1, Cin, Hp, Wp)        whole padded image (bf16), resident across r
    w_ref : (Cout, KH*KW*Cin)       flattened weight (bf16), (kh, kw, ci) order
    b_ref : (Cout, 1)               bias (f32)
    o_ref : (1, Cout, TH, OW)       NCHW output row tile
    """
    r = pl.program_id(1)
    row0 = pl.multiple_of(r * (TH * stride), TH * stride)

    # Contiguous input row band needed by this output row tile (with halo).
    xb = x_ref[0, :, pl.ds(row0, TH_in), :]          # (Cin, TH_in, Wp) bf16

    w2 = w_ref[...]                                   # (Cout, KH*KW*Cin) bf16
    bias = b_ref[...].astype(jnp.float32)             # (Cout, 1), hoisted

    # Hoist 2-D per-input-row views once; reused by all taps / output rows.
    needed = sorted({h * stride + kh for h in range(TH) for kh in range(KH)})
    row2d = {ih: xb[:, ih, :] for ih in needed}       # each (Cin, Wp)

    w_span = (OW - 1) * stride + 1
    out_rows = []
    for h in range(TH):
        pieces = []
        for kh in range(KH):
            src = row2d[h * stride + kh]              # (Cin, Wp)
            for kw in range(KW):
                # Lane slice (strided along W when stride > 1): (Cin, OW)
                pieces.append(
                    jax.lax.slice(src, (0, kw), (Cin, kw + w_span), (1, stride)))
        rhs = jnp.concatenate(pieces, axis=0)         # (KH*KW*Cin, OW) bf16
        acc = jnp.dot(w2, rhs, preferred_element_type=jnp.float32)  # (Cout, OW)
        out_rows.append(acc + bias)
    out = jnp.stack(out_rows, axis=1)                 # (Cout, TH, OW) f32
    o_ref[...] = out[None].astype(o_ref.dtype)


def upsample_conv_forward(x_nchw, w_oihw, bias, *, kernel_size, stride,
                          upsample=None, row_tile=16):
    """Equivalent of UpsampleConvLayer.forward (NCHW in, NCHW out)."""
    pad = kernel_size // 2
    Cout, Cin, KH, KW = w_oihw.shape
    out_dtype = x_nchw.dtype

    # bf16 activations: halves HBM traffic; accumulation stays f32 in-kernel.
    x = x_nchw.astype(jnp.bfloat16)
    if upsample is not None and upsample != 1:
        # TODO(synk): fold nearest upsample + reflection pad into the kernel's
        # index arithmetic to remove these extra HBM passes over the input.
        x = jnp.repeat(jnp.repeat(x, upsample, axis=2), upsample, axis=3)
    x_pad = jnp.pad(x, ((0, 0), (0, 0), (pad, pad), (pad, pad)), mode="reflect")

    N, _, Hp, Wp = x_pad.shape
    OH = (Hp - KH) // stride + 1
    OW = (Wp - KW) // stride + 1

    TH = _pick_row_tile(OH, row_tile)
    TH_in = (TH - 1) * stride + KH

    # OIHW -> (Cout, KH, KW, Cin) -> (Cout, KH*KW*Cin); matches the kernel's
    # (kh, kw, ci) im2col ordering.  bf16 for the MXU.
    w_flat = jnp.transpose(w_oihw, (0, 2, 3, 1)).reshape(
        Cout, KH * KW * Cin).astype(jnp.bfloat16)
    b_col = bias.reshape(Cout, 1).astype(jnp.float32)

    kernel = functools.partial(
        _upsample_conv_kernel, KH=KH, KW=KW, stride=stride, TH=TH, OW=OW,
        Cin=Cin, Cout=Cout, TH_in=TH_in)

    return pl.pallas_call(
        kernel,
        out_shape=jax.ShapeDtypeStruct((N, Cout, OH, OW), out_dtype),
        grid=(N, OH // TH),
        in_specs=[
            # Full padded image; block index ignores r -> DMA'd once per image.
            pl.BlockSpec((1, Cin, Hp, Wp), lambda n, r: (n, 0, 0, 0)),
            pl.BlockSpec((Cout, KH * KW * Cin), lambda n, r: (0, 0)),
            pl.BlockSpec((Cout, 1), lambda n, r: (0, 0)),
        ],
        out_specs=pl.BlockSpec((1, Cout, TH, OW), lambda n, r: (n, 0, r, 0)),
        compiler_params=pltpu.CompilerParams(
            dimension_semantics=("parallel", "parallel"),
            vmem_limit_bytes=64 * 1024 * 1024),
    )(x_pad, w_flat, b_col)


def _reference_forward(x, w, b, *, kernel_size, stride, upsample):
    # Reference uses the same bf16-rounded inputs so only accumulation order differs.
    xq = x.astype(jnp.bfloat16).astype(jnp.float32)
    wq = w.astype(jnp.bfloat16).astype(jnp.float32)
    if upsample is not None and upsample != 1:
        xq = jnp.repeat(jnp.repeat(xq, upsample, axis=2), upsample, axis=3)
    pad = kernel_size // 2
    xq = jnp.pad(xq, ((0, 0), (0, 0), (pad, pad), (pad, pad)), mode="reflect")
    out = jax.lax.conv_general_dilated(
        xq, wq, window_strides=(stride, stride), padding="VALID",
        dimension_numbers=("NCHW", "OIHW", "NCHW"),
        precision=jax.lax.Precision.HIGHEST)
    return out + b.reshape(1, -1, 1, 1)


if __name__ == "__main__":
    in_channels, out_channels = 4, 8
    kernel_size, stride = 3, 1
    upsample = 2
    N, H, W = 2, 16, 16

    key = jax.random.PRNGKey(0)
    kx, kw_key, kb_key = jax.random.split(key, 3)

    x = jax.random.normal(kx, (N, in_channels, H, W), dtype=jnp.float32)

    # nn.Conv2d default init: uniform +-1/sqrt(fan_in).
    fan_in = in_channels * kernel_size * kernel_size
    bound = 1.0 / (fan_in ** 0.5)
    w = jax.random.uniform(
        kw_key, (out_channels, in_channels, kernel_size, kernel_size),
        minval=-bound, maxval=bound, dtype=jnp.float32)
    b = jax.random.uniform(
        kb_key, (out_channels,), minval=-bound, maxval=bound, dtype=jnp.float32)

    out = upsample_conv_forward(
        x, w, b, kernel_size=kernel_size, stride=stride, upsample=upsample)
    out = jax.block_until_ready(out)

    ref = _reference_forward(
        x, w, b, kernel_size=kernel_size, stride=stride, upsample=upsample)
    ref = jax.block_until_ready(ref)

    assert out.shape == ref.shape, (out.shape, ref.shape)
    max_err = float(jnp.max(jnp.abs(out - ref)))
    assert jnp.allclose(out, ref, atol=1e-3, rtol=1e-3), max_err

    print("KERNEL_OK")
</pallas_src>

<mosaic_0001>
module attributes {stable_mosaic.version = 11 : i64} {
  func.func @_upsample_conv_kernel(%arg0: i32, %arg1: i32, %arg2: memref<1x4x34x34xbf16, #tpu.memory_space<vmem>>, %arg3: memref<8x36xbf16, #tpu.memory_space<vmem>>, %arg4: memref<8x1xf32, #tpu.memory_space<vmem>>, %arg5: memref<1x8x16x32xf32, #tpu.memory_space<vmem>>) attributes {dimension_semantics = [#tpu.dimension_semantics<parallel>, #tpu.dimension_semantics<parallel>], iteration_bounds = array<i64: 2, 2>, scalar_prefetch = 0 : i64, scratch_operands = 0 : i64, tpu.core_type = #tpu.core_type<tc>, window_params = [{transform_indices = @transform_0, window_bounds = array<i64: 1, 4, 34, 34>}, {pipeline_mode = #tpu.pipeline_mode<synchronous>, transform_indices = @transform_1, window_bounds = array<i64: 8, 36>}, {pipeline_mode = #tpu.pipeline_mode<synchronous>, transform_indices = @transform_2, window_bounds = array<i64: 8, 1>}, {transform_indices = @transform_3, window_bounds = array<i64: 1, 8, 16, 32>}]} {
    %c16_i32 = arith.constant 16 : i32
    %0 = arith.muli %arg1, %c16_i32 : i32
    %1 = tpu.assume_multiple %0, 16 : i32
    %c0 = arith.constant 0 : index
    %c0_0 = arith.constant 0 : index
    %2 = arith.index_cast %1 : i32 to index
    %c0_1 = arith.constant 0 : index
    %3 = vector.load %arg2[%c0, %c0_0, %2, %c0_1] : memref<1x4x34x34xbf16, #tpu.memory_space<vmem>>, vector<1x4x18x34xbf16>
    %4 = vector.shape_cast %3 : vector<1x4x18x34xbf16> to vector<4x18x34xbf16>
    %c0_2 = arith.constant 0 : index
    %c0_3 = arith.constant 0 : index
    %5 = vector.load %arg3[%c0_2, %c0_3] : memref<8x36xbf16, #tpu.memory_space<vmem>>, vector<8x36xbf16>
    %c0_4 = arith.constant 0 : index
    %c0_5 = arith.constant 0 : index
    %6 = vector.load %arg4[%c0_4, %c0_5] : memref<8x1xf32, #tpu.memory_space<vmem>>, vector<8x1xf32>
    %7 = vector.extract_strided_slice %4 {offsets = [0, 0, 0], sizes = [4, 1, 34], strides = [1, 1, 1]} : vector<4x18x34xbf16> to vector<4x1x34xbf16>
    %8 = vector.shape_cast %7 : vector<4x1x34xbf16> to vector<4x34xbf16>
    %9 = vector.extract_strided_slice %4 {offsets = [0, 1, 0], sizes = [4, 1, 34], strides = [1, 1, 1]} : vector<4x18x34xbf16> to vector<4x1x34xbf16>
    %10 = vector.shape_cast %9 : vector<4x1x34xbf16> to vector<4x34xbf16>
    %11 = vector.extract_strided_slice %4 {offsets = [0, 2, 0], sizes = [4, 1, 34], strides = [1, 1, 1]} : vector<4x18x34xbf16> to vector<4x1x34xbf16>
    %12 = vector.shape_cast %11 : vector<4x1x34xbf16> to vector<4x34xbf16>
    %13 = vector.extract_strided_slice %4 {offsets = [0, 3, 0], sizes = [4, 1, 34], strides = [1, 1, 1]} : vector<4x18x34xbf16> to vector<4x1x34xbf16>
    %14 = vector.shape_cast %13 : vector<4x1x34xbf16> to vector<4x34xbf16>
    %15 = vector.extract_strided_slice %4 {offsets = [0, 4, 0], sizes = [4, 1, 34], strides = [1, 1, 1]} : vector<4x18x34xbf16> to vector<4x1x34xbf16>
    %16 = vector.shape_cast %15 : vector<4x1x34xbf16> to vector<4x34xbf16>
    %17 = vector.extract_strided_slice %4 {offsets = [0, 5, 0], sizes = [4, 1, 34], strides = [1, 1, 1]} : vector<4x18x34xbf16> to vector<4x1x34xbf16>
    %18 = vector.shape_cast %17 : vector<4x1x34xbf16> to vector<4x34xbf16>
    %19 = vector.extract_strided_slice %4 {offsets = [0, 6, 0], sizes = [4, 1, 34], strides = [1, 1, 1]} : vector<4x18x34xbf16> to vector<4x1x34xbf16>
    %20 = vector.shape_cast %19 : vector<4x1x34xbf16> to vector<4x34xbf16>
    %21 = vector.extract_strided_slice %4 {offsets = [0, 7, 0], sizes = [4, 1, 34], strides = [1, 1, 1]} : vector<4x18x34xbf16> to vector<4x1x34xbf16>
    %22 = vector.shape_cast %21 : vector<4x1x34xbf16> to vector<4x34xbf16>
    %23 = vector.extract_strided_slice %4 {offsets = [0, 8, 0], sizes = [4, 1, 34], strides = [1, 1, 1]} : vector<4x18x34xbf16> to vector<4x1x34xbf16>
    %24 = vector.shape_cast %23 : vector<4x1x34xbf16> to vector<4x34xbf16>
    %25 = vector.extract_strided_slice %4 {offsets = [0, 9, 0], sizes = [4, 1, 34], strides = [1, 1, 1]} : vector<4x18x34xbf16> to vector<4x1x34xbf16>
    %26 = vector.shape_cast %25 : vector<4x1x34xbf16> to vector<4x34xbf16>
    %27 = vector.extract_strided_slice %4 {offsets = [0, 10, 0], sizes = [4, 1, 34], strides = [1, 1, 1]} : vector<4x18x34xbf16> to vector<4x1x34xbf16>
    %28 = vector.shape_cast %27 : vector<4x1x34xbf16> to vector<4x34xbf16>
    %29 = vector.extract_strided_slice %4 {offsets = [0, 11, 0], sizes = [4, 1, 34], strides = [1, 1, 1]} : vector<4x18x34xbf16> to vector<4x1x34xbf16>
    %30 = vector.shape_cast %29 : vector<4x1x34xbf16> to vector<4x34xbf16>
    %31 = vector.extract_strided_slice %4 {offsets = [0, 12, 0], sizes = [4, 1, 34], strides = [1, 1, 1]} : vector<4x18x34xbf16> to vector<4x1x34xbf16>
    %32 = vector.shape_cast %31 : vector<4x1x34xbf16> to vector<4x34xbf16>
    %33 = vector.extract_strided_slice %4 {offsets = [0, 13, 0], sizes = [4, 1, 34], strides = [1, 1, 1]} : vector<4x18x34xbf16> to vector<4x1x34xbf16>
    %34 = vector.shape_cast %33 : vector<4x1x34xbf16> to vector<4x34xbf16>
    %35 = vector.extract_strided_slice %4 {offsets = [0, 14, 0], sizes = [4, 1, 34], strides = [1, 1, 1]} : vector<4x18x34xbf16> to vector<4x1x34xbf16>
    %36 = vector.shape_cast %35 : vector<4x1x34xbf16> to vector<4x34xbf16>
    %37 = vector.extract_strided_slice %4 {offsets = [0, 15, 0], sizes = [4, 1, 34], strides = [1, 1, 1]} : vector<4x18x34xbf16> to vector<4x1x34xbf16>
    %38 = vector.shape_cast %37 : vector<4x1x34xbf16> to vector<4x34xbf16>
    %39 = vector.extract_strided_slice %4 {offsets = [0, 16, 0], sizes = [4, 1, 34], strides = [1, 1, 1]} : vector<4x18x34xbf16> to vector<4x1x34xbf16>
    %40 = vector.shape_cast %39 : vector<4x1x34xbf16> to vector<4x34xbf16>
    %41 = vector.extract_strided_slice %4 {offsets = [0, 17, 0], sizes = [4, 1, 34], strides = [1, 1, 1]} : vector<4x18x34xbf16> to vector<4x1x34xbf16>
    %42 = vector.shape_cast %41 : vector<4x1x34xbf16> to vector<4x34xbf16>
    %43 = vector.extract_strided_slice %8 {offsets = [0, 0], sizes = [4, 32], strides = [1, 1]} : vector<4x34xbf16> to vector<4x32xbf16>
    %44 = vector.extract_strided_slice %8 {offsets = [0, 1], sizes = [4, 32], strides = [1, 1]} : vector<4x34xbf16> to vector<4x32xbf16>
    %45 = vector.extract_strided_slice %8 {offsets = [0, 2], sizes = [4, 32], strides = [1, 1]} : vector<4x34xbf16> to vector<4x32xbf16>
    %46 = vector.extract_strided_slice %10 {offsets = [0, 0], sizes = [4, 32], strides = [1, 1]} : vector<4x34xbf16> to vector<4x32xbf16>
    %47 = vector.extract_strided_slice %10 {offsets = [0, 1], sizes = [4, 32], strides = [1, 1]} : vector<4x34xbf16> to vector<4x32xbf16>
    %48 = vector.extract_strided_slice %10 {offsets = [0, 2], sizes = [4, 32], strides = [1, 1]} : vector<4x34xbf16> to vector<4x32xbf16>
    %49 = vector.extract_strided_slice %12 {offsets = [0, 0], sizes = [4, 32], strides = [1, 1]} : vector<4x34xbf16> to vector<4x32xbf16>
    %50 = vector.extract_strided_slice %12 {offsets = [0, 1], sizes = [4, 32], strides = [1, 1]} : vector<4x34xbf16> to vector<4x32xbf16>
    %51 = vector.extract_strided_slice %12 {offsets = [0, 2], sizes = [4, 32], strides = [1, 1]} : vector<4x34xbf16> to vector<4x32xbf16>
    %52 = tpu.concatenate %43, %44, %45, %46, %47, %48, %49, %50, %51 in 0 : vector<4x32xbf16>, vector<4x32xbf16>, vector<4x32xbf16>, vector<4x32xbf16>, vector<4x32xbf16>, vector<4x32xbf16>, vector<4x32xbf16>, vector<4x32xbf16>, vector<4x32xbf16> -> vector<36x32xbf16>
    %cst = arith.constant dense<0.000000e+00> : vector<8x32xf32>
    %53 = tpu.matmul %5, %52, %cst {dimension_numbers = #tpu.dot_dimension_numbers<[1], [0], [0], [1], [0, 0, 1, 1], [], []>} : vector<8x36xbf16>, vector<36x32xbf16>, vector<8x32xf32> -> vector<8x32xf32>
    %54 = vector.broadcast %6 : vector<8x1xf32> to vector<8x32xf32>
    %55 = arith.addf %53, %54 : vector<8x32xf32>
    %56 = vector.extract_strided_slice %10 {offsets = [0, 0], sizes = [4, 32], strides = [1, 1]} : vector<4x34xbf16> to vector<4x32xbf16>
    %57 = vector.extract_strided_slice %10 {offsets = [0, 1], sizes = [4, 32], strides = [1, 1]} : vector<4x34xbf16> to vector<4x32xbf16>
    %58 = vector.extract_strided_slice %10 {offsets = [0, 2], sizes = [4, 32], strides = [1, 1]} : vector<4x34xbf16> to vector<4x32xbf16>
    %59 = vector.extract_strided_slice %12 {offsets = [0, 0], sizes = [4, 32], strides = [1, 1]} : vector<4x34xbf16> to vector<4x32xbf16>
    %60 = vector.extract_strided_slice %12 {offsets = [0, 1], sizes = [4, 32], strides = [1, 1]} : vector<4x34xbf16> to vector<4x32xbf16>
    %61 = vector.extract_strided_slice %12 {offsets = [0, 2], sizes = [4, 32], strides = [1, 1]} : vector<4x34xbf16> to vector<4x32xbf16>
    %62 = vector.extract_strided_slice %14 {offsets = [0, 0], sizes = [4, 32], strides = [1, 1]} : vector<4x34xbf16> to vector<4x32xbf16>
    %63 = vector.extract_strided_slice %14 {offsets = [0, 1], sizes = [4, 32], strides = [1, 1]} : vector<4x34xbf16> to vector<4x32xbf16>
    %64 = vector.extract_strided_slice %14 {offsets = [0, 2], sizes = [4, 32], strides = [1, 1]} : vector<4x34xbf16> to vector<4x32xbf16>
    %65 = tpu.concatenate %56, %57, %58, %59, %60, %61, %62, %63, %64 in 0 : vector<4x32xbf16>, vector<4x32xbf16>, vector<4x32xbf16>, vector<4x32xbf16>, vector<4x32xbf16>, vector<4x32xbf16>, vector<4x32xbf16>, vector<4x32xbf16>, vector<4x32xbf16> -> vector<36x32xbf16>
    %cst_6 = arith.constant dense<0.000000e+00> : vector<8x32xf32>
    %66 = tpu.matmul %5, %65, %cst_6 {dimension_numbers = #tpu.dot_dimension_numbers<[1], [0], [0], [1], [0, 0, 1, 1], [], []>} : vector<8x36xbf16>, vector<36x32xbf16>, vector<8x32xf32> -> vector<8x32xf32>
    %67 = vector.broadcast %6 : vector<8x1xf32> to vector<8x32xf32>
    %68 = arith.addf %66, %67 : vector<8x32xf32>
    %69 = vector.extract_strided_slice %12 {offsets = [0, 0], sizes = [4, 32], strides = [1, 1]} : vector<4x34xbf16> to vector<4x32xbf16>
    %70 = vector.extract_strided_slice %12 {offsets = [0, 1], sizes = [4, 32], strides = [1, 1]} : vector<4x34xbf16> to vector<4x32xbf16>
    %71 = vector.extract_strided_slice %12 {offsets = [0, 2], sizes = [4, 32], strides = [1, 1]} : vector<4x34xbf16> to vector<4x32xbf16>
    %72 = vector.extract_strided_slice %14 {offsets = [0, 0], sizes = [4, 32], strides = [1, 1]} : vector<4x34xbf16> to vector<4x32xbf16>
    %73 = vector.extract_strided_slice %14 {offsets = [0, 1], sizes = [4, 32], strides = [1, 1]} : vector<4x34xbf16> to vector<4x32xbf16>
    %74 = vector.extract_strided_slice %14 {offsets = [0, 2], sizes = [4, 32], strides = [1, 1]} : vector<4x34xbf16> to vector<4x32xbf16>
    %75 = vector.extract_strided_slice %16 {offsets = [0, 0], sizes = [4, 32], strides = [1, 1]} : vector<4x34xbf16> to vector<4x32xbf16>
    %76 = vector.extract_strided_slice %16 {offsets = [0, 1], sizes = [4, 32], strides = [1, 1]} : vector<4x34xbf16> to vector<4x32xbf16>
    %77 = vector.extract_strided_slice %16 {offsets = [0, 2], sizes = [4, 32], strides = [1, 1]} : vector<4x34xbf16> to vector<4x32xbf16>
    %78 = tpu.concatenate %69, %70, %71, %72, %73, %74, %75, %76, %77 in 0 : vector<4x32xbf16>, vector<4x32xbf16>, vector<4x32xbf16>, vector<4x32xbf16>, vector<4x32xbf16>, vector<4x32xbf16>, vector<4x32xbf16>, vector<4x32xbf16>, vector<4x32xbf16> -> vector<36x32xbf16>
    %cst_7 = arith.constant dense<0.000000e+00> : vector<8x32xf32>
    %79 = tpu.matmul %5, %78, %cst_7 {dimension_numbers = #tpu.dot_dimension_numbers<[1], [0], [0], [1], [0, 0, 1, 1], [], []>} : vector<8x36xbf16>, vector<36x32xbf16>, vector<8x32xf32> -> vector<8x32xf32>
    %80 = vector.broadcast %6 : vector<8x1xf32> to vector<8x32xf32>
    %81 = arith.addf %79, %80 : vector<8x32xf32>
    %82 = vector.extract_strided_slice %14 {offsets = [0, 0], sizes = [4, 32], strides = [1, 1]} : vector<4x34xbf16> to vector<4x32xbf16>
    %83 = vector.extract_strided_slice %14 {offsets = [0, 1], sizes = [4, 32], strides = [1, 1]} : vector<4x34xbf16> to vector<4x32xbf16>
    %84 = vector.extract_strided_slice %14 {offsets = [0, 2], sizes = [4, 32], strides = [1, 1]} : vector<4x34xbf16> to vector<4x32xbf16>
    %85 = vector.extract_strided_slice %16 {offsets = [0, 0], sizes = [4, 32], strides = [1, 1]} : vector<4x34xbf16> to vector<4x32xbf16>
    %86 = vector.extract_strided_slice %16 {offsets = [0, 1], sizes = [4, 32], strides = [1, 1]} : vector<4x34xbf16> to vector<4x32xbf16>
    %87 = vector.extract_strided_slice %16 {offsets = [0, 2], sizes = [4, 32], strides = [1, 1]} : vector<4x34xbf16> to vector<4x32xbf16>
    %88 = vector.extract_strided_slice %18 {offsets = [0, 0], sizes = [4, 32], strides = [1, 1]} : vector<4x34xbf16> to vector<4x32xbf16>
    %89 = vector.extract_strided_slice %18 {offsets = [0, 1], sizes = [4, 32], strides = [1, 1]} : vector<4x34xbf16> to vector<4x32xbf16>
    %90 = vector.extract_strided_slice %18 {offsets = [0, 2], sizes = [4, 32], strides = [1, 1]} : vector<4x34xbf16> to vector<4x32xbf16>
    %91 = tpu.concatenate %82, %83, %84, %85, %86, %87, %88, %89, %90 in 0 : vector<4x32xbf16>, vector<4x32xbf16>, vector<4x32xbf16>, vector<4x32xbf16>, vector<4x32xbf16>, vector<4x32xbf16>, vector<4x32xbf16>, vector<4x32xbf16>, vector<4x32xbf16> -> vector<36x32xbf16>
    %cst_8 = arith.constant dense<0.000000e+00> : vector<8x32xf32>
    %92 = tpu.matmul %5, %91, %cst_8 {dimension_numbers = #tpu.dot_dimension_numbers<[1], [0], [0], [1], [0, 0, 1, 1], [], []>} : vector<8x36xbf16>, vector<36x32xbf16>, vector<8x32xf32> -> vector<8x32xf32>
    %93 = vector.broadcast %6 : vector<8x1xf32> to vector<8x32xf32>
    %94 = arith.addf %92, %93 : vector<8x32xf32>
    %95 = vector.extract_strided_slice %16 {offsets = [0, 0], sizes = [4, 32], strides = [1, 1]} : vector<4x34xbf16> to vector<4x32xbf16>
    %96 = vector.extract_strided_slice %16 {offsets = [0, 1], sizes = [4, 32], strides = [1, 1]} : vector<4x34xbf16> to vector<4x32xbf16>
    %97 = vector.extract_strided_slice %16 {offsets = [0, 2], sizes = [4, 32], strides = [1, 1]} : vector<4x34xbf16> to vector<4x32xbf16>
    %98 = vector.extract_strided_slice %18 {offsets = [0, 0], sizes = [4, 32], strides = [1, 1]} : vector<4x34xbf16> to vector<4x32xbf16>
    %99 = vector.extract_strided_slice %18 {offsets = [0, 1], sizes = [4, 32], strides = [1, 1]} : vector<4x34xbf16> to vector<4x32xbf16>
    %100 = vector.extract_strided_slice %18 {offsets = [0, 2], sizes = [4, 32], strides = [1, 1]} : vector<4x34xbf16> to vector<4x32xbf16>
    %101 = vector.extract_strided_slice %20 {offsets = [0, 0], sizes = [4, 32], strides = [1, 1]} : vector<4x34xbf16> to vector<4x32xbf16>
    %102 = vector.extract_strided_slice %20 {offsets = [0, 1], sizes = [4, 32], strides = [1, 1]} : vector<4x34xbf16> to vector<4x32xbf16>
    %103 = vector.extract_strided_slice %20 {offsets = [0, 2], sizes = [4, 32], strides = [1, 1]} : vector<4x34xbf16> to vector<4x32xbf16>
    %104 = tpu.concatenate %95, %96, %97, %98, %99, %100, %101, %102, %103 in 0 : vector<4x32xbf16>, vector<4x32xbf16>, vector<4x32xbf16>, vector<4x32xbf16>, vector<4x32xbf16>, vector<4x32xbf16>, vector<4x32xbf16>, vector<4x32xbf16>, vector<4x32xbf16> -> vector<36x32xbf16>
    %cst_9 = arith.constant dense<0.000000e+00> : vector<8x32xf32>
    %105 = tpu.matmul %5, %104, %cst_9 {dimension_numbers = #tpu.dot_dimension_numbers<[1], [0], [0], [1], [0, 0, 1, 1], [], []>} : vector<8x36xbf16>, vector<36x32xbf16>, vector<8x32xf32> -> vector<8x32xf32>
    %106 = vector.broadcast %6 : vector<8x1xf32> to vector<8x32xf32>
    %107 = arith.addf %105, %106 : vector<8x32xf32>
    %108 = vector.extract_strided_slice %18 {offsets = [0, 0], sizes = [4, 32], strides = [1, 1]} : vector<4x34xbf16> to vector<4x32xbf16>
    %109 = vector.extract_strided_slice %18 {offsets = [0, 1], sizes = [4, 32], strides = [1, 1]} : vector<4x34xbf16> to vector<4x32xbf16>
    %110 = vector.extract_strided_slice %18 {offsets = [0, 2], sizes = [4, 32], strides = [1, 1]} : vector<4x34xbf16> to vector<4x32xbf16>
    %111 = vector.extract_strided_slice %20 {offsets = [0, 0], sizes = [4, 32], strides = [1, 1]} : vector<4x34xbf16> to vector<4x32xbf16>
    %112 = vector.extract_strided_slice %20 {offsets = [0, 1], sizes = [4, 32], strides = [1, 1]} : vector<4x34xbf16> to vector<4x32xbf16>
    %113 = vector.extract_strided_slice %20 {offsets = [0, 2], sizes = [4, 32], strides = [1, 1]} : vector<4x34xbf16> to vector<4x32xbf16>
    %114 = vector.extract_strided_slice %22 {offsets = [0, 0], sizes = [4, 32], strides = [1, 1]} : vector<4x34xbf16> to vector<4x32xbf16>
    %115 = vector.extract_strided_slice %22 {offsets = [0, 1], sizes = [4, 32], strides = [1, 1]} : vector<4x34xbf16> to vector<4x32xbf16>
    %116 = vector.extract_strided_slice %22 {offsets = [0, 2], sizes = [4, 32], strides = [1, 1]} : vector<4x34xbf16> to vector<4x32xbf16>
    %117 = tpu.concatenate %108, %109, %110, %111, %112, %113, %114, %115, %116 in 0 : vector<4x32xbf16>, vector<4x32xbf16>, vector<4x32xbf16>, vector<4x32xbf16>, vector<4x32xbf16>, vector<4x32xbf16>, vector<4x32xbf16>, vector<4x32xbf16>, vector<4x32xbf16> -> vector<36x32xbf16>
    %cst_10 = arith.constant dense<0.000000e+00> : vector<8x32xf32>
    %118 = tpu.matmul %5, %117, %cst_10 {dimension_numbers = #tpu.dot_dimension_numbers<[1], [0], [0], [1], [0, 0, 1, 1], [], []>} : vector<8x36xbf16>, vector<36x32xbf16>, vector<8x32xf32> -> vector<8x32xf32>
    %119 = vector.broadcast %6 : vector<8x1xf32> to vector<8x32xf32>
    %120 = arith.addf %118, %119 : vector<8x32xf32>
    %121 = vector.extract_strided_slice %20 {offsets = [0, 0], sizes = [4, 32], strides = [1, 1]} : vector<4x34xbf16> to vector<4x32xbf16>
    %122 = vector.extract_strided_slice %20 {offsets = [0, 1], sizes = [4, 32], strides = [1, 1]} : vector<4x34xbf16> to vector<4x32xbf16>
    %123 = vector.extract_strided_slice %20 {offsets = [0, 2], sizes = [4, 32], strides = [1, 1]} : vector<4x34xbf16> to vector<4x32xbf16>
    %124 = vector.extract_strided_slice %22 {offsets = [0, 0], sizes = [4, 32], strides = [1, 1]} : vector<4x34xbf16> to vector<4x32xbf16>
    %125 = vector.extract_strided_slice %22 {offsets = [0, 1], sizes = [4, 32], strides = [1, 1]} : vector<4x34xbf16> to vector<4x32xbf16>
    %126 = vector.extract_strided_slice %22 {offsets = [0, 2], sizes = [4, 32], strides = [1, 1]} : vector<4x34xbf16> to vector<4x32xbf16>
    %127 = vector.extract_strided_slice %24 {offsets = [0, 0], sizes = [4, 32], strides = [1, 1]} : vector<4x34xbf16> to vector<4x32xbf16>
    %128 = vector.extract_strided_slice %24 {offsets = [0, 1], sizes = [4, 32], strides = [1, 1]} : vector<4x34xbf16> to vector<4x32xbf16>
    %129 = vector.extract_strided_slice %24 {offsets = [0, 2], sizes = [4, 32], strides = [1, 1]} : vector<4x34xbf16> to vector<4x32xbf16>
    %130 = tpu.concatenate %121, %122, %123, %124, %125, %126, %127, %128, %129 in 0 : vector<4x32xbf16>, vector<4x32xbf16>, vector<4x32xbf16>, vector<4x32xbf16>, vector<4x32xbf16>, vector<4x32xbf16>, vector<4x32xbf16>, vector<4x32xbf16>, vector<4x32xbf16> -> vector<36x32xbf16>
    %cst_11 = arith.constant dense<0.000000e+00> : vector<8x32xf32>
    %131 = tpu.matmul %5, %130, %cst_11 {dimension_numbers = #tpu.dot_dimension_numbers<[1], [0], [0], [1], [0, 0, 1, 1], [], []>} : vector<8x36xbf16>, vector<36x32xbf16>, vector<8x32xf32> -> vector<8x32xf32>
    %132 = vector.broadcast %6 : vector<8x1xf32> to vector<8x32xf32>
    %133 = arith.addf %131, %132 : vector<8x32xf32>
    %134 = vector.extract_strided_slice %22 {offsets = [0, 0], sizes = [4, 32], strides = [1, 1]} : vector<4x34xbf16> to vector<4x32xbf16>
    %135 = vector.extract_strided_slice %22 {offsets = [0, 1], sizes = [4, 32], strides = [1, 1]} : vector<4x34xbf16> to vector<4x32xbf16>
    %136 = vector.extract_strided_slice %22 {offsets = [0, 2], sizes = [4, 32], strides = [1, 1]} : vector<4x34xbf16> to vector<4x32xbf16>
    %137 = vector.extract_strided_slice %24 {offsets = [0, 0], sizes = [4, 32], strides = [1, 1]} : vector<4x34xbf16> to vector<4x32xbf16>
    %138 = vector.extract_strided_slice %24 {offsets = [0, 1], sizes = [4, 32], strides = [1, 1]} : vector<4x34xbf16> to vector<4x32xbf16>
    %139 = vector.extract_strided_slice %24 {offsets = [0, 2], sizes = [4, 32], strides = [1, 1]} : vector<4x34xbf16> to vector<4x32xbf16>
    %140 = vector.extract_strided_slice %26 {offsets = [0, 0], sizes = [4, 32], strides = [1, 1]} : vector<4x34xbf16> to vector<4x32xbf16>
    %141 = vector.extract_strided_slice %26 {offsets = [0, 1], sizes = [4, 32], strides = [1, 1]} : vector<4x34xbf16> to vector<4x32xbf16>
    %142 = vector.extract_strided_slice %26 {offsets = [0, 2], sizes = [4, 32], strides = [1, 1]} : vector<4x34xbf16> to vector<4x32xbf16>
    %143 = tpu.concatenate %134, %135, %136, %137, %138, %139, %140, %141, %142 in 0 : vector<4x32xbf16>, vector<4x32xbf16>, vector<4x32xbf16>, vector<4x32xbf16>, vector<4x32xbf16>, vector<4x32xbf16>, vector<4x32xbf16>, vector<4x32xbf16>, vector<4x32xbf16> -> vector<36x32xbf16>
    %cst_12 = arith.constant dense<0.000000e+00> : vector<8x32xf32>
    %144 = tpu.matmul %5, %143, %cst_12 {dimension_numbers = #tpu.dot_dimension_numbers<[1], [0], [0], [1], [0, 0, 1, 1], [], []>} : vector<8x36xbf16>, vector<36x32xbf16>, vector<8x32xf32> -> vector<8x32xf32>
    %145 = vector.broadcast %6 : vector<8x1xf32> to vector<8x32xf32>
    %146 = arith.addf %144, %145 : vector<8x32xf32>
    %147 = vector.extract_strided_slice %24 {offsets = [0, 0], sizes = [4, 32], strides = [1, 1]} : vector<4x34xbf16> to vector<4x32xbf16>
    %148 = vector.extract_strided_slice %24 {offsets = [0, 1], sizes = [4, 32], strides = [1, 1]} : vector<4x34xbf16> to vector<4x32xbf16>
    %149 = vector.extract_strided_slice %24 {offsets = [0, 2], sizes = [4, 32], strides = [1, 1]} : vector<4x34xbf16> to vector<4x32xbf16>
    %150 = vector.extract_strided_slice %26 {offsets = [0, 0], sizes = [4, 32], strides = [1, 1]} : vector<4x34xbf16> to vector<4x32xbf16>
    %151 = vector.extract_strided_slice %26 {offsets = [0, 1], sizes = [4, 32], strides = [1, 1]} : vector<4x34xbf16> to vector<4x32xbf16>
    %152 = vector.extract_strided_slice %26 {offsets = [0, 2], sizes = [4, 32], strides = [1, 1]} : vector<4x34xbf16> to vector<4x32xbf16>
    %153 = vector.extract_strided_slice %28 {offsets = [0, 0], sizes = [4, 32], strides = [1, 1]} : vector<4x34xbf16> to vector<4x32xbf16>
    %154 = vector.extract_strided_slice %28 {offsets = [0, 1], sizes = [4, 32], strides = [1, 1]} : vector<4x34xbf16> to vector<4x32xbf16>
    %155 = vector.extract_strided_slice %28 {offsets = [0, 2], sizes = [4, 32], strides = [1, 1]} : vector<4x34xbf16> to vector<4x32xbf16>
    %156 = tpu.concatenate %147, %148, %149, %150, %151, %152, %153, %154, %155 in 0 : vector<4x32xbf16>, vector<4x32xbf16>, vector<4x32xbf16>, vector<4x32xbf16>, vector<4x32xbf16>, vector<4x32xbf16>, vector<4x32xbf16>, vector<4x32xbf16>, vector<4x32xbf16> -> vector<36x32xbf16>
    %cst_13 = arith.constant dense<0.000000e+00> : vector<8x32xf32>
    %157 = tpu.matmul %5, %156, %cst_13 {dimension_numbers = #tpu.dot_dimension_numbers<[1], [0], [0], [1], [0, 0, 1, 1], [], []>} : vector<8x36xbf16>, vector<36x32xbf16>, vector<8x32xf32> -> vector<8x32xf32>
    %158 = vector.broadcast %6 : vector<8x1xf32> to vector<8x32xf32>
    %159 = arith.addf %157, %158 : vector<8x32xf32>
    %160 = vector.extract_strided_slice %26 {offsets = [0, 0], sizes = [4, 32], strides = [1, 1]} : vector<4x34xbf16> to vector<4x32xbf16>
    %161 = vector.extract_strided_slice %26 {offsets = [0, 1], sizes = [4, 32], strides = [1, 1]} : vector<4x34xbf16> to vector<4x32xbf16>
    %162 = vector.extract_strided_slice %26 {offsets = [0, 2], sizes = [4, 32], strides = [1, 1]} : vector<4x34xbf16> to vector<4x32xbf16>
    %163 = vector.extract_strided_slice %28 {offsets = [0, 0], sizes = [4, 32], strides = [1, 1]} : vector<4x34xbf16> to vector<4x32xbf16>
    %164 = vector.extract_strided_slice %28 {offsets = [0, 1], sizes = [4, 32], strides = [1, 1]} : vector<4x34xbf16> to vector<4x32xbf16>
    %165 = vector.extract_strided_slice %28 {offsets = [0, 2], sizes = [4, 32], strides = [1, 1]} : vector<4x34xbf16> to vector<4x32xbf16>
    %166 = vector.extract_strided_slice %30 {offsets = [0, 0], sizes = [4, 32], strides = [1, 1]} : vector<4x34xbf16> to vector<4x32xbf16>
    %167 = vector.extract_strided_slice %30 {offsets = [0, 1], sizes = [4, 32], strides = [1, 1]} : vector<4x34xbf16> to vector<4x32xbf16>
    %168 = vector.extract_strided_slice %30 {offsets = [0, 2], sizes = [4, 32], strides = [1, 1]} : vector<4x34xbf16> to vector<4x32xbf16>
    %169 = tpu.concatenate %160, %161, %162, %163, %164, %165, %166, %167, %168 in 0 : vector<4x32xbf16>, vector<4x32xbf16>, vector<4x32xbf16>, vector<4x32xbf16>, vector<4x32xbf16>, vector<4x32xbf16>, vector<4x32xbf16>, vector<4x32xbf16>, vector<4x32xbf16> -> vector<36x32xbf16>
    %cst_14 = arith.constant dense<0.000000e+00> : vector<8x32xf32>
    %170 = tpu.matmul %5, %169, %cst_14 {dimension_numbers = #tpu.dot_dimension_numbers<[1], [0], [0], [1], [0, 0, 1, 1], [], []>} : vector<8x36xbf16>, vector<36x32xbf16>, vector<8x32xf32> -> vector<8x32xf32>
    %171 = vector.broadcast %6 : vector<8x1xf32> to vector<8x32xf32>
    %172 = arith.addf %170, %171 : vector<8x32xf32>
    %173 = vector.extract_strided_slice %28 {offsets = [0, 0], sizes = [4, 32], strides = [1, 1]} : vector<4x34xbf16> to vector<4x32xbf16>
    %174 = vector.extract_strided_slice %28 {offsets = [0, 1], sizes = [4, 32], strides = [1, 1]} : vector<4x34xbf16> to vector<4x32xbf16>
    %175 = vector.extract_strided_slice %28 {offsets = [0, 2], sizes = [4, 32], strides = [1, 1]} : vector<4x34xbf16> to vector<4x32xbf16>
    %176 = vector.extract_strided_slice %30 {offsets = [0, 0], sizes = [4, 32], strides = [1, 1]} : vector<4x34xbf16> to vector<4x32xbf16>
    %177 = vector.extract_strided_slice %30 {offsets = [0, 1], sizes = [4, 32], strides = [1, 1]} : vector<4x34xbf16> to vector<4x32xbf16>
    %178 = vector.extract_strided_slice %30 {offsets = [0, 2], sizes = [4, 32], strides = [1, 1]} : vector<4x34xbf16> to vector<4x32xbf16>
    %179 = vector.extract_strided_slice %32 {offsets = [0, 0], sizes = [4, 32], strides = [1, 1]} : vector<4x34xbf16> to vector<4x32xbf16>
    %180 = vector.extract_strided_slice %32 {offsets = [0, 1], sizes = [4, 32], strides = [1, 1]} : vector<4x34xbf16> to vector<4x32xbf16>
    %181 = vector.extract_strided_slice %32 {offsets = [0, 2], sizes = [4, 32], strides = [1, 1]} : vector<4x34xbf16> to vector<4x32xbf16>
    %182 = tpu.concatenate %173, %174, %175, %176, %177, %178, %179, %180, %181 in 0 : vector<4x32xbf16>, vector<4x32xbf16>, vector<4x32xbf16>, vector<4x32xbf16>, vector<4x32xbf16>, vector<4x32xbf16>, vector<4x32xbf16>, vector<4x32xbf16>, vector<4x32xbf16> -> vector<36x32xbf16>
    %cst_15 = arith.constant dense<0.000000e+00> : vector<8x32xf32>
    %183 = tpu.matmul %5, %182, %cst_15 {dimension_numbers = #tpu.dot_dimension_numbers<[1], [0], [0], [1], [0, 0, 1, 1], [], []>} : vector<8x36xbf16>, vector<36x32xbf16>, vector<8x32xf32> -> vector<8x32xf32>
    %184 = vector.broadcast %6 : vector<8x1xf32> to vector<8x32xf32>
    %185 = arith.addf %183, %184 : vector<8x32xf32>
    %186 = vector.extract_strided_slice %30 {offsets = [0, 0], sizes = [4, 32], strides = [1, 1]} : vector<4x34xbf16> to vector<4x32xbf16>
    %187 = vector.extract_strided_slice %30 {offsets = [0, 1], sizes = [4, 32], strides = [1, 1]} : vector<4x34xbf16> to vector<4x32xbf16>
    %188 = vector.extract_strided_slice %30 {offsets = [0, 2], sizes = [4, 32], strides = [1, 1]} : vector<4x34xbf16> to vector<4x32xbf16>
    %189 = vector.extract_strided_slice %32 {offsets = [0, 0], sizes = [4, 32], strides = [1, 1]} : vector<4x34xbf16> to vector<4x32xbf16>
    %190 = vector.extract_strided_slice %32 {offsets = [0, 1], sizes = [4, 32], strides = [1, 1]} : vector<4x34xbf16> to vector<4x32xbf16>
    %191 = vector.extract_strided_slice %32 {offsets = [0, 2], sizes = [4, 32], strides = [1, 1]} : vector<4x34xbf16> to vector<4x32xbf16>
    %192 = vector.extract_strided_slice %34 {offsets = [0, 0], sizes = [4, 32], strides = [1, 1]} : vector<4x34xbf16> to vector<4x32xbf16>
    %193 = vector.extract_strided_slice %34 {offsets = [0, 1], sizes = [4, 32], strides = [1, 1]} : vector<4x34xbf16> to vector<4x32xbf16>
    %194 = vector.extract_strided_slice %34 {offsets = [0, 2], sizes = [4, 32], strides = [1, 1]} : vector<4x34xbf16> to vector<4x32xbf16>
    %195 = tpu.concatenate %186, %187, %188, %189, %190, %191, %192, %193, %194 in 0 : vector<4x32xbf16>, vector<4x32xbf16>, vector<4x32xbf16>, vector<4x32xbf16>, vector<4x32xbf16>, vector<4x32xbf16>, vector<4x32xbf16>, vector<4x32xbf16>, vector<4x32xbf16> -> vector<36x32xbf16>
    %cst_16 = arith.constant dense<0.000000e+00> : vector<8x32xf32>
    %196 = tpu.matmul %5, %195, %cst_16 {dimension_numbers = #tpu.dot_dimension_numbers<[1], [0], [0], [1], [0, 0, 1, 1], [], []>} : vector<8x36xbf16>, vector<36x32xbf16>, vector<8x32xf32> -> vector<8x32xf32>
    %197 = vector.broadcast %6 : vector<8x1xf32> to vector<8x32xf32>
    %198 = arith.addf %196, %197 : vector<8x32xf32>
    %199 = vector.extract_strided_slice %32 {offsets = [0, 0], sizes = [4, 32], strides = [1, 1]} : vector<4x34xbf16> to vector<4x32xbf16>
    %200 = vector.extract_strided_slice %32 {offsets = [0, 1], sizes = [4, 32], strides = [1, 1]} : vector<4x34xbf16> to vector<4x32xbf16>
    %201 = vector.extract_strided_slice %32 {offsets = [0, 2], sizes = [4, 32], strides = [1, 1]} : vector<4x34xbf16> to vector<4x32xbf16>
    %202 = vector.extract_strided_slice %34 {offsets = [0, 0], sizes = [4, 32], strides = [1, 1]} : vector<4x34xbf16> to vector<4x32xbf16>
    %203 = vector.extract_strided_slice %34 {offsets = [0, 1], sizes = [4, 32], strides = [1, 1]} : vector<4x34xbf16> to vector<4x32xbf16>
    %204 = vector.extract_strided_slice %34 {offsets = [0, 2], sizes = [4, 32], strides = [1, 1]} : vector<4x34xbf16> to vector<4x32xbf16>
    %205 = vector.extract_strided_slice %36 {offsets = [0, 0], sizes = [4, 32], strides = [1, 1]} : vector<4x34xbf16> to vector<4x32xbf16>
    %206 = vector.extract_strided_slice %36 {offsets = [0, 1], sizes = [4, 32], strides = [1, 1]} : vector<4x34xbf16> to vector<4x32xbf16>
    %207 = vector.extract_strided_slice %36 {offsets = [0, 2], sizes = [4, 32], strides = [1, 1]} : vector<4x34xbf16> to vector<4x32xbf16>
    %208 = tpu.concatenate %199, %200, %201, %202, %203, %204, %205, %206, %207 in 0 : vector<4x32xbf16>, vector<4x32xbf16>, vector<4x32xbf16>, vector<4x32xbf16>, vector<4x32xbf16>, vector<4x32xbf16>, vector<4x32xbf16>, vector<4x32xbf16>, vector<4x32xbf16> -> vector<36x32xbf16>
    %cst_17 = arith.constant dense<0.000000e+00> : vector<8x32xf32>
    %209 = tpu.matmul %5, %208, %cst_17 {dimension_numbers = #tpu.dot_dimension_numbers<[1], [0], [0], [1], [0, 0, 1, 1], [], []>} : vector<8x36xbf16>, vector<36x32xbf16>, vector<8x32xf32> -> vector<8x32xf32>
    %210 = vector.broadcast %6 : vector<8x1xf32> to vector<8x32xf32>
    %211 = arith.addf %209, %210 : vector<8x32xf32>
    %212 = vector.extract_strided_slice %34 {offsets = [0, 0], sizes = [4, 32], strides = [1, 1]} : vector<4x34xbf16> to vector<4x32xbf16>
    %213 = vector.extract_strided_slice %34 {offsets = [0, 1], sizes = [4, 32], strides = [1, 1]} : vector<4x34xbf16> to vector<4x32xbf16>
    %214 = vector.extract_strided_slice %34 {offsets = [0, 2], sizes = [4, 32], strides = [1, 1]} : vector<4x34xbf16> to vector<4x32xbf16>
    %215 = vector.extract_strided_slice %36 {offsets = [0, 0], sizes = [4, 32], strides = [1, 1]} : vector<4x34xbf16> to vector<4x32xbf16>
    %216 = vector.extract_strided_slice %36 {offsets = [0, 1], sizes = [4, 32], strides = [1, 1]} : vector<4x34xbf16> to vector<4x32xbf16>
    %217 = vector.extract_strided_slice %36 {offsets = [0, 2], sizes = [4, 32], strides = [1, 1]} : vector<4x34xbf16> to vector<4x32xbf16>
    %218 = vector.extract_strided_slice %38 {offsets = [0, 0], sizes = [4, 32], strides = [1, 1]} : vector<4x34xbf16> to vector<4x32xbf16>
    %219 = vector.extract_strided_slice %38 {offsets = [0, 1], sizes = [4, 32], strides = [1, 1]} : vector<4x34xbf16> to vector<4x32xbf16>
    %220 = vector.extract_strided_slice %38 {offsets = [0, 2], sizes = [4, 32], strides = [1, 1]} : vector<4x34xbf16> to vector<4x32xbf16>
    %221 = tpu.concatenate %212, %213, %214, %215, %216, %217, %218, %219, %220 in 0 : vector<4x32xbf16>, vector<4x32xbf16>, vector<4x32xbf16>, vector<4x32xbf16>, vector<4x32xbf16>, vector<4x32xbf16>, vector<4x32xbf16>, vector<4x32xbf16>, vector<4x32xbf16> -> vector<36x32xbf16>
    %cst_18 = arith.constant dense<0.000000e+00> : vector<8x32xf32>
    %222 = tpu.matmul %5, %221, %cst_18 {dimension_numbers = #tpu.dot_dimension_numbers<[1], [0], [0], [1], [0, 0, 1, 1], [], []>} : vector<8x36xbf16>, vector<36x32xbf16>, vector<8x32xf32> -> vector<8x32xf32>
    %223 = vector.broadcast %6 : vector<8x1xf32> to vector<8x32xf32>
    %224 = arith.addf %222, %223 : vector<8x32xf32>
    %225 = vector.extract_strided_slice %36 {offsets = [0, 0], sizes = [4, 32], strides = [1, 1]} : vector<4x34xbf16> to vector<4x32xbf16>
    %226 = vector.extract_strided_slice %36 {offsets = [0, 1], sizes = [4, 32], strides = [1, 1]} : vector<4x34xbf16> to vector<4x32xbf16>
    %227 = vector.extract_strided_slice %36 {offsets = [0, 2], sizes = [4, 32], strides = [1, 1]} : vector<4x34xbf16> to vector<4x32xbf16>
    %228 = vector.extract_strided_slice %38 {offsets = [0, 0], sizes = [4, 32], strides = [1, 1]} : vector<4x34xbf16> to vector<4x32xbf16>
    %229 = vector.extract_strided_slice %38 {offsets = [0, 1], sizes = [4, 32], strides = [1, 1]} : vector<4x34xbf16> to vector<4x32xbf16>
    %230 = vector.extract_strided_slice %38 {offsets = [0, 2], sizes = [4, 32], strides = [1, 1]} : vector<4x34xbf16> to vector<4x32xbf16>
    %231 = vector.extract_strided_slice %40 {offsets = [0, 0], sizes = [4, 32], strides = [1, 1]} : vector<4x34xbf16> to vector<4x32xbf16>
    %232 = vector.extract_strided_slice %40 {offsets = [0, 1], sizes = [4, 32], strides = [1, 1]} : vector<4x34xbf16> to vector<4x32xbf16>
    %233 = vector.extract_strided_slice %40 {offsets = [0, 2], sizes = [4, 32], strides = [1, 1]} : vector<4x34xbf16> to vector<4x32xbf16>
    %234 = tpu.concatenate %225, %226, %227, %228, %229, %230, %231, %232, %233 in 0 : vector<4x32xbf16>, vector<4x32xbf16>, vector<4x32xbf16>, vector<4x32xbf16>, vector<4x32xbf16>, vector<4x32xbf16>, vector<4x32xbf16>, vector<4x32xbf16>, vector<4x32xbf16> -> vector<36x32xbf16>
    %cst_19 = arith.constant dense<0.000000e+00> : vector<8x32xf32>
    %235 = tpu.matmul %5, %234, %cst_19 {dimension_numbers = #tpu.dot_dimension_numbers<[1], [0], [0], [1], [0, 0, 1, 1], [], []>} : vector<8x36xbf16>, vector<36x32xbf16>, vector<8x32xf32> -> vector<8x32xf32>
    %236 = vector.broadcast %6 : vector<8x1xf32> to vector<8x32xf32>
    %237 = arith.addf %235, %236 : vector<8x32xf32>
    %238 = vector.extract_strided_slice %38 {offsets = [0, 0], sizes = [4, 32], strides = [1, 1]} : vector<4x34xbf16> to vector<4x32xbf16>
    %239 = vector.extract_strided_slice %38 {offsets = [0, 1], sizes = [4, 32], strides = [1, 1]} : vector<4x34xbf16> to vector<4x32xbf16>
    %240 = vector.extract_strided_slice %38 {offsets = [0, 2], sizes = [4, 32], strides = [1, 1]} : vector<4x34xbf16> to vector<4x32xbf16>
    %241 = vector.extract_strided_slice %40 {offsets = [0, 0], sizes = [4, 32], strides = [1, 1]} : vector<4x34xbf16> to vector<4x32xbf16>
    %242 = vector.extract_strided_slice %40 {offsets = [0, 1], sizes = [4, 32], strides = [1, 1]} : vector<4x34xbf16> to vector<4x32xbf16>
    %243 = vector.extract_strided_slice %40 {offsets = [0, 2], sizes = [4, 32], strides = [1, 1]} : vector<4x34xbf16> to vector<4x32xbf16>
    %244 = vector.extract_strided_slice %42 {offsets = [0, 0], sizes = [4, 32], strides = [1, 1]} : vector<4x34xbf16> to vector<4x32xbf16>
    %245 = vector.extract_strided_slice %42 {offsets = [0, 1], sizes = [4, 32], strides = [1, 1]} : vector<4x34xbf16> to vector<4x32xbf16>
    %246 = vector.extract_strided_slice %42 {offsets = [0, 2], sizes = [4, 32], strides = [1, 1]} : vector<4x34xbf16> to vector<4x32xbf16>
    %247 = tpu.concatenate %238, %239, %240, %241, %242, %243, %244, %245, %246 in 0 : vector<4x32xbf16>, vector<4x32xbf16>, vector<4x32xbf16>, vector<4x32xbf16>, vector<4x32xbf16>, vector<4x32xbf16>, vector<4x32xbf16>, vector<4x32xbf16>, vector<4x32xbf16> -> vector<36x32xbf16>
    %cst_20 = arith.constant dense<0.000000e+00> : vector<8x32xf32>
    %248 = tpu.matmul %5, %247, %cst_20 {dimension_numbers = #tpu.dot_dimension_numbers<[1], [0], [0], [1], [0, 0, 1, 1], [], []>} : vector<8x36xbf16>, vector<36x32xbf16>, vector<8x32xf32> -> vector<8x32xf32>
    %249 = vector.broadcast %6 : vector<8x1xf32> to vector<8x32xf32>
    %250 = arith.addf %248, %249 : vector<8x32xf32>
    %251 = vector.shape_cast %55 : vector<8x32xf32> to vector<8x1x32xf32>
    %252 = vector.shape_cast %68 : vector<8x32xf32> to vector<8x1x32xf32>
    %253 = vector.shape_cast %81 : vector<8x32xf32> to vector<8x1x32xf32>
    %254 = vector.shape_cast %94 : vector<8x32xf32> to vector<8x1x32xf32>
    %255 = vector.shape_cast %107 : vector<8x32xf32> to vector<8x1x32xf32>
    %256 = vector.shape_cast %120 : vector<8x32xf32> to vector<8x1x32xf32>
    %257 = vector.shape_cast %133 : vector<8x32xf32> to vector<8x1x32xf32>
    %258 = vector.shape_cast %146 : vector<8x32xf32> to vector<8x1x32xf32>
    %259 = vector.shape_cast %159 : vector<8x32xf32> to vector<8x1x32xf32>
    %260 = vector.shape_cast %172 : vector<8x32xf32> to vector<8x1x32xf32>
    %261 = vector.shape_cast %185 : vector<8x32xf32> to vector<8x1x32xf32>
    %262 = vector.shape_cast %198 : vector<8x32xf32> to vector<8x1x32xf32>
    %263 = vector.shape_cast %211 : vector<8x32xf32> to vector<8x1x32xf32>
    %264 = vector.shape_cast %224 : vector<8x32xf32> to vector<8x1x32xf32>
    %265 = vector.shape_cast %237 : vector<8x32xf32> to vector<8x1x32xf32>
    %266 = vector.shape_cast %250 : vector<8x32xf32> to vector<8x1x32xf32>
    %267 = tpu.concatenate %251, %252, %253, %254, %255, %256, %257, %258, %259, %260, %261, %262, %263, %264, %265, %266 in 1 : vector<8x1x32xf32>, vector<8x1x32xf32>, vector<8x1x32xf32>, vector<8x1x32xf32>, vector<8x1x32xf32>, vector<8x1x32xf32>, vector<8x1x32xf32>, vector<8x1x32xf32>, vector<8x1x32xf32>, vector<8x1x32xf32>, vector<8x1x32xf32>, vector<8x1x32xf32>, vector<8x1x32xf32>, vector<8x1x32xf32>, vector<8x1x32xf32>, vector<8x1x32xf32> -> vector<8x16x32xf32>
    %268 = vector.shape_cast %267 : vector<8x16x32xf32> to vector<1x8x16x32xf32>
    %c0_21 = arith.constant 0 : index
    %c0_22 = arith.constant 0 : index
    %c0_23 = arith.constant 0 : index
    %c0_24 = arith.constant 0 : index
    %269 = vector.load %arg5[%c0_21, %c0_22, %c0_23, %c0_24] : memref<1x8x16x32xf32, #tpu.memory_space<vmem>>, vector<1x8x16x32xf32>
    tpu.vector_store %arg5[%c0_21, %c0_22, %c0_23, %c0_24], %268 {strides = array<i32>} : memref<1x8x16x32xf32, #tpu.memory_space<vmem>>, vector<1x8x16x32xf32>,
    return
  }
  func.func @transform_0(%arg0: i32, %arg1: i32) -> (i32, i32, i32, i32) {
    %c0_i32 = arith.constant 0 : i32
    %c0_i32_0 = arith.constant 0 : i32
    %c0_i32_1 = arith.constant 0 : i32
    %c0_i32_2 = arith.constant 0 : i32
    return %arg0, %c0_i32, %c0_i32_0, %c0_i32_1 : i32, i32, i32, i32
  }
  func.func @transform_1(%arg0: i32, %arg1: i32) -> (i32, i32) {
    %c0_i32 = arith.constant 0 : i32
    %c0_i32_0 = arith.constant 0 : i32
    %c0_i32_1 = arith.constant 0 : i32
    return %c0_i32, %c0_i32_0 : i32, i32
  }
  func.func @transform_2(%arg0: i32, %arg1: i32) -> (i32, i32) {
    %c0_i32 = arith.constant 0 : i32
    %c0_i32_0 = arith.constant 0 : i32
    %c0_i32_1 = arith.constant 0 : i32
    return %c0_i32, %c0_i32_0 : i32, i32
  }
  func.func @transform_3(%arg0: i32, %arg1: i32) -> (i32, i32, i32, i32) {
    %c0_i32 = arith.constant 0 : i32
    %c0_i32_0 = arith.constant 0 : i32
    %c0_i32_1 = arith.constant 0 : i32
    return %arg0, %c0_i32, %arg1, %c0_i32_0 : i32, i32, i32, i32
  }
}

</mosaic_0001>

<llo_original>
// kernel: tpu_custom_call.1
$region0: #{tpu_custom_call.1}
  #allocation0 [shape = 'u32[]', space=smem, size = 0x4, offset = 0x4, fixed_abs, tag = 'smem constant byte address 0x4 - core index']
  #allocation1 [shape = 'u32[144,128]{1,0:T(1,128)}', space=vmem, size = 0x12000, scoped, tag = 'internal scratch']
  #allocation9 [shape = 's32[]', space=sflag, size = 0x4, offset = 0, fixed_abs, tag = 'sflag constant byte address 0x0 - dummy sync flag']
  %s0 = inlined_call_operand.hbm [shape: bf16[2,4,34,34], index: 0, kind: input, shape index: {}]
  %s1 = inlined_call_operand.hbm [shape: bf16[8,36], index: 1, kind: input, shape index: {}]
  %s2 = inlined_call_operand.hbm [shape: f32[8,1], index: 2, kind: input, shape index: {}]
  %s3 = inlined_call_operand.hbm [shape: f32[2,8,32,32], index: 3, kind: output, shape index: {}]
  %s4 = sld [smem:[#allocation0]]
  $region57: #{tpu_custom_call.1} parent=0
    _
  %s6 = ssub.s32 1, %s4
  %s7 = scalar_select 0, %s6, %s4
  $region1: #{tpu_custom_call.1} parent=0
    #allocation2 [shape = 'u8[81920]{0}', space=vmem, size = 0x14000, scoped, tag = 'input window, operand 0']
    #allocation3 [shape = 's32[2]{0}', space=sflag, size = 0x8, scoped, tag = 'scoped memory for tpu_custom_call.1']
    #allocation4 [shape = 's32[2]{0}', space=sflag, size = 0x8, scoped, tag = 'scoped memory for tpu_custom_call.1']
    #allocation5 [shape = 'u8[2048]{0}', space=vmem, size = 0x800, scoped, tag = 'input window, operand 1, single buffered']
    #allocation6 [shape = 's32[1]{0}', space=sflag, size = 0x4, scoped, tag = 'scoped memory for tpu_custom_call.1']
    #allocation7 [shape = 'u8[4096]{0}', space=vmem, size = 0x1000, scoped, tag = 'input window, operand 2, single buffered']
    #allocation8 [shape = 'u8[131072]{0}', space=vmem, size = 0x20000, scoped, tag = 'output window, operand 0']
    %8 = vsyncpa [#allocation3], 0
    %s9 = scalar_lea.sflag [#allocation3], 1
    %10 = vsyncpa %s9, 0
    %11 = vsyncpa [#allocation6], 0
    %12 = vsyncpa [#allocation4], 0
    %s13 = scalar_lea.sflag [#allocation4], 1
    %14 = vsyncpa %s13, 0
    loop: start=0, step=1, limit=6
    $region2: #{tpu_custom_call.1} parent=1 // loop_pre_header
      _
    $region3: #{tpu_custom_call.1} parent=1 // loop_header
      %s16 = sphi 0, %s20
      %p17 = scmp.ge.s32.totalorder %s16, 6
      %s23 = sphi 0, %s35
      %s24 = sphi 0, %s31
      %s25 = sphi 0, %s23
      %s26 = sphi 0, %s24
      %s27 = sphi 0, %s25
      %s28 = sphi 0, %s26
      %s38 = sphi 0, %s40
      %s41 = sphi 0, %s38
      %s42 = sphi 0, %s41
      %s58 = sphi 0, %s42
      %s62 = sphi 0, %s62
      %s64 = sphi 0, %s62
      %s65 = sphi 0, %s64
      %s79 = sphi 0, %s65
      %s83 = sphi 0, %s83
      %s85 = sphi 0, %s83
      %s86 = sphi 0, %s85
      %s100 = sphi 0, %s86
      %s108 = sphi 0, %s110
      %s111 = sphi 0, %s108
      %s112 = sphi 0, %s111
      %s128 = sphi 0, %s112
    $region4: #{tpu_custom_call.1} parent=1 // loop_header_branch
      %19 = sbr.rel (%p17) target = $region8
    $region5: #{tpu_custom_call.1} parent=1 // loop_body
      %s21 = ssub.s32 %s16, 1
      %s22 = ssub.s32 %s16, 2
      %s29 = sadd.s32 1, %s24
      %p30 = scmp.ge.s32.totalorder %s29, 2
      %s31 = scalar_select %p30, 0, %s29
      %s32 = sadd.s32 1, %s23
      %s33 = scalar_select %p30, %s32, %s23
      %p34 = scmp.ge.s32.totalorder %s33, 2
      %s35 = scalar_select %p34, 0, %s33
      %s36 = ssub.s32 %s23, %s35
      %p37 = scmp.eq.s32.totalorder %s36, 0
      %s39 = sadd.s32 %s38, 1
      %s40 = scalar_select %p37, %s38, %s39
      %p43 = pneg %p37
      %p44 = scmp.eq.s32.totalorder %s16, 3
      %p45 = por %p43, %p44
      %p46 = scmp.ne.s32.totalorder %s38, %s41
      %p47 = scmp.eq.s32.totalorder %s16, 0
      %p48 = por %p46, %p47
      %p49 = scmp.ne.s32.totalorder %s38, %s41
      %p50 = scmp.eq.s32.totalorder %s21, 3
      %p51 = por %p49, %p50
      %p52 = scmp.ne.s32.totalorder %s41, %s42
      %p53 = scmp.eq.s32.totalorder %s21, 0
      %p54 = por %p52, %p53
      %p55 = scmp.ne.s32.totalorder %s41, %s42
      %p56 = scmp.eq.s32.totalorder %s22, 3
      %p57 = por %p55, %p56
      %p59 = scmp.ne.s32.totalorder %s42, %s58
      %p60 = scmp.eq.s32.totalorder %s22, 0
      %p61 = por %p59, %p60
      %s63 = sadd.s32 %s62, 1
      %p66 = scmp.eq.s32.totalorder %s16, 3
      %p67 = scmp.ne.s32.totalorder %s62, %s64
      %p68 = scmp.eq.s32.totalorder %s16, 0
      %p69 = por %p67, %p68
      %p70 = scmp.ne.s32.totalorder %s62, %s64
      %p71 = scmp.eq.s32.totalorder %s21, 3
      %p72 = por %p70, %p71
      %p73 = scmp.ne.s32.totalorder %s64, %s65
      %p74 = scmp.eq.s32.totalorder %s21, 0
      %p75 = por %p73, %p74
      %p76 = scmp.ne.s32.totalorder %s64, %s65
      %p77 = scmp.eq.s32.totalorder %s22, 3
      %p78 = por %p76, %p77
      %p80 = scmp.ne.s32.totalorder %s65, %s79
      %p81 = scmp.eq.s32.totalorder %s22, 0
      %p82 = por %p80, %p81
      %s84 = sadd.s32 %s83, 1
      %p87 = scmp.eq.s32.totalorder %s16, 3
      %p88 = scmp.ne.s32.totalorder %s83, %s85
      %p89 = scmp.eq.s32.totalorder %s16, 0
      %p90 = por %p88, %p89
      %p91 = scmp.ne.s32.totalorder %s83, %s85
      %p92 = scmp.eq.s32.totalorder %s21, 3
      %p93 = por %p91, %p92
      %p94 = scmp.ne.s32.totalorder %s85, %s86
      %p95 = scmp.eq.s32.totalorder %s21, 0
      %p96 = por %p94, %p95
      %p97 = scmp.ne.s32.totalorder %s85, %s86
      %p98 = scmp.eq.s32.totalorder %s22, 3
      %p99 = por %p97, %p98
      %p101 = scmp.ne.s32.totalorder %s86, %s100
      %p102 = scmp.eq.s32.totalorder %s22, 0
      %p103 = por %p101, %p102
      %s104 = ssub.s32 %s23, %s35
      %s105 = ssub.s32 %s24, %s31
      %s106 = sor.u32 %s104, %s105
      %p107 = scmp.eq.s32.totalorder %s106, 0
      %s109 = sadd.s32 %s108, 1
      %s110 = scalar_select %p107, %s108, %s109
      %p113 = pneg %p107
      %p114 = scmp.eq.s32.totalorder %s16, 3
      %p115 = por %p113, %p114
      %p116 = scmp.ne.s32.totalorder %s108, %s111
      %p117 = scmp.eq.s32.totalorder %s16, 0
      %p118 = por %p116, %p117
      %p119 = scmp.ne.s32.totalorder %s108, %s111
      %p120 = scmp.eq.s32.totalorder %s21, 3
      %p121 = por %p119, %p120
      %p122 = scmp.ne.s32.totalorder %s111, %s112
      %p123 = scmp.eq.s32.totalorder %s21, 0
      %p124 = por %p122, %p123
      %p125 = scmp.ne.s32.totalorder %s111, %s112
      %p126 = scmp.eq.s32.totalorder %s22, 3
      %p127 = por %p125, %p126
      %p129 = scmp.ne.s32.totalorder %s112, %s128
      %p130 = scmp.eq.s32.totalorder %s22, 0
      %p131 = por %p129, %p130
      %p132 = scmp.le.s32.totalorder 1, %s16
      %p133 = scmp.lt.s32.totalorder %s16, 5
      %p134 = pnand %p132, %p133
      %p135 = pneg %p134
      // Predicated region
      $region9: #{tpu_custom_call.1} parent=5 // pred_check
        _
      $region10: #{tpu_custom_call.1} parent=5 // pred_check_branch
        %137 = sbr.rel (%p134) target = $region12
      $region11: #{tpu_custom_call.1} parent=5 // pred_region
        %s138 = ssub.s32 %s16, 1
        // Predicated region
        $region13: #{tpu_custom_call.1} parent=11 // pred_check
          %p139 = pneg %p75
        $region14: #{tpu_custom_call.1} parent=11 // pred_check_branch
          %141 = sbr.rel (%p139) target = $region16
        $region15: #{tpu_custom_call.1} parent=11 // pred_region
          %s143 = ssub.s32 64, 64
          %144 = vsyncadd [#allocation6], %s143
          %s146 = sshll.u32 [#allocation5], 4
          %s147 = int_to_ptr.vmem [resolvable:$true] %s146
          %149 = dma.hbm_to_vmem [thread:$0]  %s1, 64, %s147, [#allocation6]
        $region16: #{tpu_custom_call.1} parent=11 // pred_fallthru
          _
        // Predicated region
        $region17: #{tpu_custom_call.1} parent=11 // pred_check
          %p150 = pneg %p96
        $region18: #{tpu_custom_call.1} parent=11 // pred_check_branch
          %152 = sbr.rel (%p150) target = $region20
        $region19: #{tpu_custom_call.1} parent=11 // pred_region
          %s154 = ssub.s32 128, 128
          %155 = vsyncadd [#allocation6], %s154
          %s157 = sshll.u32 [#allocation7], 4
          %s158 = int_to_ptr.vmem [resolvable:$true] %s157
          %160 = dma.hbm_to_vmem [thread:$0]  %s2, 128, %s158, [#allocation6]
        $region20: #{tpu_custom_call.1} parent=11 // pred_fallthru
          _
      $region12: #{tpu_custom_call.1} parent=5 // pred_fallthru
        _
      %p161 = scmp.lt.s32.totalorder %s16, 4
      // Predicated region
      $region21: #{tpu_custom_call.1} parent=5 // pred_check
        %p162 = pneg %p161
      $region22: #{tpu_custom_call.1} parent=5 // pred_check_branch
        %164 = sbr.rel (%p162) target = $region24
      $region23: #{tpu_custom_call.1} parent=5 // pred_region
        // Predicated region
        $region25: #{tpu_custom_call.1} parent=23 // pred_check
          %p165 = pneg %p48
        $region26: #{tpu_custom_call.1} parent=23 // pred_check_branch
          %167 = sbr.rel (%p165) target = $region28
        $region27: #{tpu_custom_call.1} parent=23 // pred_region
          %s168 = sand.u32 %s38, 1
          %s169 = scalar_lea.sflag [#allocation3], %s168
          %s170 = sand.u32 %s38, 1
          %s171 = smul.addr %s170, 80
          %s172 = scalar_lea.vmem [#allocation2], %s171
          %s174 = ssub.s32 1280, 1280
          %175 = vsyncadd %s169, %s174
          %s176 = smul.addr %s23, 20
          %s177 = smul.addr %s176, 64
          %s178 = scalar_lea.hbm %s0, %s177
          %s179 = sshll.u32 %s172, 4
          %s180 = int_to_ptr.vmem [resolvable:$true] %s179
          %185 = dma.hbm_to_vmem [thread:$0]  %s178, 1280, %s180, %s169, 64, 64, 4
        $region28: #{tpu_custom_call.1} parent=23 // pred_fallthru
          _
      $region24: #{tpu_custom_call.1} parent=5 // pred_fallthru
        _
      %p186 = scmp.le.s32.totalorder 1, %s16
      %p187 = scmp.lt.s32.totalorder %s16, 5
      %p188 = pnand %p186, %p187
      %p189 = pneg %p188
      // Predicated region
      $region29: #{tpu_custom_call.1} parent=5 // pred_check
        _
      $region30: #{tpu_custom_call.1} parent=5 // pred_check_branch
        %191 = sbr.rel (%p188) target = $region32
      $region31: #{tpu_custom_call.1} parent=5 // pred_region
        %s192 = ssub.s32 %s16, 1
        %s193 = sand.u32 %s41, 1
        %s194 = scalar_lea.sflag [#allocation3], %s193
        %s195 = sand.u32 %s41, 1
        %s196 = smul.addr %s195, 80
        %s197 = scalar_lea.vmem [#allocation2], %s196
        // Predicated region
        $region33: #{tpu_custom_call.1} parent=31 // pred_check
          %p198 = pneg %p54
        $region34: #{tpu_custom_call.1} parent=31 // pred_check_branch
          %200 = sbr.rel (%p198) target = $region36
        $region35: #{tpu_custom_call.1} parent=31 // pred_region
          %201 = dma.done %s194, 1280
        $region36: #{tpu_custom_call.1} parent=31 // pred_fallthru
          _
        // Predicated region
        $region37: #{tpu_custom_call.1} parent=31 // pred_check
          %p202 = pneg %p75
        $region38: #{tpu_custom_call.1} parent=31 // pred_check_branch
          %204 = sbr.rel (%p202) target = $region40
        $region39: #{tpu_custom_call.1} parent=31 // pred_region
          %205 = dma.done [#allocation6], 64
        $region40: #{tpu_custom_call.1} parent=31 // pred_fallthru
          _
        // Predicated region
        $region41: #{tpu_custom_call.1} parent=31 // pred_check
          %p206 = pneg %p96
        $region42: #{tpu_custom_call.1} parent=31 // pred_check_branch
          %208 = sbr.rel (%p206) target = $region44
        $region43: #{tpu_custom_call.1} parent=31 // pred_region
          %209 = dma.done [#allocation6], 128
        $region44: #{tpu_custom_call.1} parent=31 // pred_fallthru
          _
        %s210 = sand.u32 %s41, 1
        %s211 = scalar_lea.sflag [#allocation3], %s210
        %s212 = sand.u32 %s41, 1
        %s213 = smul.addr %s212, 80
        %s214 = scalar_lea.vmem [#allocation2], %s213
        %p215 = pneg %p54
        %p216 = pneg %p51
        %p217 = pneg %p75
        %p218 = pneg %p72
        %p219 = pneg %p96
        %p220 = pneg %p93
        %p221 = pneg %p124
        %p222 = pneg %p121
        %s223 = sand.u32 %s111, 1
        %s224 = scalar_lea.sflag [#allocation4], %s223
        %s225 = sand.u32 %s111, 1
        %s226 = smul.addr %s225, 128
        %s227 = scalar_lea.vmem [#allocation8], %s226
        %s228 = smul.u32 2, %s26
        %s230 = smul.u32 %s26, 16
        %s231 = sshra.s32 %s230, 3
        %s232 = sand.u32 %s230, 7
        %s233 = smul.addr %s231, 4
        %s234 = scalar_lea.vmem %s197, %s233 [#allocation2]
        %v235 = vld [vmem:[%s234] sm:$0xf]
        %v236 = vld [vmem:[%s234 + $0x4] sm:$0xf]
        %v237 = vld [vmem:[%s234 + $0x8] sm:$0x1]
        %v238 = vld [vmem:[%s234 + $0x14] sm:$0xf]
        %v239 = vld [vmem:[%s234 + $0x18] sm:$0xf]
        %v240 = vld [vmem:[%s234 + $0x1c] sm:$0x1]
        %v241 = vld [vmem:[%s234 + $0x28] sm:$0xf]
        %v242 = vld [vmem:[%s234 + $0x2c] sm:$0xf]
        %v243 = vld [vmem:[%s234 + $0x30] sm:$0x1]
        %v244 = vld [vmem:[%s234 + $0x3c] sm:$0xf]
        %v245 = vld [vmem:[%s234 + $0x40] sm:$0xf]
        %v246 = vld [vmem:[%s234 + $0x44] sm:$0x1]
        %v247 = vld [vmem:[#allocation5] sm:$0xf]
        %v248 = vld [vmem:[#allocation7] sm:$0xff]
        %v253 = vunpack.c.l.b16 %v235
        %v254 = vunpack.c.l.b16 %v238
        %v255 = vunpack.c.l.b16 %v241
        %v256 = vunpack.c.l.b16 %v244
        %v257 = vpack.c.b16 %v253, %v253
        %v258 = vpack.c.b16 %v254, %v254
        %v259 = vpack.c.b16 %v255, %v255
        %v260 = vpack.c.b16 %v256, %v256
        %v261 = vunpack.c.l.b16 %v257
        %v262 = vunpack.c.l.b16 %v258
        %v263 = vunpack.c.l.b16 %v259
        %v264 = vunpack.c.l.b16 %v260
        %v265 = vrot.slane %v262, 7
        %vm266 = vcmask 1041409
        %v267 = vsel %vm266, %v265, %v261
        %v268 = vrot.slane %v263, 6
        %vm269 = vcmask 1042434
        %v270 = vsel %vm269, %v268, %v267
        %v271 = vrot.slane %v264, 5
        %vm272 = vcmask 1043459
        %v273 = vsel %vm272, %v271, %v270
        %v274 = vpack.c.b16 %v273, %v273
        %v275 = vrot.slane %v261, 4
        %v276 = vrot.slane %v262, 3
        %vm277 = vcmask 1045509
        %v278 = vsel %vm277, %v276, %v275
        %v279 = vrot.slane %v263, 2
        %vm280 = vcmask 1046534
        %v281 = vsel %vm280, %v279, %v278
        %v282 = vrot.slane %v264, 1
        %vm283 = vcmask 1047559
        %v284 = vsel %vm283, %v282, %v281
        %v285 = vpack.c.b16 %v284, %v284
        %286 = vrot.lane.b32.xlu0 %v285, 127
        %v287 = vpop.permute.xlu0 %286
        %v288 = vunpack.c.h.b16 %v257
        %v289 = vunpack.c.h.b16 %v258
        %v290 = vunpack.c.h.b16 %v259
        %v291 = vunpack.c.h.b16 %v260
        %v292 = vrot.slane %v289, 7
        %v293 = vsel %vm266, %v292, %v288
        %v294 = vrot.slane %v290, 6
        %v295 = vsel %vm269, %v294, %v293
        %v296 = vrot.slane %v291, 5
        %v297 = vsel %vm272, %v296, %v295
        %v298 = vpack.c.b16 %v297, %v297
        %299 = vrot.lane.b32.xlu0 %v298, 126
        %v300 = vpop.permute.xlu0 %299
        %v301 = vrot.slane %v261, 5
        %v302 = vrot.slane %v262, 4
        %v303 = vsel %vm277, %v302, %v301
        %v304 = vrot.slane %v263, 3
        %v305 = vsel %vm280, %v304, %v303
        %v306 = vrot.slane %v264, 2
        %v307 = vsel %vm283, %v306, %v305
        %v308 = vpack.c.b16 %v307, %v307
        %v309 = vrot.slane %v261, 1
        %v310 = vsel %vm266, %v262, %v309
        %v311 = vrot.slane %v263, 7
        %v312 = vsel %vm269, %v311, %v310
        %v313 = vrot.slane %v264, 6
        %v314 = vsel %vm272, %v313, %v312
        %v315 = vpack.c.b16 %v314, %v314
        %316 = vrot.lane.b32.xlu0 %v315, 127
        %v317 = vpop.permute.xlu0 %316
        %318 = vrot.lane.b32.xlu0 %v308, 126
        %v319 = vpop.permute.xlu0 %318
        %v320 = vrot.slane %v261, 2
        %v321 = vrot.slane %v262, 1
        %v322 = vsel %vm266, %v321, %v320
        %v323 = vsel %vm269, %v263, %v322
        %v324 = vrot.slane %v264, 7
        %v325 = vsel %vm272, %v324, %v323
        %v326 = vpack.c.b16 %v325, %v325
        %v327 = vrot.slane %v261, 6
        %v328 = vrot.slane %v262, 5
        %v329 = vsel %vm277, %v328, %v327
        %v330 = vrot.slane %v263, 4
        %v331 = vsel %vm280, %v330, %v329
        %v332 = vrot.slane %v264, 3
        %v333 = vsel %vm283, %v332, %v331
        %v334 = vpack.c.b16 %v333, %v333
        %335 = vrot.lane.b32.xlu0 %v334, 127
        %v336 = vpop.permute.xlu0 %335
        %337 = vrot.lane.b32.xlu0 %v326, 126
        %v338 = vpop.permute.xlu0 %337
        %vm339 = vcmask 1041408
        %v342 = vsel %vm339, %v274, %v287
        %vm343 = vcmask 1043456
        %v345 = vsel %vm343, %v342, %v300
        %vm346 = vcmask 1045504
        %v348 = vsel %vm346, %v345, %v308
        %v352 = vsel %vm339, %v317, %v319
        %v354 = vsel %vm343, %v352, %v326
        %v356 = vsel %vm346, %v354, %v336
        %359 = vset.pattern.permute.xlu0 0
        %360 = vperm.xlu0 %359, %v248
        %v361 = vpop.permute.xlu0 %360
        %vm363 = vcmask 293888
        %v365 = vsel %vm363, %v247, 0
        %v368 = vsel %vm339, %v338, 0
        %370 = vmatprep.subr.bf16.mxu0 0
        %371 = vmatpush1.bf16.msra.mxu0 %v348
        %372 = vmatprep.subr.bf16.mxu0 0
        %373 = vmatpush1.bf16.msra.mxu0 %v356
        %374 = vmatprep.subr.bf16.mxu0 0
        %375 = vmatpush1.bf16.msra.mxu0 %v368
        %376 = vmatprep.subr.bf16.mxu0 0
        %377 = vmatpush1.bf16.msra.mxu0 0
        %378 = vmatprep.subr.bf16.mxu0 0
        %379 = vmatpush1.bf16.msra.mxu0 0
        %380 = vmatprep.subr.bf16.mxu0 0
        %381 = vmatpush1.bf16.msra.mxu0 0
        %382 = vmatprep.subr.bf16.mxu0 0
        %383 = vmatpush1.bf16.msra.mxu0 0
        %384 = vmatprep.subr.bf16.mxu0 0
        %385 = vmatpush1.bf16.msra.mxu0 0
        %386 = vmatprep.subr.bf16.mxu0 0
        %387 = vmatpush1.bf16.msra.mxu0 0
        %388 = vmatprep.subr.bf16.mxu0 0
        %389 = vmatpush1.bf16.msra.mxu0 0
        %390 = vmatprep.subr.bf16.mxu0 0
        %391 = vmatpush1.bf16.msra.mxu0 0
        %392 = vmatprep.subr.bf16.mxu0 0
        %393 = vmatpush1.bf16.msra.mxu0 0
        %394 = vmatprep.subr.bf16.mxu0 0
        %395 = vmatpush1.bf16.msra.mxu0 0
        %396 = vmatprep.subr.bf16.mxu0 0
        %397 = vmatpush1.bf16.msra.mxu0 0
        %398 = vmatprep.subr.bf16.mxu0 0
        %399 = vmatpush1.bf16.msra.mxu0 0
        %400 = vmatprep.subr.bf16.mxu0 0
        %401 = vmatpush1.bf16.msra.mxu0 0
        %402 = vmatprep.mubr.bf16.mxu0 0
        %403 = vmatmul.mubr.bf16.gmra.mrb[0].mxu0 %v365
        %v404 = vpop.f32.mrb[0].mxu0
        %v405 = vadd.f32 %v361, %v404
        %v406 = vpop.f32.mrb[0].mxu0
        %v407 = vpop.f32.mrb[0].mxu0
        %v408 = vpop.f32.mrb[0].mxu0
        %409 = vdwg.mxu0
        %410 = vrot.lane.b32.xlu0 %v308, 127
        %v411 = vpop.permute.xlu0 %410
        %412 = vrot.lane.b32.xlu0 %v315, 126
        %v413 = vpop.permute.xlu0 %412
        %414 = vrot.lane.b32.xlu0 %v326, 127
        %v415 = vpop.permute.xlu0 %414
        %416 = vrot.lane.b32.xlu0 %v334, 126
        %v417 = vpop.permute.xlu0 %416
        %v418 = vrot.slane %v261, 3
        %v419 = vrot.slane %v262, 2
        %v420 = vsel %vm266, %v419, %v418
        %v421 = vrot.slane %v263, 1
        %v422 = vsel %vm269, %v421, %v420
        %v423 = vsel %vm272, %v264, %v422
        %v424 = vpack.c.b16 %v423, %v423
        %v425 = vrot.slane %v261, 7
        %v426 = vrot.slane %v262, 6
        %v427 = vsel %vm277, %v426, %v425
        %v428 = vrot.slane %v263, 5
        %v429 = vsel %vm280, %v428, %v427
        %v430 = vrot.slane %v264, 4
        %v431 = vsel %vm283, %v430, %v429
        %v432 = vpack.c.b16 %v431, %v431
        %433 = vrot.lane.b32.xlu0 %v432, 127
        %v434 = vpop.permute.xlu0 %433
        %435 = vrot.lane.b32.xlu0 %v424, 126
        %v436 = vpop.permute.xlu0 %435
        %v439 = vsel %vm339, %v315, %v411
        %v441 = vsel %vm343, %v439, %v413
        %v443 = vsel %vm346, %v441, %v334
        %v447 = vsel %vm339, %v415, %v417
        %v449 = vsel %vm343, %v447, %v424
        %v451 = vsel %vm346, %v449, %v434
        %v454 = vsel %vm339, %v436, 0
        %456 = vmatprep.subr.bf16.mxu0 0
        %457 = vmatpush1.bf16.msra.mxu0 %v443
        %458 = vmatprep.subr.bf16.mxu0 0
        %459 = vmatpush1.bf16.msra.mxu0 %v451
        %460 = vmatprep.subr.bf16.mxu0 0
        %461 = vmatpush1.bf16.msra.mxu0 %v454
        %462 = vmatprep.subr.bf16.mxu0 0
        %463 = vmatpush1.bf16.msra.mxu0 0
        %464 = vmatprep.subr.bf16.mxu0 0
        %465 = vmatpush1.bf16.msra.mxu0 0
        %466 = vmatprep.subr.bf16.mxu0 0
        %467 = vmatpush1.bf16.msra.mxu0 0
        %468 = vmatprep.subr.bf16.mxu0 0
        %469 = vmatpush1.bf16.msra.mxu0 0
        %470 = vmatprep.subr.bf16.mxu0 0
        %471 = vmatpush1.bf16.msra.mxu0 0
        %472 = vmatprep.subr.bf16.mxu0 0
        %473 = vmatpush1.bf16.msra.mxu0 0
        %474 = vmatprep.subr.bf16.mxu0 0
        %475 = vmatpush1.bf16.msra.mxu0 0
        %476 = vmatprep.subr.bf16.mxu0 0
        %477 = vmatpush1.bf16.msra.mxu0 0
        %478 = vmatprep.subr.bf16.mxu0 0
        %479 = vmatpush1.bf16.msra.mxu0 0
        %480 = vmatprep.subr.bf16.mxu0 0
        %481 = vmatpush1.bf16.msra.mxu0 0
        %482 = vmatprep.subr.bf16.mxu0 0
        %483 = vmatpush1.bf16.msra.mxu0 0
        %484 = vmatprep.subr.bf16.mxu0 0
        %485 = vmatpush1.bf16.msra.mxu0 0
        %486 = vmatprep.subr.bf16.mxu0 0
        %487 = vmatpush1.bf16.msra.mxu0 0
        %488 = vmatprep.mubr.bf16.mxu0 0
        %489 = vmatmul.mubr.bf16.gmra.mrb[0].mxu0 %v365
        %v490 = vpop.f32.mrb[0].mxu0
        %v491 = vadd.f32 %v361, %v490
        %v492 = vpop.f32.mrb[0].mxu0
        %v493 = vpop.f32.mrb[0].mxu0
        %v494 = vpop.f32.mrb[0].mxu0
        %495 = vdwg.mxu0
        %496 = vrot.lane.b32.xlu0 %v424, 127
        %v497 = vpop.permute.xlu0 %496
        %498 = vrot.lane.b32.xlu0 %v432, 126
        %v499 = vpop.permute.xlu0 %498
        %v500 = vsel %vm266, %v276, %v275
        %v501 = vsel %vm269, %v279, %v500
        %v502 = vsel %vm272, %v282, %v501
        %v503 = vpack.c.b16 %v502, %v502
        %v504 = vsel %vm277, %v292, %v288
        %v505 = vsel %vm280, %v294, %v504
        %v506 = vsel %vm283, %v296, %v505
        %v507 = vpack.c.b16 %v506, %v506
        %508 = vrot.lane.b32.xlu0 %v507, 127
        %v509 = vpop.permute.xlu0 %508
        %510 = vrot.lane.b32.xlu0 %v503, 126
        %v511 = vpop.permute.xlu0 %510
        %v512 = vsel %vm339, %v326, %v336
        %v513 = vsel %vm343, %v512, %v338
        %v515 = vsel %vm346, %v513, %v432
        %v519 = vsel %vm339, %v497, %v499
        %v521 = vsel %vm343, %v519, %v503
        %v523 = vsel %vm346, %v521, %v509
        %v526 = vsel %vm339, %v511, 0
        %528 = vmatprep.subr.bf16.mxu0 0
        %529 = vmatpush1.bf16.msra.mxu0 %v515
        %530 = vmatprep.subr.bf16.mxu0 0
        %531 = vmatpush1.bf16.msra.mxu0 %v523
        %532 = vmatprep.subr.bf16.mxu0 0
        %533 = vmatpush1.bf16.msra.mxu0 %v526
        %534 = vmatprep.subr.bf16.mxu0 0
        %535 = vmatpush1.bf16.msra.mxu0 0
        %536 = vmatprep.subr.bf16.mxu0 0
        %537 = vmatpush1.bf16.msra.mxu0 0
        %538 = vmatprep.subr.bf16.mxu0 0
        %539 = vmatpush1.bf16.msra.mxu0 0
        %540 = vmatprep.subr.bf16.mxu0 0
        %541 = vmatpush1.bf16.msra.mxu0 0
        %542 = vmatprep.subr.bf16.mxu0 0
        %543 = vmatpush1.bf16.msra.mxu0 0
        %544 = vmatprep.subr.bf16.mxu0 0
        %545 = vmatpush1.bf16.msra.mxu0 0
        %546 = vmatprep.subr.bf16.mxu0 0
        %547 = vmatpush1.bf16.msra.mxu0 0
        %548 = vmatprep.subr.bf16.mxu0 0
        %549 = vmatpush1.bf16.msra.mxu0 0
        %550 = vmatprep.subr.bf16.mxu0 0
        %551 = vmatpush1.bf16.msra.mxu0 0
        %552 = vmatprep.subr.bf16.mxu0 0
        %553 = vmatpush1.bf16.msra.mxu0 0
        %554 = vmatprep.subr.bf16.mxu0 0
        %555 = vmatpush1.bf16.msra.mxu0 0
        %556 = vmatprep.subr.bf16.mxu0 0
        %557 = vmatpush1.bf16.msra.mxu0 0
        %558 = vmatprep.subr.bf16.mxu0 0
        %559 = vmatpush1.bf16.msra.mxu0 0
        %560 = vmatprep.mubr.bf16.mxu0 0
        %561 = vmatmul.mubr.bf16.gmra.mrb[0].mxu0 %v365
        %v562 = vpop.f32.mrb[0].mxu0
        %v563 = vadd.f32 %v361, %v562
        %v564 = vpop.f32.mrb[0].mxu0
        %v565 = vpop.f32.mrb[0].mxu0
        %v566 = vpop.f32.mrb[0].mxu0
        %567 = vdwg.mxu0
        %568 = vrot.lane.b32.xlu0 %v503, 127
        %v569 = vpop.permute.xlu0 %568
        %v570 = vsel %vm277, %v265, %v261
        %v571 = vsel %vm280, %v268, %v570
        %v572 = vsel %vm283, %v271, %v571
        %v573 = vpack.c.b16 %v572, %v572
        %574 = vrot.lane.b32.xlu0 %v573, 126
        %v575 = vpop.permute.xlu0 %574
        %v576 = vsel %vm266, %v302, %v301
        %v577 = vsel %vm269, %v304, %v576
        %v578 = vsel %vm272, %v306, %v577
        %v579 = vpack.c.b16 %v578, %v578
        %v580 = vsel %vm277, %v262, %v309
        %v581 = vsel %vm280, %v311, %v580
        %v582 = vsel %vm283, %v313, %v581
        %v583 = vpack.c.b16 %v582, %v582
        %584 = vrot.lane.b32.xlu0 %v583, 127
        %v585 = vpop.permute.xlu0 %584
        %586 = vrot.lane.b32.xlu0 %v579, 126
        %v587 = vpop.permute.xlu0 %586
        %v588 = vsel %vm339, %v424, %v434
        %v589 = vsel %vm343, %v588, %v436
        %v591 = vsel %vm346, %v589, %v507
        %v595 = vsel %vm339, %v569, %v575
        %v597 = vsel %vm343, %v595, %v579
        %v599 = vsel %vm346, %v597, %v585
        %v602 = vsel %vm339, %v587, 0
        %604 = vmatprep.subr.bf16.mxu0 0
        %605 = vmatpush1.bf16.msra.mxu0 %v591
        %606 = vmatprep.subr.bf16.mxu0 0
        %607 = vmatpush1.bf16.msra.mxu0 %v599
        %608 = vmatprep.subr.bf16.mxu0 0
        %609 = vmatpush1.bf16.msra.mxu0 %v602
        %610 = vmatprep.subr.bf16.mxu0 0
        %611 = vmatpush1.bf16.msra.mxu0 0
        %612 = vmatprep.subr.bf16.mxu0 0
        %613 = vmatpush1.bf16.msra.mxu0 0
        %614 = vmatprep.subr.bf16.mxu0 0
        %615 = vmatpush1.bf16.msra.mxu0 0
        %616 = vmatprep.subr.bf16.mxu0 0
        %617 = vmatpush1.bf16.msra.mxu0 0
        %618 = vmatprep.subr.bf16.mxu0 0
        %619 = vmatpush1.bf16.msra.mxu0 0
        %620 = vmatprep.subr.bf16.mxu0 0
        %621 = vmatpush1.bf16.msra.mxu0 0
        %622 = vmatprep.subr.bf16.mxu0 0
        %623 = vmatpush1.bf16.msra.mxu0 0
        %624 = vmatprep.subr.bf16.mxu0 0
        %625 = vmatpush1.bf16.msra.mxu0 0
        %626 = vmatprep.subr.bf16.mxu0 0
        %627 = vmatpush1.bf16.msra.mxu0 0
        %628 = vmatprep.subr.bf16.mxu0 0
        %629 = vmatpush1.bf16.msra.mxu0 0
        %630 = vmatprep.subr.bf16.mxu0 0
        %631 = vmatpush1.bf16.msra.mxu0 0
        %632 = vmatprep.subr.bf16.mxu0 0
        %633 = vmatpush1.bf16.msra.mxu0 0
        %634 = vmatprep.subr.bf16.mxu0 0
        %635 = vmatpush1.bf16.msra.mxu0 0
        %636 = vmatprep.mubr.bf16.mxu0 0
        %637 = vmatmul.mubr.bf16.gmra.mrb[0].mxu0 %v365
        %v638 = vpop.f32.mrb[0].mxu0
        %v639 = vadd.f32 %v361, %v638
        %v640 = vpop.f32.mrb[0].mxu0
        %v641 = vpop.f32.mrb[0].mxu0
        %v642 = vpop.f32.mrb[0].mxu0
        %643 = vdwg.mxu0
        %644 = vrot.lane.b32.xlu0 %v573, 127
        %v645 = vpop.permute.xlu0 %644
        %646 = vrot.lane.b32.xlu0 %v579, 127
        %v647 = vpop.permute.xlu0 %646
        %648 = vrot.lane.b32.xlu0 %v583, 126
        %v649 = vpop.permute.xlu0 %648
        %v650 = vsel %vm266, %v328, %v327
        %v651 = vsel %vm269, %v330, %v650
        %v652 = vsel %vm272, %v332, %v651
        %v653 = vpack.c.b16 %v652, %v652
        %v654 = vsel %vm277, %v321, %v320
        %v655 = vsel %vm280, %v263, %v654
        %v656 = vsel %vm283, %v324, %v655
        %v657 = vpack.c.b16 %v656, %v656
        %658 = vrot.lane.b32.xlu0 %v657, 127
        %v659 = vpop.permute.xlu0 %658
        %660 = vrot.lane.b32.xlu0 %v653, 126
        %v661 = vpop.permute.xlu0 %660
        %v663 = vsel %vm339, %v503, %v645
        %v664 = vsel %vm343, %v663, %v511
        %v666 = vsel %vm346, %v664, %v583
        %v670 = vsel %vm339, %v647, %v649
        %v672 = vsel %vm343, %v670, %v653
        %v674 = vsel %vm346, %v672, %v659
        %v677 = vsel %vm339, %v661, 0
        %679 = vmatprep.subr.bf16.mxu0 0
        %680 = vmatpush1.bf16.msra.mxu0 %v666
        %681 = vmatprep.subr.bf16.mxu0 0
        %682 = vmatpush1.bf16.msra.mxu0 %v674
        %683 = vmatprep.subr.bf16.mxu0 0
        %684 = vmatpush1.bf16.msra.mxu0 %v677
        %685 = vmatprep.subr.bf16.mxu0 0
        %686 = vmatpush1.bf16.msra.mxu0 0
        %687 = vmatprep.subr.bf16.mxu0 0
        %688 = vmatpush1.bf16.msra.mxu0 0
        %689 = vmatprep.subr.bf16.mxu0 0
        %690 = vmatpush1.bf16.msra.mxu0 0
        %691 = vmatprep.subr.bf16.mxu0 0
        %692 = vmatpush1.bf16.msra.mxu0 0
        %693 = vmatprep.subr.bf16.mxu0 0
        %694 = vmatpush1.bf16.msra.mxu0 0
        %695 = vmatprep.subr.bf16.mxu0 0
        %696 = vmatpush1.bf16.msra.mxu0 0
        %697 = vmatprep.subr.bf16.mxu0 0
        %698 = vmatpush1.bf16.msra.mxu0 0
        %699 = vmatprep.subr.bf16.mxu0 0
        %700 = vmatpush1.bf16.msra.mxu0 0
        %701 = vmatprep.subr.bf16.mxu0 0
        %702 = vmatpush1.bf16.msra.mxu0 0
        %703 = vmatprep.subr.bf16.mxu0 0
        %704 = vmatpush1.bf16.msra.mxu0 0
        %705 = vmatprep.subr.bf16.mxu0 0
        %706 = vmatpush1.bf16.msra.mxu0 0
        %707 = vmatprep.subr.bf16.mxu0 0
        %708 = vmatpush1.bf16.msra.mxu0 0
        %709 = vmatprep.subr.bf16.mxu0 0
        %710 = vmatpush1.bf16.msra.mxu0 0
        %711 = vmatprep.mubr.bf16.mxu0 0
        %712 = vmatmul.mubr.bf16.gmra.mrb[0].mxu0 %v365
        %v713 = vpop.f32.mrb[0].mxu0
        %v714 = vadd.f32 %v361, %v713
        %v715 = vpop.f32.mrb[0].mxu0
        %v716 = vpop.f32.mrb[0].mxu0
        %v717 = vpop.f32.mrb[0].mxu0
        %718 = vdwg.mxu0
        %719 = vrot.lane.b32.xlu0 %v653, 127
        %v720 = vpop.permute.xlu0 %719
        %721 = vrot.lane.b32.xlu0 %v657, 126
        %v722 = vpop.permute.xlu0 %721
        %v723 = vsel %vm266, %v426, %v425
        %v724 = vsel %vm269, %v428, %v723
        %v725 = vsel %vm272, %v430, %v724
        %v726 = vpack.c.b16 %v725, %v725
        %v727 = vsel %vm277, %v419, %v418
        %v728 = vsel %vm280, %v421, %v727
        %v729 = vsel %vm283, %v264, %v728
        %v730 = vpack.c.b16 %v729, %v729
        %731 = vrot.lane.b32.xlu0 %v730, 127
        %v732 = vpop.permute.xlu0 %731
        %733 = vrot.lane.b32.xlu0 %v726, 126
        %v734 = vpop.permute.xlu0 %733
        %v735 = vsel %vm339, %v579, %v585
        %v736 = vsel %vm343, %v735, %v587
        %v738 = vsel %vm346, %v736, %v657
        %v742 = vsel %vm339, %v720, %v722
        %v744 = vsel %vm343, %v742, %v726
        %v746 = vsel %vm346, %v744, %v732
        %v749 = vsel %vm339, %v734, 0
        %751 = vmatprep.subr.bf16.mxu0 0
        %752 = vmatpush1.bf16.msra.mxu0 %v738
        %753 = vmatprep.subr.bf16.mxu0 0
        %754 = vmatpush1.bf16.msra.mxu0 %v746
        %755 = vmatprep.subr.bf16.mxu0 0
        %756 = vmatpush1.bf16.msra.mxu0 %v749
        %757 = vmatprep.subr.bf16.mxu0 0
        %758 = vmatpush1.bf16.msra.mxu0 0
        %759 = vmatprep.subr.bf16.mxu0 0
        %760 = vmatpush1.bf16.msra.mxu0 0
        %761 = vmatprep.subr.bf16.mxu0 0
        %762 = vmatpush1.bf16.msra.mxu0 0
        %763 = vmatprep.subr.bf16.mxu0 0
        %764 = vmatpush1.bf16.msra.mxu0 0
        %765 = vmatprep.subr.bf16.mxu0 0
        %766 = vmatpush1.bf16.msra.mxu0 0
        %767 = vmatprep.subr.bf16.mxu0 0
        %768 = vmatpush1.bf16.msra.mxu0 0
        %769 = vmatprep.subr.bf16.mxu0 0
        %770 = vmatpush1.bf16.msra.mxu0 0
        %771 = vmatprep.subr.bf16.mxu0 0
        %772 = vmatpush1.bf16.msra.mxu0 0
        %773 = vmatprep.subr.bf16.mxu0 0
        %774 = vmatpush1.bf16.msra.mxu0 0
        %775 = vmatprep.subr.bf16.mxu0 0
        %776 = vmatpush1.bf16.msra.mxu0 0
        %777 = vmatprep.subr.bf16.mxu0 0
        %778 = vmatpush1.bf16.msra.mxu0 0
        %779 = vmatprep.subr.bf16.mxu0 0
        %780 = vmatpush1.bf16.msra.mxu0 0
        %781 = vmatprep.subr.bf16.mxu0 0
        %782 = vmatpush1.bf16.msra.mxu0 0
        %783 = vmatprep.mubr.bf16.mxu0 0
        %784 = vmatmul.mubr.bf16.gmra.mrb[0].mxu0 %v365
        %v785 = vpop.f32.mrb[0].mxu0
        %v786 = vadd.f32 %v361, %v785
        %v787 = vpop.f32.mrb[0].mxu0
        %v788 = vpop.f32.mrb[0].mxu0
        %v789 = vpop.f32.mrb[0].mxu0
        %790 = vdwg.mxu0
        %791 = vrot.lane.b32.xlu0 %v726, 127
        %v792 = vpop.permute.xlu0 %791
        %793 = vrot.lane.b32.xlu0 %v730, 126
        %v794 = vpop.permute.xlu0 %793
        %v799 = vunpack.c.l.b16 %v236
        %v800 = vunpack.c.l.b16 %v239
        %v801 = vunpack.c.l.b16 %v242
        %v802 = vunpack.c.l.b16 %v245
        %v803 = vpack.c.b16 %v799, %v799
        %v804 = vpack.c.b16 %v800, %v800
        %v805 = vpack.c.b16 %v801, %v801
        %v806 = vpack.c.b16 %v802, %v802
        %v807 = vunpack.c.h.b16 %v803
        %v808 = vunpack.c.h.b16 %v804
        %v809 = vunpack.c.h.b16 %v805
        %v810 = vunpack.c.h.b16 %v806
        %v811 = vrot.slane %v808, 7
        %v812 = vsel %vm266, %v811, %v807
        %v813 = vrot.slane %v809, 6
        %v814 = vsel %vm269, %v813, %v812
        %v815 = vrot.slane %v810, 5
        %v816 = vsel %vm272, %v815, %v814
        %v817 = vpack.c.b16 %v816, %v816
        %v818 = vunpack.c.l.b16 %v803
        %v819 = vunpack.c.l.b16 %v804
        %v820 = vunpack.c.l.b16 %v805
        %v821 = vunpack.c.l.b16 %v806
        %v822 = vrot.slane %v818, 4
        %v823 = vrot.slane %v819, 3
        %v824 = vsel %vm277, %v823, %v822
        %v825 = vrot.slane %v820, 2
        %v826 = vsel %vm280, %v825, %v824
        %v827 = vrot.slane %v821, 1
        %v828 = vsel %vm283, %v827, %v826
        %v829 = vpack.c.b16 %v828, %v828
        %830 = vrot.lane.b32.xlu0 %v829, 127
        %v831 = vpop.permute.xlu0 %830
        %v832 = vrot.slane %v819, 7
        %v833 = vsel %vm266, %v832, %v818
        %v834 = vrot.slane %v820, 6
        %v835 = vsel %vm269, %v834, %v833
        %v836 = vrot.slane %v821, 5
        %v837 = vsel %vm272, %v836, %v835
        %v838 = vpack.c.b16 %v837, %v837
        %839 = vrot.lane.b32.xlu0 %v838, 126
        %v840 = vpop.permute.xlu0 %839
        %v841 = vsel %vm339, %v653, %v659
        %v842 = vsel %vm343, %v841, %v661
        %v844 = vsel %vm346, %v842, %v730
        %v848 = vsel %vm339, %v792, %v794
        %v850 = vsel %vm343, %v848, %v817
        %v852 = vsel %vm346, %v850, %v831
        %v855 = vsel %vm339, %v840, 0
        %857 = vmatprep.subr.bf16.mxu0 0
        %858 = vmatpush1.bf16.msra.mxu0 %v844
        %859 = vmatprep.subr.bf16.mxu0 0
        %860 = vmatpush1.bf16.msra.mxu0 %v852
        %861 = vmatprep.subr.bf16.mxu0 0
        %862 = vmatpush1.bf16.msra.mxu0 %v855
        %863 = vmatprep.subr.bf16.mxu0 0
        %864 = vmatpush1.bf16.msra.mxu0 0
        %865 = vmatprep.subr.bf16.mxu0 0
        %866 = vmatpush1.bf16.msra.mxu0 0
        %867 = vmatprep.subr.bf16.mxu0 0
        %868 = vmatpush1.bf16.msra.mxu0 0
        %869 = vmatprep.subr.bf16.mxu0 0
        %870 = vmatpush1.bf16.msra.mxu0 0
        %871 = vmatprep.subr.bf16.mxu0 0
        %872 = vmatpush1.bf16.msra.mxu0 0
        %873 = vmatprep.subr.bf16.mxu0 0
        %874 = vmatpush1.bf16.msra.mxu0 0
        %875 = vmatprep.subr.bf16.mxu0 0
        %876 = vmatpush1.bf16.msra.mxu0 0
        %877 = vmatprep.subr.bf16.mxu0 0
        %878 = vmatpush1.bf16.msra.mxu0 0
        %879 = vmatprep.subr.bf16.mxu0 0
        %880 = vmatpush1.bf16.msra.mxu0 0
        %881 = vmatprep.subr.bf16.mxu0 0
        %882 = vmatpush1.bf16.msra.mxu0 0
        %883 = vmatprep.subr.bf16.mxu0 0
        %884 = vmatpush1.bf16.msra.mxu0 0
        %885 = vmatprep.subr.bf16.mxu0 0
        %886 = vmatpush1.bf16.msra.mxu0 0
        %887 = vmatprep.subr.bf16.mxu0 0
        %888 = vmatpush1.bf16.msra.mxu0 0
        %889 = vmatprep.mubr.bf16.mxu0 0
        %890 = vmatmul.mubr.bf16.gmra.mrb[0].mxu0 %v365
        %v891 = vpop.f32.mrb[0].mxu0
        %v892 = vadd.f32 %v361, %v891
        %v893 = vpop.f32.mrb[0].mxu0
        %v894 = vpop.f32.mrb[0].mxu0
        %v895 = vpop.f32.mrb[0].mxu0
        %896 = vdwg.mxu0
        %897 = vrot.lane.b32.xlu0 %v838, 127
        %v898 = vpop.permute.xlu0 %897
        %899 = vrot.lane.b32.xlu0 %v829, 126
        %v900 = vpop.permute.xlu0 %899
        %v901 = vrot.slane %v818, 1
        %v902 = vsel %vm266, %v819, %v901
        %v903 = vrot.slane %v820, 7
        %v904 = vsel %vm269, %v903, %v902
        %v905 = vrot.slane %v821, 6
        %v906 = vsel %vm272, %v905, %v904
        %v907 = vpack.c.b16 %v906, %v906
        %v908 = vrot.slane %v818, 5
        %v909 = vrot.slane %v819, 4
        %v910 = vsel %vm277, %v909, %v908
        %v911 = vrot.slane %v820, 3
        %v912 = vsel %vm280, %v911, %v910
        %v913 = vrot.slane %v821, 2
        %v914 = vsel %vm283, %v913, %v912
        %v915 = vpack.c.b16 %v914, %v914
        %916 = vrot.lane.b32.xlu0 %v915, 127
        %v917 = vpop.permute.xlu0 %916
        %918 = vrot.lane.b32.xlu0 %v907, 126
        %v919 = vpop.permute.xlu0 %918
        %v920 = vsel %vm339, %v726, %v732
        %v921 = vsel %vm343, %v920, %v734
        %v923 = vsel %vm346, %v921, %v829
        %v927 = vsel %vm339, %v898, %v900
        %v929 = vsel %vm343, %v927, %v907
        %v931 = vsel %vm346, %v929, %v917
        %v934 = vsel %vm339, %v919, 0
        %936 = vmatprep.subr.bf16.mxu0 0
        %937 = vmatpush1.bf16.msra.mxu0 %v923
        %938 = vmatprep.subr.bf16.mxu0 0
        %939 = vmatpush1.bf16.msra.mxu0 %v931
        %940 = vmatprep.subr.bf16.mxu0 0
        %941 = vmatpush1.bf16.msra.mxu0 %v934
        %942 = vmatprep.subr.bf16.mxu0 0
        %943 = vmatpush1.bf16.msra.mxu0 0
        %944 = vmatprep.subr.bf16.mxu0 0
        %945 = vmatpush1.bf16.msra.mxu0 0
        %946 = vmatprep.subr.bf16.mxu0 0
        %947 = vmatpush1.bf16.msra.mxu0 0
        %948 = vmatprep.subr.bf16.mxu0 0
        %949 = vmatpush1.bf16.msra.mxu0 0
        %950 = vmatprep.subr.bf16.mxu0 0
        %951 = vmatpush1.bf16.msra.mxu0 0
        %952 = vmatprep.subr.bf16.mxu0 0
        %953 = vmatpush1.bf16.msra.mxu0 0
        %954 = vmatprep.subr.bf16.mxu0 0
        %955 = vmatpush1.bf16.msra.mxu0 0
        %956 = vmatprep.subr.bf16.mxu0 0
        %957 = vmatpush1.bf16.msra.mxu0 0
        %958 = vmatprep.subr.bf16.mxu0 0
        %959 = vmatpush1.bf16.msra.mxu0 0
        %960 = vmatprep.subr.bf16.mxu0 0
        %961 = vmatpush1.bf16.msra.mxu0 0
        %962 = vmatprep.subr.bf16.mxu0 0
        %963 = vmatpush1.bf16.msra.mxu0 0
        %964 = vmatprep.subr.bf16.mxu0 0
        %965 = vmatpush1.bf16.msra.mxu0 0
        %966 = vmatprep.subr.bf16.mxu0 0
        %967 = vmatpush1.bf16.msra.mxu0 0
        %968 = vmatprep.mubr.bf16.mxu0 0
        %969 = vmatmul.mubr.bf16.gmra.mrb[0].mxu0 %v365
        %v970 = vpop.f32.mrb[0].mxu0
        %v971 = vadd.f32 %v361, %v970
        %v972 = vpop.f32.mrb[0].mxu0
        %v973 = vpop.f32.mrb[0].mxu0
        %v974 = vpop.f32.mrb[0].mxu0
        %975 = vdwg.mxu0
        %976 = vrot.lane.b32.xlu0 %v817, 126
        %v977 = vpop.permute.xlu0 %976
        %978 = vrot.lane.b32.xlu0 %v907, 127
        %v979 = vpop.permute.xlu0 %978
        %980 = vrot.lane.b32.xlu0 %v915, 126
        %v981 = vpop.permute.xlu0 %980
        %v982 = vrot.slane %v818, 2
        %v983 = vrot.slane %v819, 1
        %v984 = vsel %vm266, %v983, %v982
        %v985 = vsel %vm269, %v820, %v984
        %v986 = vrot.slane %v821, 7
        %v987 = vsel %vm272, %v986, %v985
        %v988 = vpack.c.b16 %v987, %v987
        %v989 = vrot.slane %v818, 6
        %v990 = vrot.slane %v819, 5
        %v991 = vsel %vm277, %v990, %v989
        %v992 = vrot.slane %v820, 4
        %v993 = vsel %vm280, %v992, %v991
        %v994 = vrot.slane %v821, 3
        %v995 = vsel %vm283, %v994, %v993
        %v996 = vpack.c.b16 %v995, %v995
        %997 = vrot.lane.b32.xlu0 %v996, 127
        %v998 = vpop.permute.xlu0 %997
        %999 = vrot.lane.b32.xlu0 %v988, 126
        %v1000 = vpop.permute.xlu0 %999
        %v1002 = vsel %vm339, %v838, %v831
        %v1004 = vsel %vm343, %v1002, %v977
        %v1006 = vsel %vm346, %v1004, %v915
        %v1010 = vsel %vm339, %v979, %v981
        %v1012 = vsel %vm343, %v1010, %v988
        %v1014 = vsel %vm346, %v1012, %v998
        %v1017 = vsel %vm339, %v1000, 0
        %1019 = vmatprep.subr.bf16.mxu0 0
        %1020 = vmatpush1.bf16.msra.mxu0 %v1006
        %1021 = vmatprep.subr.bf16.mxu0 0
        %1022 = vmatpush1.bf16.msra.mxu0 %v1014
        %1023 = vmatprep.subr.bf16.mxu0 0
        %1024 = vmatpush1.bf16.msra.mxu0 %v1017
        %1025 = vmatprep.subr.bf16.mxu0 0
        %1026 = vmatpush1.bf16.msra.mxu0 0
        %1027 = vmatprep.subr.bf16.mxu0 0
        %1028 = vmatpush1.bf16.msra.mxu0 0
        %1029 = vmatprep.subr.bf16.mxu0 0
        %1030 = vmatpush1.bf16.msra.mxu0 0
        %1031 = vmatprep.subr.bf16.mxu0 0
        %1032 = vmatpush1.bf16.msra.mxu0 0
        %1033 = vmatprep.subr.bf16.mxu0 0
        %1034 = vmatpush1.bf16.msra.mxu0 0
        %1035 = vmatprep.subr.bf16.mxu0 0
        %1036 = vmatpush1.bf16.msra.mxu0 0
        %1037 = vmatprep.subr.bf16.mxu0 0
        %1038 = vmatpush1.bf16.msra.mxu0 0
        %1039 = vmatprep.subr.bf16.mxu0 0
        %1040 = vmatpush1.bf16.msra.mxu0 0
        %1041 = vmatprep.subr.bf16.mxu0 0
        %1042 = vmatpush1.bf16.msra.mxu0 0
        %1043 = vmatprep.subr.bf16.mxu0 0
        %1044 = vmatpush1.bf16.msra.mxu0 0
        %1045 = vmatprep.subr.bf16.mxu0 0
        %1046 = vmatpush1.bf16.msra.mxu0 0
        %1047 = vmatprep.subr.bf16.mxu0 0
        %1048 = vmatpush1.bf16.msra.mxu0 0
        %1049 = vmatprep.subr.bf16.mxu0 0
        %1050 = vmatpush1.bf16.msra.mxu0 0
        %1051 = vmatprep.mubr.bf16.mxu0 0
        %1052 = vmatmul.mubr.bf16.gmra.mrb[0].mxu0 %v365
        %v1053 = vpop.f32.mrb[0].mxu0
        %v1054 = vadd.f32 %v361, %v1053
        %v1055 = vpop.f32.mrb[0].mxu0
        %v1056 = vpop.f32.mrb[0].mxu0
        %v1057 = vpop.f32.mrb[0].mxu0
        %1058 = vdwg.mxu0
        %1059 = vrot.lane.b32.xlu0 %v988, 127
        %v1060 = vpop.permute.xlu0 %1059
        %1061 = vrot.lane.b32.xlu0 %v996, 126
        %v1062 = vpop.permute.xlu0 %1061
        %v1063 = vrot.slane %v818, 3
        %v1064 = vrot.slane %v819, 2
        %v1065 = vsel %vm266, %v1064, %v1063
        %v1066 = vrot.slane %v820, 1
        %v1067 = vsel %vm269, %v1066, %v1065
        %v1068 = vsel %vm272, %v821, %v1067
        %v1069 = vpack.c.b16 %v1068, %v1068
        %v1070 = vrot.slane %v818, 7
        %v1071 = vrot.slane %v819, 6
        %v1072 = vsel %vm277, %v1071, %v1070
        %v1073 = vrot.slane %v820, 5
        %v1074 = vsel %vm280, %v1073, %v1072
        %v1075 = vrot.slane %v821, 4
        %v1076 = vsel %vm283, %v1075, %v1074
        %v1077 = vpack.c.b16 %v1076, %v1076
        %1078 = vrot.lane.b32.xlu0 %v1077, 127
        %v1079 = vpop.permute.xlu0 %1078
        %1080 = vrot.lane.b32.xlu0 %v1069, 126
        %v1081 = vpop.permute.xlu0 %1080
        %v1082 = vsel %vm339, %v907, %v917
        %v1083 = vsel %vm343, %v1082, %v919
        %v1085 = vsel %vm346, %v1083, %v996
        %v1089 = vsel %vm339, %v1060, %v1062
        %v1091 = vsel %vm343, %v1089, %v1069
        %v1093 = vsel %vm346, %v1091, %v1079
        %v1096 = vsel %vm339, %v1081, 0
        %1098 = vmatprep.subr.bf16.mxu0 0
        %1099 = vmatpush1.bf16.msra.mxu0 %v1085
        %1100 = vmatprep.subr.bf16.mxu0 0
        %1101 = vmatpush1.bf16.msra.mxu0 %v1093
        %1102 = vmatprep.subr.bf16.mxu0 0
        %1103 = vmatpush1.bf16.msra.mxu0 %v1096
        %1104 = vmatprep.subr.bf16.mxu0 0
        %1105 = vmatpush1.bf16.msra.mxu0 0
        %1106 = vmatprep.subr.bf16.mxu0 0
        %1107 = vmatpush1.bf16.msra.mxu0 0
        %1108 = vmatprep.subr.bf16.mxu0 0
        %1109 = vmatpush1.bf16.msra.mxu0 0
        %1110 = vmatprep.subr.bf16.mxu0 0
        %1111 = vmatpush1.bf16.msra.mxu0 0
        %1112 = vmatprep.subr.bf16.mxu0 0
        %1113 = vmatpush1.bf16.msra.mxu0 0
        %1114 = vmatprep.subr.bf16.mxu0 0
        %1115 = vmatpush1.bf16.msra.mxu0 0
        %1116 = vmatprep.subr.bf16.mxu0 0
        %1117 = vmatpush1.bf16.msra.mxu0 0
        %1118 = vmatprep.subr.bf16.mxu0 0
        %1119 = vmatpush1.bf16.msra.mxu0 0
        %1120 = vmatprep.subr.bf16.mxu0 0
        %1121 = vmatpush1.bf16.msra.mxu0 0
        %1122 = vmatprep.subr.bf16.mxu0 0
        %1123 = vmatpush1.bf16.msra.mxu0 0
        %1124 = vmatprep.subr.bf16.mxu0 0
        %1125 = vmatpush1.bf16.msra.mxu0 0
        %1126 = vmatprep.subr.bf16.mxu0 0
        %1127 = vmatpush1.bf16.msra.mxu0 0
        %1128 = vmatprep.subr.bf16.mxu0 0
        %1129 = vmatpush1.bf16.msra.mxu0 0
        %1130 = vmatprep.mubr.bf16.mxu0 0
        %1131 = vmatmul.mubr.bf16.gmra.mrb[0].mxu0 %v365
        %v1132 = vpop.f32.mrb[0].mxu0
        %v1133 = vadd.f32 %v361, %v1132
        %v1134 = vpop.f32.mrb[0].mxu0
        %v1135 = vpop.f32.mrb[0].mxu0
        %v1136 = vpop.f32.mrb[0].mxu0
        %1137 = vdwg.mxu0
        %1138 = vrot.lane.b32.xlu0 %v1069, 127
        %v1139 = vpop.permute.xlu0 %1138
        %1140 = vrot.lane.b32.xlu0 %v1077, 126
        %v1141 = vpop.permute.xlu0 %1140
        %v1142 = vsel %vm266, %v823, %v822
        %v1143 = vsel %vm269, %v825, %v1142
        %v1144 = vsel %vm272, %v827, %v1143
        %v1145 = vpack.c.b16 %v1144, %v1144
        %v1146 = vsel %vm277, %v811, %v807
        %v1147 = vsel %vm280, %v813, %v1146
        %v1148 = vsel %vm283, %v815, %v1147
        %v1149 = vpack.c.b16 %v1148, %v1148
        %1150 = vrot.lane.b32.xlu0 %v1149, 127
        %v1151 = vpop.permute.xlu0 %1150
        %1152 = vrot.lane.b32.xlu0 %v1145, 126
        %v1153 = vpop.permute.xlu0 %1152
        %v1154 = vsel %vm339, %v988, %v998
        %v1155 = vsel %vm343, %v1154, %v1000
        %v1157 = vsel %vm346, %v1155, %v1077
        %v1161 = vsel %vm339, %v1139, %v1141
        %v1163 = vsel %vm343, %v1161, %v1145
        %v1165 = vsel %vm346, %v1163, %v1151
        %v1168 = vsel %vm339, %v1153, 0
        %1170 = vmatprep.subr.bf16.mxu0 0
        %1171 = vmatpush1.bf16.msra.mxu0 %v1157
        %1172 = vmatprep.subr.bf16.mxu0 0
        %1173 = vmatpush1.bf16.msra.mxu0 %v1165
        %1174 = vmatprep.subr.bf16.mxu0 0
        %1175 = vmatpush1.bf16.msra.mxu0 %v1168
        %1176 = vmatprep.subr.bf16.mxu0 0
        %1177 = vmatpush1.bf16.msra.mxu0 0
        %1178 = vmatprep.subr.bf16.mxu0 0
        %1179 = vmatpush1.bf16.msra.mxu0 0
        %1180 = vmatprep.subr.bf16.mxu0 0
        %1181 = vmatpush1.bf16.msra.mxu0 0
        %1182 = vmatprep.subr.bf16.mxu0 0
        %1183 = vmatpush1.bf16.msra.mxu0 0
        %1184 = vmatprep.subr.bf16.mxu0 0
        %1185 = vmatpush1.bf16.msra.mxu0 0
        %1186 = vmatprep.subr.bf16.mxu0 0
        %1187 = vmatpush1.bf16.msra.mxu0 0
        %1188 = vmatprep.subr.bf16.mxu0 0
        %1189 = vmatpush1.bf16.msra.mxu0 0
        %1190 = vmatprep.subr.bf16.mxu0 0
        %1191 = vmatpush1.bf16.msra.mxu0 0
        %1192 = vmatprep.subr.bf16.mxu0 0
        %1193 = vmatpush1.bf16.msra.mxu0 0
        %1194 = vmatprep.subr.bf16.mxu0 0
        %1195 = vmatpush1.bf16.msra.mxu0 0
        %1196 = vmatprep.subr.bf16.mxu0 0
        %1197 = vmatpush1.bf16.msra.mxu0 0
        %1198 = vmatprep.subr.bf16.mxu0 0
        %1199 = vmatpush1.bf16.msra.mxu0 0
        %1200 = vmatprep.subr.bf16.mxu0 0
        %1201 = vmatpush1.bf16.msra.mxu0 0
        %1202 = vmatprep.mubr.bf16.mxu0 0
        %1203 = vmatmul.mubr.bf16.gmra.mrb[0].mxu0 %v365
        %v1204 = vpop.f32.mrb[0].mxu0
        %v1205 = vadd.f32 %v361, %v1204
        %v1206 = vpop.f32.mrb[0].mxu0
        %v1207 = vpop.f32.mrb[0].mxu0
        %v1208 = vpop.f32.mrb[0].mxu0
        %1209 = vdwg.mxu0
        %1210 = vrot.lane.b32.xlu0 %v1145, 127
        %v1211 = vpop.permute.xlu0 %1210
        %v1212 = vsel %vm277, %v832, %v818
        %v1213 = vsel %vm280, %v834, %v1212
        %v1214 = vsel %vm283, %v836, %v1213
        %v1215 = vpack.c.b16 %v1214, %v1214
        %1216 = vrot.lane.b32.xlu0 %v1215, 126
        %v1217 = vpop.permute.xlu0 %1216
        %v1218 = vsel %vm266, %v909, %v908
        %v1219 = vsel %vm269, %v911, %v1218
        %v1220 = vsel %vm272, %v913, %v1219
        %v1221 = vpack.c.b16 %v1220, %v1220
        %v1222 = vsel %vm277, %v819, %v901
        %v1223 = vsel %vm280, %v903, %v1222
        %v1224 = vsel %vm283, %v905, %v1223
        %v1225 = vpack.c.b16 %v1224, %v1224
        %1226 = vrot.lane.b32.xlu0 %v1225, 127
        %v1227 = vpop.permute.xlu0 %1226
        %1228 = vrot.lane.b32.xlu0 %v1221, 126
        %v1229 = vpop.permute.xlu0 %1228
        %v1230 = vsel %vm339, %v1069, %v1079
        %v1231 = vsel %vm343, %v1230, %v1081
        %v1233 = vsel %vm346, %v1231, %v1149
        %v1237 = vsel %vm339, %v1211, %v1217
        %v1239 = vsel %vm343, %v1237, %v1221
        %v1241 = vsel %vm346, %v1239, %v1227
        %v1244 = vsel %vm339, %v1229, 0
        %1246 = vmatprep.subr.bf16.mxu0 0
        %1247 = vmatpush1.bf16.msra.mxu0 %v1233
        %1248 = vmatprep.subr.bf16.mxu0 0
        %1249 = vmatpush1.bf16.msra.mxu0 %v1241
        %1250 = vmatprep.subr.bf16.mxu0 0
        %1251 = vmatpush1.bf16.msra.mxu0 %v1244
        %1252 = vmatprep.subr.bf16.mxu0 0
        %1253 = vmatpush1.bf16.msra.mxu0 0
        %1254 = vmatprep.subr.bf16.mxu0 0
        %1255 = vmatpush1.bf16.msra.mxu0 0
        %1256 = vmatprep.subr.bf16.mxu0 0
        %1257 = vmatpush1.bf16.msra.mxu0 0
        %1258 = vmatprep.subr.bf16.mxu0 0
        %1259 = vmatpush1.bf16.msra.mxu0 0
        %1260 = vmatprep.subr.bf16.mxu0 0
        %1261 = vmatpush1.bf16.msra.mxu0 0
        %1262 = vmatprep.subr.bf16.mxu0 0
        %1263 = vmatpush1.bf16.msra.mxu0 0
        %1264 = vmatprep.subr.bf16.mxu0 0
        %1265 = vmatpush1.bf16.msra.mxu0 0
        %1266 = vmatprep.subr.bf16.mxu0 0
        %1267 = vmatpush1.bf16.msra.mxu0 0
        %1268 = vmatprep.subr.bf16.mxu0 0
        %1269 = vmatpush1.bf16.msra.mxu0 0
        %1270 = vmatprep.subr.bf16.mxu0 0
        %1271 = vmatpush1.bf16.msra.mxu0 0
        %1272 = vmatprep.subr.bf16.mxu0 0
        %1273 = vmatpush1.bf16.msra.mxu0 0
        %1274 = vmatprep.subr.bf16.mxu0 0
        %1275 = vmatpush1.bf16.msra.mxu0 0
        %1276 = vmatprep.subr.bf16.mxu0 0
        %1277 = vmatpush1.bf16.msra.mxu0 0
        %1278 = vmatprep.mubr.bf16.mxu0 0
        %1279 = vmatmul.mubr.bf16.gmra.mrb[0].mxu0 %v365
        %v1280 = vpop.f32.mrb[0].mxu0
        %v1281 = vadd.f32 %v361, %v1280
        %v1282 = vpop.f32.mrb[0].mxu0
        %v1283 = vpop.f32.mrb[0].mxu0
        %v1284 = vpop.f32.mrb[0].mxu0
        %1285 = vdwg.mxu0
        %1286 = vrot.lane.b32.xlu0 %v1215, 127
        %v1287 = vpop.permute.xlu0 %1286
        %1288 = vrot.lane.b32.xlu0 %v1221, 127
        %v1289 = vpop.permute.xlu0 %1288
        %1290 = vrot.lane.b32.xlu0 %v1225, 126
        %v1291 = vpop.permute.xlu0 %1290
        %v1292 = vsel %vm266, %v990, %v989
        %v1293 = vsel %vm269, %v992, %v1292
        %v1294 = vsel %vm272, %v994, %v1293
        %v1295 = vpack.c.b16 %v1294, %v1294
        %v1296 = vsel %vm277, %v983, %v982
        %v1297 = vsel %vm280, %v820, %v1296
        %v1298 = vsel %vm283, %v986, %v1297
        %v1299 = vpack.c.b16 %v1298, %v1298
        %1300 = vrot.lane.b32.xlu0 %v1299, 127
        %v1301 = vpop.permute.xlu0 %1300
        %1302 = vrot.lane.b32.xlu0 %v1295, 126
        %v1303 = vpop.permute.xlu0 %1302
        %v1305 = vsel %vm339, %v1145, %v1287
        %v1306 = vsel %vm343, %v1305, %v1153
        %v1308 = vsel %vm346, %v1306, %v1225
        %v1312 = vsel %vm339, %v1289, %v1291
        %v1314 = vsel %vm343, %v1312, %v1295
        %v1316 = vsel %vm346, %v1314, %v1301
        %v1319 = vsel %vm339, %v1303, 0
        %1321 = vmatprep.subr.bf16.mxu0 0
        %1322 = vmatpush1.bf16.msra.mxu0 %v1308
        %1323 = vmatprep.subr.bf16.mxu0 0
        %1324 = vmatpush1.bf16.msra.mxu0 %v1316
        %1325 = vmatprep.subr.bf16.mxu0 0
        %1326 = vmatpush1.bf16.msra.mxu0 %v1319
        %1327 = vmatprep.subr.bf16.mxu0 0
        %1328 = vmatpush1.bf16.msra.mxu0 0
        %1329 = vmatprep.subr.bf16.mxu0 0
        %1330 = vmatpush1.bf16.msra.mxu0 0
        %1331 = vmatprep.subr.bf16.mxu0 0
        %1332 = vmatpush1.bf16.msra.mxu0 0
        %1333 = vmatprep.subr.bf16.mxu0 0
        %1334 = vmatpush1.bf16.msra.mxu0 0
        %1335 = vmatprep.subr.bf16.mxu0 0
        %1336 = vmatpush1.bf16.msra.mxu0 0
        %1337 = vmatprep.subr.bf16.mxu0 0
        %1338 = vmatpush1.bf16.msra.mxu0 0
        %1339 = vmatprep.subr.bf16.mxu0 0
        %1340 = vmatpush1.bf16.msra.mxu0 0
        %1341 = vmatprep.subr.bf16.mxu0 0
        %1342 = vmatpush1.bf16.msra.mxu0 0
        %1343 = vmatprep.subr.bf16.mxu0 0
        %1344 = vmatpush1.bf16.msra.mxu0 0
        %1345 = vmatprep.subr.bf16.mxu0 0
        %1346 = vmatpush1.bf16.msra.mxu0 0
        %1347 = vmatprep.subr.bf16.mxu0 0
        %1348 = vmatpush1.bf16.msra.mxu0 0
        %1349 = vmatprep.subr.bf16.mxu0 0
        %1350 = vmatpush1.bf16.msra.mxu0 0
        %1351 = vmatprep.subr.bf16.mxu0 0
        %1352 = vmatpush1.bf16.msra.mxu0 0
        %1353 = vmatprep.mubr.bf16.mxu0 0
        %1354 = vmatmul.mubr.bf16.gmra.mrb[0].mxu0 %v365
        %v1355 = vpop.f32.mrb[0].mxu0
        %v1356 = vadd.f32 %v361, %v1355
        %v1357 = vpop.f32.mrb[0].mxu0
        %v1358 = vpop.f32.mrb[0].mxu0
        %v1359 = vpop.f32.mrb[0].mxu0
        %1360 = vdwg.mxu0
        %1361 = vrot.lane.b32.xlu0 %v1295, 127
        %v1362 = vpop.permute.xlu0 %1361
        %1363 = vrot.lane.b32.xlu0 %v1299, 126
        %v1364 = vpop.permute.xlu0 %1363
        %v1365 = vsel %vm266, %v1071, %v1070
        %v1366 = vsel %vm269, %v1073, %v1365
        %v1367 = vsel %vm272, %v1075, %v1366
        %v1368 = vpack.c.b16 %v1367, %v1367
        %v1369 = vsel %vm277, %v1064, %v1063
        %v1370 = vsel %vm280, %v1066, %v1369
        %v1371 = vsel %vm283, %v821, %v1370
        %v1372 = vpack.c.b16 %v1371, %v1371
        %1373 = vrot.lane.b32.xlu0 %v1372, 127
        %v1374 = vpop.permute.xlu0 %1373
        %1375 = vrot.lane.b32.xlu0 %v1368, 126
        %v1376 = vpop.permute.xlu0 %1375
        %v1377 = vsel %vm339, %v1221, %v1227
        %v1378 = vsel %vm343, %v1377, %v1229
        %v1380 = vsel %vm346, %v1378, %v1299
        %v1384 = vsel %vm339, %v1362, %v1364
        %v1386 = vsel %vm343, %v1384, %v1368
        %v1388 = vsel %vm346, %v1386, %v1374
        %v1391 = vsel %vm339, %v1376, 0
        %1393 = vmatprep.subr.bf16.mxu0 0
        %1394 = vmatpush1.bf16.msra.mxu0 %v1380
        %1395 = vmatprep.subr.bf16.mxu0 0
        %1396 = vmatpush1.bf16.msra.mxu0 %v1388
        %1397 = vmatprep.subr.bf16.mxu0 0
        %1398 = vmatpush1.bf16.msra.mxu0 %v1391
        %1399 = vmatprep.subr.bf16.mxu0 0
        %1400 = vmatpush1.bf16.msra.mxu0 0
        %1401 = vmatprep.subr.bf16.mxu0 0
        %1402 = vmatpush1.bf16.msra.mxu0 0
        %1403 = vmatprep.subr.bf16.mxu0 0
        %1404 = vmatpush1.bf16.msra.mxu0 0
        %1405 = vmatprep.subr.bf16.mxu0 0
        %1406 = vmatpush1.bf16.msra.mxu0 0
        %1407 = vmatprep.subr.bf16.mxu0 0
        %1408 = vmatpush1.bf16.msra.mxu0 0
        %1409 = vmatprep.subr.bf16.mxu0 0
        %1410 = vmatpush1.bf16.msra.mxu0 0
        %1411 = vmatprep.subr.bf16.mxu0 0
        %1412 = vmatpush1.bf16.msra.mxu0 0
        %1413 = vmatprep.subr.bf16.mxu0 0
        %1414 = vmatpush1.bf16.msra.mxu0 0
        %1415 = vmatprep.subr.bf16.mxu0 0
        %1416 = vmatpush1.bf16.msra.mxu0 0
        %1417 = vmatprep.subr.bf16.mxu0 0
        %1418 = vmatpush1.bf16.msra.mxu0 0
        %1419 = vmatprep.subr.bf16.mxu0 0
        %1420 = vmatpush1.bf16.msra.mxu0 0
        %1421 = vmatprep.subr.bf16.mxu0 0
        %1422 = vmatpush1.bf16.msra.mxu0 0
        %1423 = vmatprep.subr.bf16.mxu0 0
        %1424 = vmatpush1.bf16.msra.mxu0 0
        %1425 = vmatprep.mubr.bf16.mxu0 0
        %1426 = vmatmul.mubr.bf16.gmra.mrb[0].mxu0 %v365
        %v1427 = vpop.f32.mrb[0].mxu0
        %v1428 = vadd.f32 %v361, %v1427
        %v1429 = vpop.f32.mrb[0].mxu0
        %v1430 = vpop.f32.mrb[0].mxu0
        %v1431 = vpop.f32.mrb[0].mxu0
        %1432 = vdwg.mxu0
        %1433 = vrot.lane.b32.xlu0 %v1368, 127
        %v1434 = vpop.permute.xlu0 %1433
        %1435 = vrot.lane.b32.xlu0 %v1372, 126
        %v1436 = vpop.permute.xlu0 %1435
        %v1441 = vunpack.c.l.b16 %v237
        %v1442 = vunpack.c.l.b16 %v240
        %v1443 = vunpack.c.l.b16 %v243
        %v1444 = vunpack.c.l.b16 %v246
        %v1445 = vpack.c.b16 %v1441, %v1441
        %v1446 = vpack.c.b16 %v1442, %v1442
        %v1447 = vpack.c.b16 %v1443, %v1443
        %v1448 = vpack.c.b16 %v1444, %v1444
        %v1449 = vunpack.c.h.b16 %v1445
        %v1450 = vunpack.c.h.b16 %v1446
        %v1451 = vunpack.c.h.b16 %v1447
        %v1452 = vunpack.c.h.b16 %v1448
        %v1453 = vrot.slane %v1450, 7
        %v1454 = vsel %vm266, %v1453, %v1449
        %v1455 = vrot.slane %v1451, 6
        %v1456 = vsel %vm269, %v1455, %v1454
        %v1457 = vrot.slane %v1452, 5
        %v1458 = vsel %vm272, %v1457, %v1456
        %v1459 = vpack.c.b16 %v1458, %v1458
        %v1460 = vunpack.c.l.b16 %v1445
        %v1461 = vunpack.c.l.b16 %v1446
        %v1462 = vunpack.c.l.b16 %v1447
        %v1463 = vunpack.c.l.b16 %v1448
        %v1464 = vrot.slane %v1460, 4
        %v1465 = vrot.slane %v1461, 3
        %v1466 = vsel %vm277, %v1465, %v1464
        %v1467 = vrot.slane %v1462, 2
        %v1468 = vsel %vm280, %v1467, %v1466
        %v1469 = vrot.slane %v1463, 1
        %v1470 = vsel %vm283, %v1469, %v1468
        %v1471 = vpack.c.b16 %v1470, %v1470
        %1472 = vrot.lane.b32.xlu0 %v1471, 127
        %v1473 = vpop.permute.xlu0 %1472
        %v1474 = vrot.slane %v1461, 7
        %v1475 = vsel %vm266, %v1474, %v1460
        %v1476 = vrot.slane %v1462, 6
        %v1477 = vsel %vm269, %v1476, %v1475
        %v1478 = vrot.slane %v1463, 5
        %v1479 = vsel %vm272, %v1478, %v1477
        %v1480 = vpack.c.b16 %v1479, %v1479
        %1481 = vrot.lane.b32.xlu0 %v1480, 126
        %v1482 = vpop.permute.xlu0 %1481
        %v1483 = vsel %vm339, %v1295, %v1301
        %v1484 = vsel %vm343, %v1483, %v1303
        %v1486 = vsel %vm346, %v1484, %v1372
        %v1490 = vsel %vm339, %v1434, %v1436
        %v1492 = vsel %vm343, %v1490, %v1459
        %v1494 = vsel %vm346, %v1492, %v1473
        %v1497 = vsel %vm339, %v1482, 0
        %1499 = vmatprep.subr.bf16.mxu0 0
        %1500 = vmatpush1.bf16.msra.mxu0 %v1486
        %1501 = vmatprep.subr.bf16.mxu0 0
        %1502 = vmatpush1.bf16.msra.mxu0 %v1494
        %1503 = vmatprep.subr.bf16.mxu0 0
        %1504 = vmatpush1.bf16.msra.mxu0 %v1497
        %1505 = vmatprep.subr.bf16.mxu0 0
        %1506 = vmatpush1.bf16.msra.mxu0 0
        %1507 = vmatprep.subr.bf16.mxu0 0
        %1508 = vmatpush1.bf16.msra.mxu0 0
        %1509 = vmatprep.subr.bf16.mxu0 0
        %1510 = vmatpush1.bf16.msra.mxu0 0
        %1511 = vmatprep.subr.bf16.mxu0 0
        %1512 = vmatpush1.bf16.msra.mxu0 0
        %1513 = vmatprep.subr.bf16.mxu0 0
        %1514 = vmatpush1.bf16.msra.mxu0 0
        %1515 = vmatprep.subr.bf16.mxu0 0
        %1516 = vmatpush1.bf16.msra.mxu0 0
        %1517 = vmatprep.subr.bf16.mxu0 0
        %1518 = vmatpush1.bf16.msra.mxu0 0
        %1519 = vmatprep.subr.bf16.mxu0 0
        %1520 = vmatpush1.bf16.msra.mxu0 0
        %1521 = vmatprep.subr.bf16.mxu0 0
        %1522 = vmatpush1.bf16.msra.mxu0 0
        %1523 = vmatprep.subr.bf16.mxu0 0
        %1524 = vmatpush1.bf16.msra.mxu0 0
        %1525 = vmatprep.subr.bf16.mxu0 0
        %1526 = vmatpush1.bf16.msra.mxu0 0
        %1527 = vmatprep.subr.bf16.mxu0 0
        %1528 = vmatpush1.bf16.msra.mxu0 0
        %1529 = vmatprep.subr.bf16.mxu0 0
        %1530 = vmatpush1.bf16.msra.mxu0 0
        %1531 = vmatprep.mubr.bf16.mxu0 0
        %1532 = vmatmul.mubr.bf16.gmra.mrb[0].mxu0 %v365
        %v1533 = vpop.f32.mrb[0].mxu0
        %v1534 = vadd.f32 %v361, %v1533
        %v1535 = vpop.f32.mrb[0].mxu0
        %v1536 = vpop.f32.mrb[0].mxu0
        %v1537 = vpop.f32.mrb[0].mxu0
        %1538 = vdwg.mxu0
        %1539 = vrot.lane.b32.xlu0 %v1480, 127
        %v1540 = vpop.permute.xlu0 %1539
        %1541 = vrot.lane.b32.xlu0 %v1471, 126
        %v1542 = vpop.permute.xlu0 %1541
        %v1543 = vrot.slane %v1460, 1
        %v1544 = vsel %vm266, %v1461, %v1543
        %v1545 = vrot.slane %v1462, 7
        %v1546 = vsel %vm269, %v1545, %v1544
        %v1547 = vrot.slane %v1463, 6
        %v1548 = vsel %vm272, %v1547, %v1546
        %v1549 = vpack.c.b16 %v1548, %v1548
        %v1550 = vrot.slane %v1460, 5
        %v1551 = vrot.slane %v1461, 4
        %v1552 = vsel %vm277, %v1551, %v1550
        %v1553 = vrot.slane %v1462, 3
        %v1554 = vsel %vm280, %v1553, %v1552
        %v1555 = vrot.slane %v1463, 2
        %v1556 = vsel %vm283, %v1555, %v1554
        %v1557 = vpack.c.b16 %v1556, %v1556
        %1558 = vrot.lane.b32.xlu0 %v1557, 127
        %v1559 = vpop.permute.xlu0 %1558
        %1560 = vrot.lane.b32.xlu0 %v1549, 126
        %v1561 = vpop.permute.xlu0 %1560
        %v1562 = vsel %vm339, %v1368, %v1374
        %v1563 = vsel %vm343, %v1562, %v1376
        %v1565 = vsel %vm346, %v1563, %v1471
        %v1569 = vsel %vm339, %v1540, %v1542
        %v1571 = vsel %vm343, %v1569, %v1549
        %v1573 = vsel %vm346, %v1571, %v1559
        %v1576 = vsel %vm339, %v1561, 0
        %1578 = vmatprep.subr.bf16.mxu0 0
        %1579 = vmatpush1.bf16.msra.mxu0 %v1565
        %1580 = vmatprep.subr.bf16.mxu0 0
        %1581 = vmatpush1.bf16.msra.mxu0 %v1573
        %1582 = vmatprep.subr.bf16.mxu0 0
        %1583 = vmatpush1.bf16.msra.mxu0 %v1576
        %1584 = vmatprep.subr.bf16.mxu0 0
        %1585 = vmatpush1.bf16.msra.mxu0 0
        %1586 = vmatprep.subr.bf16.mxu0 0
        %1587 = vmatpush1.bf16.msra.mxu0 0
        %1588 = vmatprep.subr.bf16.mxu0 0
        %1589 = vmatpush1.bf16.msra.mxu0 0
        %1590 = vmatprep.subr.bf16.mxu0 0
        %1591 = vmatpush1.bf16.msra.mxu0 0
        %1592 = vmatprep.subr.bf16.mxu0 0
        %1593 = vmatpush1.bf16.msra.mxu0 0
        %1594 = vmatprep.subr.bf16.mxu0 0
        %1595 = vmatpush1.bf16.msra.mxu0 0
        %1596 = vmatprep.subr.bf16.mxu0 0
        %1597 = vmatpush1.bf16.msra.mxu0 0
        %1598 = vmatprep.subr.bf16.mxu0 0
        %1599 = vmatpush1.bf16.msra.mxu0 0
        %1600 = vmatprep.subr.bf16.mxu0 0
        %1601 = vmatpush1.bf16.msra.mxu0 0
        %1602 = vmatprep.subr.bf16.mxu0 0
        %1603 = vmatpush1.bf16.msra.mxu0 0
        %1604 = vmatprep.subr.bf16.mxu0 0
        %1605 = vmatpush1.bf16.msra.mxu0 0
        %1606 = vmatprep.subr.bf16.mxu0 0
        %1607 = vmatpush1.bf16.msra.mxu0 0
        %1608 = vmatprep.subr.bf16.mxu0 0
        %1609 = vmatpush1.bf16.msra.mxu0 0
        %1610 = vmatprep.mubr.bf16.mxu0 0
        %1611 = vmatmul.mubr.bf16.gmra.mrb[0].mxu0 %v365
        %v1612 = vpop.f32.mrb[0].mxu0
        %v1613 = vadd.f32 %v361, %v1612
        %v1614 = vpop.f32.mrb[0].mxu0
        %v1615 = vpop.f32.mrb[0].mxu0
        %v1616 = vpop.f32.mrb[0].mxu0
        %1617 = vdwg.mxu0
        %v1619 = vcombine.high %v405, %v405
        %v1621 = vunpack.c.l.s4 1966171168
        %v1622 = vunpack.c.0.s8 %v1621
        %v1623 = vlaneseq
        %v1624 = vshrl.u32 %v1623, 7
        %v1625 = vsub.s32 %v1622, %v1624
        %v1626 = vrot.slane %v405, %v1625
        %v1628 = vunpack.c.l.s4 1966171168
        %v1629 = vunpack.c.0.s8 %v1628
        %v1630 = vlaneseq
        %v1631 = vshrl.u32 %v1630, 7
        %v1632 = vsub.s32 %v1629, %v1631
        %v1633 = vrot.slane %v1619, %v1632
        %v1634 = vcombine.high %v1626, %v1626
        %v1635 = vcombine.high %v1633, %v1633
        %v1637 = vunpack.c.l.s4 1966171168
        %v1638 = vunpack.c.0.s8 %v1637
        %v1639 = vlaneseq
        %v1640 = vshrl.u32 %v1639, 7
        %v1641 = vsub.s32 %v1638, %v1640
        %v1642 = vrot.slane %v1626, %v1641
        %v1644 = vunpack.c.l.s4 1966171168
        %v1645 = vunpack.c.0.s8 %v1644
        %v1646 = vlaneseq
        %v1647 = vshrl.u32 %v1646, 7
        %v1648 = vsub.s32 %v1645, %v1647
        %v1649 = vrot.slane %v1633, %v1648
        %v1651 = vunpack.c.l.s4 1966171168
        %v1652 = vunpack.c.0.s8 %v1651
        %v1653 = vlaneseq
        %v1654 = vshrl.u32 %v1653, 7
        %v1655 = vsub.s32 %v1652, %v1654
        %v1656 = vrot.slane %v1634, %v1655
        %v1658 = vunpack.c.l.s4 1966171168
        %v1659 = vunpack.c.0.s8 %v1658
        %v1660 = vlaneseq
        %v1661 = vshrl.u32 %v1660, 7
        %v1662 = vsub.s32 %v1659, %v1661
        %v1663 = vrot.slane %v1635, %v1662
        %v1664 = vcombine.high %v1642, %v1642
        %v1665 = vcombine.high %v1649, %v1649
        %v1666 = vcombine.high %v1656, %v1656
        %v1667 = vcombine.high %v1663, %v1663
        %v1677 = vcombine.high %v491, %v491
        %v1679 = vunpack.c.l.s4 1966171168
        %v1680 = vunpack.c.0.s8 %v1679
        %v1681 = vlaneseq
        %v1682 = vshrl.u32 %v1681, 7
        %v1683 = vsub.s32 %v1680, %v1682
        %v1684 = vrot.slane %v491, %v1683
        %v1686 = vunpack.c.l.s4 1966171168
        %v1687 = vunpack.c.0.s8 %v1686
        %v1688 = vlaneseq
        %v1689 = vshrl.u32 %v1688, 7
        %v1690 = vsub.s32 %v1687, %v1689
        %v1691 = vrot.slane %v1677, %v1690
        %v1692 = vcombine.high %v1684, %v1684
        %v1693 = vcombine.high %v1691, %v1691
        %v1695 = vunpack.c.l.s4 1966171168
        %v1696 = vunpack.c.0.s8 %v1695
        %v1697 = vlaneseq
        %v1698 = vshrl.u32 %v1697, 7
        %v1699 = vsub.s32 %v1696, %v1698
        %v1700 = vrot.slane %v1684, %v1699
        %v1702 = vunpack.c.l.s4 1966171168
        %v1703 = vunpack.c.0.s8 %v1702
        %v1704 = vlaneseq
        %v1705 = vshrl.u32 %v1704, 7
        %v1706 = vsub.s32 %v1703, %v1705
        %v1707 = vrot.slane %v1691, %v1706
        %v1709 = vunpack.c.l.s4 1966171168
        %v1710 = vunpack.c.0.s8 %v1709
        %v1711 = vlaneseq
        %v1712 = vshrl.u32 %v1711, 7
        %v1713 = vsub.s32 %v1710, %v1712
        %v1714 = vrot.slane %v1692, %v1713
        %v1716 = vunpack.c.l.s4 1966171168
        %v1717 = vunpack.c.0.s8 %v1716
        %v1718 = vlaneseq
        %v1719 = vshrl.u32 %v1718, 7
        %v1720 = vsub.s32 %v1717, %v1719
        %v1721 = vrot.slane %v1693, %v1720
        %v1722 = vcombine.high %v1700, %v1700
        %v1723 = vcombine.high %v1707, %v1707
        %v1724 = vcombine.high %v1714, %v1714
        %v1725 = vcombine.high %v1721, %v1721
        %v1727 = vcombine.high %v563, %v563
        %v1729 = vunpack.c.l.s4 1966171168
        %v1730 = vunpack.c.0.s8 %v1729
        %v1731 = vlaneseq
        %v1732 = vshrl.u32 %v1731, 7
        %v1733 = vsub.s32 %v1730, %v1732
        %v1734 = vrot.slane %v563, %v1733
        %v1736 = vunpack.c.l.s4 1966171168
        %v1737 = vunpack.c.0.s8 %v1736
        %v1738 = vlaneseq
        %v1739 = vshrl.u32 %v1738, 7
        %v1740 = vsub.s32 %v1737, %v1739
        %v1741 = vrot.slane %v1727, %v1740
        %v1742 = vcombine.high %v1734, %v1734
        %v1743 = vcombine.high %v1741, %v1741
        %v1745 = vunpack.c.l.s4 1966171168
        %v1746 = vunpack.c.0.s8 %v1745
        %v1747 = vlaneseq
        %v1748 = vshrl.u32 %v1747, 7
        %v1749 = vsub.s32 %v1746, %v1748
        %v1750 = vrot.slane %v1734, %v1749
        %v1752 = vunpack.c.l.s4 1966171168
        %v1753 = vunpack.c.0.s8 %v1752
        %v1754 = vlaneseq
        %v1755 = vshrl.u32 %v1754, 7
        %v1756 = vsub.s32 %v1753, %v1755
        %v1757 = vrot.slane %v1741, %v1756
        %v1759 = vunpack.c.l.s4 1966171168
        %v1760 = vunpack.c.0.s8 %v1759
        %v1761 = vlaneseq
        %v1762 = vshrl.u32 %v1761, 7
        %v1763 = vsub.s32 %v1760, %v1762
        %v1764 = vrot.slane %v1742, %v1763
        %v1766 = vunpack.c.l.s4 1966171168
        %v1767 = vunpack.c.0.s8 %v1766
        %v1768 = vlaneseq
        %v1769 = vshrl.u32 %v1768, 7
        %v1770 = vsub.s32 %v1767, %v1769
        %v1771 = vrot.slane %v1743, %v1770
        %v1772 = vcombine.high %v1750, %v1750
        %v1773 = vcombine.high %v1757, %v1757
        %v1774 = vcombine.high %v1764, %v1764
        %v1775 = vcombine.high %v1771, %v1771
        %v1777 = vcombine.high %v639, %v639
        %v1779 = vunpack.c.l.s4 1966171168
        %v1780 = vunpack.c.0.s8 %v1779
        %v1781 = vlaneseq
        %v1782 = vshrl.u32 %v1781, 7
        %v1783 = vsub.s32 %v1780, %v1782
        %v1784 = vrot.slane %v639, %v1783
        %v1786 = vunpack.c.l.s4 1966171168
        %v1787 = vunpack.c.0.s8 %v1786
        %v1788 = vlaneseq
        %v1789 = vshrl.u32 %v1788, 7
        %v1790 = vsub.s32 %v1787, %v1789
        %v1791 = vrot.slane %v1777, %v1790
        %v1792 = vcombine.high %v1784, %v1784
        %v1793 = vcombine.high %v1791, %v1791
        %v1795 = vunpack.c.l.s4 1966171168
        %v1796 = vunpack.c.0.s8 %v1795
        %v1797 = vlaneseq
        %v1798 = vshrl.u32 %v1797, 7
        %v1799 = vsub.s32 %v1796, %v1798
        %v1800 = vrot.slane %v1784, %v1799
        %v1802 = vunpack.c.l.s4 1966171168
        %v1803 = vunpack.c.0.s8 %v1802
        %v1804 = vlaneseq
        %v1805 = vshrl.u32 %v1804, 7
        %v1806 = vsub.s32 %v1803, %v1805
        %v1807 = vrot.slane %v1791, %v1806
        %v1809 = vunpack.c.l.s4 1966171168
        %v1810 = vunpack.c.0.s8 %v1809
        %v1811 = vlaneseq
        %v1812 = vshrl.u32 %v1811, 7
        %v1813 = vsub.s32 %v1810, %v1812
        %v1814 = vrot.slane %v1792, %v1813
        %v1816 = vunpack.c.l.s4 1966171168
        %v1817 = vunpack.c.0.s8 %v1816
        %v1818 = vlaneseq
        %v1819 = vshrl.u32 %v1818, 7
        %v1820 = vsub.s32 %v1817, %v1819
        %v1821 = vrot.slane %v1793, %v1820
        %v1822 = vcombine.high %v1800, %v1800
        %v1823 = vcombine.high %v1807, %v1807
        %v1824 = vcombine.high %v1814, %v1814
        %v1825 = vcombine.high %v1821, %v1821
        %v1827 = vcombine.high %v714, %v714
        %v1829 = vunpack.c.l.s4 1966171168
        %v1830 = vunpack.c.0.s8 %v1829
        %v1831 = vlaneseq
        %v1832 = vshrl.u32 %v1831, 7
        %v1833 = vsub.s32 %v1830, %v1832
        %v1834 = vrot.slane %v714, %v1833
        %v1836 = vunpack.c.l.s4 1966171168
        %v1837 = vunpack.c.0.s8 %v1836
        %v1838 = vlaneseq
        %v1839 = vshrl.u32 %v1838, 7
        %v1840 = vsub.s32 %v1837, %v1839
        %v1841 = vrot.slane %v1827, %v1840
        %v1842 = vcombine.high %v1834, %v1834
        %v1843 = vcombine.high %v1841, %v1841
        %v1845 = vunpack.c.l.s4 1966171168
        %v1846 = vunpack.c.0.s8 %v1845
        %v1847 = vlaneseq
        %v1848 = vshrl.u32 %v1847, 7
        %v1849 = vsub.s32 %v1846, %v1848
        %v1850 = vrot.slane %v1834, %v1849
        %v1852 = vunpack.c.l.s4 1966171168
        %v1853 = vunpack.c.0.s8 %v1852
        %v1854 = vlaneseq
        %v1855 = vshrl.u32 %v1854, 7
        %v1856 = vsub.s32 %v1853, %v1855
        %v1857 = vrot.slane %v1841, %v1856
        %v1859 = vunpack.c.l.s4 1966171168
        %v1860 = vunpack.c.0.s8 %v1859
        %v1861 = vlaneseq
        %v1862 = vshrl.u32 %v1861, 7
        %v1863 = vsub.s32 %v1860, %v1862
        %v1864 = vrot.slane %v1842, %v1863
        %v1866 = vunpack.c.l.s4 1966171168
        %v1867 = vunpack.c.0.s8 %v1866
        %v1868 = vlaneseq
        %v1869 = vshrl.u32 %v1868, 7
        %v1870 = vsub.s32 %v1867, %v1869
        %v1871 = vrot.slane %v1843, %v1870
        %v1872 = vcombine.high %v1850, %v1850
        %v1873 = vcombine.high %v1857, %v1857
        %v1874 = vcombine.high %v1864, %v1864
        %v1875 = vcombine.high %v1871, %v1871
        %v1877 = vcombine.high %v786, %v786
        %v1879 = vunpack.c.l.s4 1966171168
        %v1880 = vunpack.c.0.s8 %v1879
        %v1881 = vlaneseq
        %v1882 = vshrl.u32 %v1881, 7
        %v1883 = vsub.s32 %v1880, %v1882
        %v1884 = vrot.slane %v786, %v1883
        %v1886 = vunpack.c.l.s4 1966171168
        %v1887 = vunpack.c.0.s8 %v1886
        %v1888 = vlaneseq
        %v1889 = vshrl.u32 %v1888, 7
        %v1890 = vsub.s32 %v1887, %v1889
        %v1891 = vrot.slane %v1877, %v1890
        %v1892 = vcombine.high %v1884, %v1884
        %v1893 = vcombine.high %v1891, %v1891
        %v1895 = vunpack.c.l.s4 1966171168
        %v1896 = vunpack.c.0.s8 %v1895
        %v1897 = vlaneseq
        %v1898 = vshrl.u32 %v1897, 7
        %v1899 = vsub.s32 %v1896, %v1898
        %v1900 = vrot.slane %v1884, %v1899
        %v1902 = vunpack.c.l.s4 1966171168
        %v1903 = vunpack.c.0.s8 %v1902
        %v1904 = vlaneseq
        %v1905 = vshrl.u32 %v1904, 7
        %v1906 = vsub.s32 %v1903, %v1905
        %v1907 = vrot.slane %v1891, %v1906
        %v1909 = vunpack.c.l.s4 1966171168
        %v1910 = vunpack.c.0.s8 %v1909
        %v1911 = vlaneseq
        %v1912 = vshrl.u32 %v1911, 7
        %v1913 = vsub.s32 %v1910, %v1912
        %v1914 = vrot.slane %v1892, %v1913
        %v1916 = vunpack.c.l.s4 1966171168
        %v1917 = vunpack.c.0.s8 %v1916
        %v1918 = vlaneseq
        %v1919 = vshrl.u32 %v1918, 7
        %v1920 = vsub.s32 %v1917, %v1919
        %v1921 = vrot.slane %v1893, %v1920
        %v1922 = vcombine.high %v1900, %v1900
        %v1923 = vcombine.high %v1907, %v1907
        %v1924 = vcombine.high %v1914, %v1914
        %v1925 = vcombine.high %v1921, %v1921
        %v1927 = vcombine.high %v892, %v892
        %v1929 = vunpack.c.l.s4 1966171168
        %v1930 = vunpack.c.0.s8 %v1929
        %v1931 = vlaneseq
        %v1932 = vshrl.u32 %v1931, 7
        %v1933 = vsub.s32 %v1930, %v1932
        %v1934 = vrot.slane %v892, %v1933
        %v1936 = vunpack.c.l.s4 1966171168
        %v1937 = vunpack.c.0.s8 %v1936
        %v1938 = vlaneseq
        %v1939 = vshrl.u32 %v1938, 7
        %v1940 = vsub.s32 %v1937, %v1939
        %v1941 = vrot.slane %v1927, %v1940
        %v1942 = vcombine.high %v1934, %v1934
        %v1943 = vcombine.high %v1941, %v1941
        %v1945 = vunpack.c.l.s4 1966171168
        %v1946 = vunpack.c.0.s8 %v1945
        %v1947 = vlaneseq
        %v1948 = vshrl.u32 %v1947, 7
        %v1949 = vsub.s32 %v1946, %v1948
        %v1950 = vrot.slane %v1934, %v1949
        %v1952 = vunpack.c.l.s4 1966171168
        %v1953 = vunpack.c.0.s8 %v1952
        %v1954 = vlaneseq
        %v1955 = vshrl.u32 %v1954, 7
        %v1956 = vsub.s32 %v1953, %v1955
        %v1957 = vrot.slane %v1941, %v1956
        %v1959 = vunpack.c.l.s4 1966171168
        %v1960 = vunpack.c.0.s8 %v1959
        %v1961 = vlaneseq
        %v1962 = vshrl.u32 %v1961, 7
        %v1963 = vsub.s32 %v1960, %v1962
        %v1964 = vrot.slane %v1942, %v1963
        %v1966 = vunpack.c.l.s4 1966171168
        %v1967 = vunpack.c.0.s8 %v1966
        %v1968 = vlaneseq
        %v1969 = vshrl.u32 %v1968, 7
        %v1970 = vsub.s32 %v1967, %v1969
        %v1971 = vrot.slane %v1943, %v1970
        %v1972 = vcombine.high %v1950, %v1950
        %v1973 = vcombine.high %v1957, %v1957
        %v1974 = vcombine.high %v1964, %v1964
        %v1975 = vcombine.high %v1971, %v1971
        %v1977 = vcombine.high %v971, %v971
        %v1979 = vunpack.c.l.s4 1966171168
        %v1980 = vunpack.c.0.s8 %v1979
        %v1981 = vlaneseq
        %v1982 = vshrl.u32 %v1981, 7
        %v1983 = vsub.s32 %v1980, %v1982
        %v1984 = vrot.slane %v971, %v1983
        %v1986 = vunpack.c.l.s4 1966171168
        %v1987 = vunpack.c.0.s8 %v1986
        %v1988 = vlaneseq
        %v1989 = vshrl.u32 %v1988, 7
        %v1990 = vsub.s32 %v1987, %v1989
        %v1991 = vrot.slane %v1977, %v1990
        %v1992 = vcombine.high %v1984, %v1984
        %v1993 = vcombine.high %v1991, %v1991
        %v1995 = vunpack.c.l.s4 1966171168
        %v1996 = vunpack.c.0.s8 %v1995
        %v1997 = vlaneseq
        %v1998 = vshrl.u32 %v1997, 7
        %v1999 = vsub.s32 %v1996, %v1998
        %v2000 = vrot.slane %v1984, %v1999
        %v2002 = vunpack.c.l.s4 1966171168
        %v2003 = vunpack.c.0.s8 %v2002
        %v2004 = vlaneseq
        %v2005 = vshrl.u32 %v2004, 7
        %v2006 = vsub.s32 %v2003, %v2005
        %v2007 = vrot.slane %v1991, %v2006
        %v2009 = vunpack.c.l.s4 1966171168
        %v2010 = vunpack.c.0.s8 %v2009
        %v2011 = vlaneseq
        %v2012 = vshrl.u32 %v2011, 7
        %v2013 = vsub.s32 %v2010, %v2012
        %v2014 = vrot.slane %v1992, %v2013
        %v2016 = vunpack.c.l.s4 1966171168
        %v2017 = vunpack.c.0.s8 %v2016
        %v2018 = vlaneseq
        %v2019 = vshrl.u32 %v2018, 7
        %v2020 = vsub.s32 %v2017, %v2019
        %v2021 = vrot.slane %v1993, %v2020
        %v2022 = vcombine.high %v2000, %v2000
        %v2023 = vcombine.high %v2007, %v2007
        %v2024 = vcombine.high %v2014, %v2014
        %v2025 = vcombine.high %v2021, %v2021
        %v2027 = vcombine.high %v1054, %v1054
        %v2029 = vunpack.c.l.s4 1966171168
        %v2030 = vunpack.c.0.s8 %v2029
        %v2031 = vlaneseq
        %v2032 = vshrl.u32 %v2031, 7
        %v2033 = vsub.s32 %v2030, %v2032
        %v2034 = vrot.slane %v1054, %v2033
        %v2036 = vunpack.c.l.s4 1966171168
        %v2037 = vunpack.c.0.s8 %v2036
        %v2038 = vlaneseq
        %v2039 = vshrl.u32 %v2038, 7
        %v2040 = vsub.s32 %v2037, %v2039
        %v2041 = vrot.slane %v2027, %v2040
        %v2042 = vcombine.high %v2034, %v2034
        %v2043 = vcombine.high %v2041, %v2041
        %v2045 = vunpack.c.l.s4 1966171168
        %v2046 = vunpack.c.0.s8 %v2045
        %v2047 = vlaneseq
        %v2048 = vshrl.u32 %v2047, 7
        %v2049 = vsub.s32 %v2046, %v2048
        %v2050 = vrot.slane %v2034, %v2049
        %v2052 = vunpack.c.l.s4 1966171168
        %v2053 = vunpack.c.0.s8 %v2052
        %v2054 = vlaneseq
        %v2055 = vshrl.u32 %v2054, 7
        %v2056 = vsub.s32 %v2053, %v2055
        %v2057 = vrot.slane %v2041, %v2056
        %v2059 = vunpack.c.l.s4 1966171168
        %v2060 = vunpack.c.0.s8 %v2059
        %v2061 = vlaneseq
        %v2062 = vshrl.u32 %v2061, 7
        %v2063 = vsub.s32 %v2060, %v2062
        %v2064 = vrot.slane %v2042, %v2063
        %v2066 = vunpack.c.l.s4 1966171168
        %v2067 = vunpack.c.0.s8 %v2066
        %v2068 = vlaneseq
        %v2069 = vshrl.u32 %v2068, 7
        %v2070 = vsub.s32 %v2067, %v2069
        %v2071 = vrot.slane %v2043, %v2070
        %v2072 = vcombine.high %v2050, %v2050
        %v2073 = vcombine.high %v2057, %v2057
        %v2074 = vcombine.high %v2064, %v2064
        %v2075 = vcombine.high %v2071, %v2071
        %v2085 = vcombine.high %v1133, %v1133
        %v2087 = vunpack.c.l.s4 1966171168
        %v2088 = vunpack.c.0.s8 %v2087
        %v2089 = vlaneseq
        %v2090 = vshrl.u32 %v2089, 7
        %v2091 = vsub.s32 %v2088, %v2090
        %v2092 = vrot.slane %v1133, %v2091
        %v2094 = vunpack.c.l.s4 1966171168
        %v2095 = vunpack.c.0.s8 %v2094
        %v2096 = vlaneseq
        %v2097 = vshrl.u32 %v2096, 7
        %v2098 = vsub.s32 %v2095, %v2097
        %v2099 = vrot.slane %v2085, %v2098
        %v2100 = vcombine.high %v2092, %v2092
        %v2101 = vcombine.high %v2099, %v2099
        %v2103 = vunpack.c.l.s4 1966171168
        %v2104 = vunpack.c.0.s8 %v2103
        %v2105 = vlaneseq
        %v2106 = vshrl.u32 %v2105, 7
        %v2107 = vsub.s32 %v2104, %v2106
        %v2108 = vrot.slane %v2092, %v2107
        %v2110 = vunpack.c.l.s4 1966171168
        %v2111 = vunpack.c.0.s8 %v2110
        %v2112 = vlaneseq
        %v2113 = vshrl.u32 %v2112, 7
        %v2114 = vsub.s32 %v2111, %v2113
        %v2115 = vrot.slane %v2099, %v2114
        %v2117 = vunpack.c.l.s4 1966171168
        %v2118 = vunpack.c.0.s8 %v2117
        %v2119 = vlaneseq
        %v2120 = vshrl.u32 %v2119, 7
        %v2121 = vsub.s32 %v2118, %v2120
        %v2122 = vrot.slane %v2100, %v2121
        %v2124 = vunpack.c.l.s4 1966171168
        %v2125 = vunpack.c.0.s8 %v2124
        %v2126 = vlaneseq
        %v2127 = vshrl.u32 %v2126, 7
        %v2128 = vsub.s32 %v2125, %v2127
        %v2129 = vrot.slane %v2101, %v2128
        %v2130 = vcombine.high %v2108, %v2108
        %v2131 = vcombine.high %v2115, %v2115
        %v2132 = vcombine.high %v2122, %v2122
        %v2133 = vcombine.high %v2129, %v2129
        %v2135 = vcombine.high %v1205, %v1205
        %v2137 = vunpack.c.l.s4 1966171168
        %v2138 = vunpack.c.0.s8 %v2137
        %v2139 = vlaneseq
        %v2140 = vshrl.u32 %v2139, 7
        %v2141 = vsub.s32 %v2138, %v2140
        %v2142 = vrot.slane %v1205, %v2141
        %v2144 = vunpack.c.l.s4 1966171168
        %v2145 = vunpack.c.0.s8 %v2144
        %v2146 = vlaneseq
        %v2147 = vshrl.u32 %v2146, 7
        %v2148 = vsub.s32 %v2145, %v2147
        %v2149 = vrot.slane %v2135, %v2148
        %v2150 = vcombine.high %v2142, %v2142
        %v2151 = vcombine.high %v2149, %v2149
        %v2153 = vunpack.c.l.s4 1966171168
        %v2154 = vunpack.c.0.s8 %v2153
        %v2155 = vlaneseq
        %v2156 = vshrl.u32 %v2155, 7
        %v2157 = vsub.s32 %v2154, %v2156
        %v2158 = vrot.slane %v2142, %v2157
        %v2160 = vunpack.c.l.s4 1966171168
        %v2161 = vunpack.c.0.s8 %v2160
        %v2162 = vlaneseq
        %v2163 = vshrl.u32 %v2162, 7
        %v2164 = vsub.s32 %v2161, %v2163
        %v2165 = vrot.slane %v2149, %v2164
        %v2167 = vunpack.c.l.s4 1966171168
        %v2168 = vunpack.c.0.s8 %v2167
        %v2169 = vlaneseq
        %v2170 = vshrl.u32 %v2169, 7
        %v2171 = vsub.s32 %v2168, %v2170
        %v2172 = vrot.slane %v2150, %v2171
        %v2174 = vunpack.c.l.s4 1966171168
        %v2175 = vunpack.c.0.s8 %v2174
        %v2176 = vlaneseq
        %v2177 = vshrl.u32 %v2176, 7
        %v2178 = vsub.s32 %v2175, %v2177
        %v2179 = vrot.slane %v2151, %v2178
        %v2180 = vcombine.high %v2158, %v2158
        %v2181 = vcombine.high %v2165, %v2165
        %v2182 = vcombine.high %v2172, %v2172
        %v2183 = vcombine.high %v2179, %v2179
        %v2185 = vcombine.high %v1281, %v1281
        %v2187 = vunpack.c.l.s4 1966171168
        %v2188 = vunpack.c.0.s8 %v2187
        %v2189 = vlaneseq
        %v2190 = vshrl.u32 %v2189, 7
        %v2191 = vsub.s32 %v2188, %v2190
        %v2192 = vrot.slane %v1281, %v2191
        %v2194 = vunpack.c.l.s4 1966171168
        %v2195 = vunpack.c.0.s8 %v2194
        %v2196 = vlaneseq
        %v2197 = vshrl.u32 %v2196, 7
        %v2198 = vsub.s32 %v2195, %v2197
        %v2199 = vrot.slane %v2185, %v2198
        %v2200 = vcombine.high %v2192, %v2192
        %v2201 = vcombine.high %v2199, %v2199
        %v2203 = vunpack.c.l.s4 1966171168
        %v2204 = vunpack.c.0.s8 %v2203
        %v2205 = vlaneseq
        %v2206 = vshrl.u32 %v2205, 7
        %v2207 = vsub.s32 %v2204, %v2206
        %v2208 = vrot.slane %v2192, %v2207
        %v2210 = vunpack.c.l.s4 1966171168
        %v2211 = vunpack.c.0.s8 %v2210
        %v2212 = vlaneseq
        %v2213 = vshrl.u32 %v2212, 7
        %v2214 = vsub.s32 %v2211, %v2213
        %v2215 = vrot.slane %v2199, %v2214
        %v2217 = vunpack.c.l.s4 1966171168
        %v2218 = vunpack.c.0.s8 %v2217
        %v2219 = vlaneseq
        %v2220 = vshrl.u32 %v2219, 7
        %v2221 = vsub.s32 %v2218, %v2220
        %v2222 = vrot.slane %v2200, %v2221
        %v2224 = vunpack.c.l.s4 1966171168
        %v2225 = vunpack.c.0.s8 %v2224
        %v2226 = vlaneseq
        %v2227 = vshrl.u32 %v2226, 7
        %v2228 = vsub.s32 %v2225, %v2227
        %v2229 = vrot.slane %v2201, %v2228
        %v2230 = vcombine.high %v2208, %v2208
        %v2231 = vcombine.high %v2215, %v2215
        %v2232 = vcombine.high %v2222, %v2222
        %v2233 = vcombine.high %v2229, %v2229
        %v2235 = vcombine.high %v1356, %v1356
        %v2237 = vunpack.c.l.s4 1966171168
        %v2238 = vunpack.c.0.s8 %v2237
        %v2239 = vlaneseq
        %v2240 = vshrl.u32 %v2239, 7
        %v2241 = vsub.s32 %v2238, %v2240
        %v2242 = vrot.slane %v1356, %v2241
        %v2244 = vunpack.c.l.s4 1966171168
        %v2245 = vunpack.c.0.s8 %v2244
        %v2246 = vlaneseq
        %v2247 = vshrl.u32 %v2246, 7
        %v2248 = vsub.s32 %v2245, %v2247
        %v2249 = vrot.slane %v2235, %v2248
        %v2250 = vcombine.high %v2242, %v2242
        %v2251 = vcombine.high %v2249, %v2249
        %v2253 = vunpack.c.l.s4 1966171168
        %v2254 = vunpack.c.0.s8 %v2253
        %v2255 = vlaneseq
        %v2256 = vshrl.u32 %v2255, 7
        %v2257 = vsub.s32 %v2254, %v2256
        %v2258 = vrot.slane %v2242, %v2257
        %v2260 = vunpack.c.l.s4 1966171168
        %v2261 = vunpack.c.0.s8 %v2260
        %v2262 = vlaneseq
        %v2263 = vshrl.u32 %v2262, 7
        %v2264 = vsub.s32 %v2261, %v2263
        %v2265 = vrot.slane %v2249, %v2264
        %v2267 = vunpack.c.l.s4 1966171168
        %v2268 = vunpack.c.0.s8 %v2267
        %v2269 = vlaneseq
        %v2270 = vshrl.u32 %v2269, 7
        %v2271 = vsub.s32 %v2268, %v2270
        %v2272 = vrot.slane %v2250, %v2271
        %v2274 = vunpack.c.l.s4 1966171168
        %v2275 = vunpack.c.0.s8 %v2274
        %v2276 = vlaneseq
        %v2277 = vshrl.u32 %v2276, 7
        %v2278 = vsub.s32 %v2275, %v2277
        %v2279 = vrot.slane %v2251, %v2278
        %v2280 = vcombine.high %v2258, %v2258
        %v2281 = vcombine.high %v2265, %v2265
        %v2282 = vcombine.high %v2272, %v2272
        %v2283 = vcombine.high %v2279, %v2279
        %v2285 = vcombine.high %v1428, %v1428
        %v2287 = vunpack.c.l.s4 1966171168
        %v2288 = vunpack.c.0.s8 %v2287
        %v2289 = vlaneseq
        %v2290 = vshrl.u32 %v2289, 7
        %v2291 = vsub.s32 %v2288, %v2290
        %v2292 = vrot.slane %v1428, %v2291
        %v2294 = vunpack.c.l.s4 1966171168
        %v2295 = vunpack.c.0.s8 %v2294
        %v2296 = vlaneseq
        %v2297 = vshrl.u32 %v2296, 7
        %v2298 = vsub.s32 %v2295, %v2297
        %v2299 = vrot.slane %v2285, %v2298
        %v2300 = vcombine.high %v2292, %v2292
        %v2301 = vcombine.high %v2299, %v2299
        %v2303 = vunpack.c.l.s4 1966171168
        %v2304 = vunpack.c.0.s8 %v2303
        %v2305 = vlaneseq
        %v2306 = vshrl.u32 %v2305, 7
        %v2307 = vsub.s32 %v2304, %v2306
        %v2308 = vrot.slane %v2292, %v2307
        %v2310 = vunpack.c.l.s4 1966171168
        %v2311 = vunpack.c.0.s8 %v2310
        %v2312 = vlaneseq
        %v2313 = vshrl.u32 %v2312, 7
        %v2314 = vsub.s32 %v2311, %v2313
        %v2315 = vrot.slane %v2299, %v2314
        %v2317 = vunpack.c.l.s4 1966171168
        %v2318 = vunpack.c.0.s8 %v2317
        %v2319 = vlaneseq
        %v2320 = vshrl.u32 %v2319, 7
        %v2321 = vsub.s32 %v2318, %v2320
        %v2322 = vrot.slane %v2300, %v2321
        %v2324 = vunpack.c.l.s4 1966171168
        %v2325 = vunpack.c.0.s8 %v2324
        %v2326 = vlaneseq
        %v2327 = vshrl.u32 %v2326, 7
        %v2328 = vsub.s32 %v2325, %v2327
        %v2329 = vrot.slane %v2301, %v2328
        %v2330 = vcombine.high %v2308, %v2308
        %v2331 = vcombine.high %v2315, %v2315
        %v2332 = vcombine.high %v2322, %v2322
        %v2333 = vcombine.high %v2329, %v2329
        %v2335 = vcombine.high %v1534, %v1534
        %v2337 = vunpack.c.l.s4 1966171168
        %v2338 = vunpack.c.0.s8 %v2337
        %v2339 = vlaneseq
        %v2340 = vshrl.u32 %v2339, 7
        %v2341 = vsub.s32 %v2338, %v2340
        %v2342 = vrot.slane %v1534, %v2341
        %v2344 = vunpack.c.l.s4 1966171168
        %v2345 = vunpack.c.0.s8 %v2344
        %v2346 = vlaneseq
        %v2347 = vshrl.u32 %v2346, 7
        %v2348 = vsub.s32 %v2345, %v2347
        %v2349 = vrot.slane %v2335, %v2348
        %v2350 = vcombine.high %v2342, %v2342
        %v2351 = vcombine.high %v2349, %v2349
        %v2353 = vunpack.c.l.s4 1966171168
        %v2354 = vunpack.c.0.s8 %v2353
        %v2355 = vlaneseq
        %v2356 = vshrl.u32 %v2355, 7
        %v2357 = vsub.s32 %v2354, %v2356
        %v2358 = vrot.slane %v2342, %v2357
        %v2360 = vunpack.c.l.s4 1966171168
        %v2361 = vunpack.c.0.s8 %v2360
        %v2362 = vlaneseq
        %v2363 = vshrl.u32 %v2362, 7
        %v2364 = vsub.s32 %v2361, %v2363
        %v2365 = vrot.slane %v2349, %v2364
        %v2367 = vunpack.c.l.s4 1966171168
        %v2368 = vunpack.c.0.s8 %v2367
        %v2369 = vlaneseq
        %v2370 = vshrl.u32 %v2369, 7
        %v2371 = vsub.s32 %v2368, %v2370
        %v2372 = vrot.slane %v2350, %v2371
        %v2374 = vunpack.c.l.s4 1966171168
        %v2375 = vunpack.c.0.s8 %v2374
        %v2376 = vlaneseq
        %v2377 = vshrl.u32 %v2376, 7
        %v2378 = vsub.s32 %v2375, %v2377
        %v2379 = vrot.slane %v2351, %v2378
        %v2380 = vcombine.high %v2358, %v2358
        %v2381 = vcombine.high %v2365, %v2365
        %v2382 = vcombine.high %v2372, %v2372
        %v2383 = vcombine.high %v2379, %v2379
        %v2385 = vcombine.high %v1613, %v1613
        %v2387 = vunpack.c.l.s4 1966171168
        %v2388 = vunpack.c.0.s8 %v2387
        %v2389 = vlaneseq
        %v2390 = vshrl.u32 %v2389, 7
        %v2391 = vsub.s32 %v2388, %v2390
        %v2392 = vrot.slane %v1613, %v2391
        %v2394 = vunpack.c.l.s4 1966171168
        %v2395 = vunpack.c.0.s8 %v2394
        %v2396 = vlaneseq
        %v2397 = vshrl.u32 %v2396, 7
        %v2398 = vsub.s32 %v2395, %v2397
        %v2399 = vrot.slane %v2385, %v2398
        %v2400 = vcombine.high %v2392, %v2392
        %v2401 = vcombine.high %v2399, %v2399
        %v2403 = vunpack.c.l.s4 1966171168
        %v2404 = vunpack.c.0.s8 %v2403
        %v2405 = vlaneseq
        %v2406 = vshrl.u32 %v2405, 7
        %v2407 = vsub.s32 %v2404, %v2406
        %v2408 = vrot.slane %v2392, %v2407
        %v2410 = vunpack.c.l.s4 1966171168
        %v2411 = vunpack.c.0.s8 %v2410
        %v2412 = vlaneseq
        %v2413 = vshrl.u32 %v2412, 7
        %v2414 = vsub.s32 %v2411, %v2413
        %v2415 = vrot.slane %v2399, %v2414
        %v2417 = vunpack.c.l.s4 1966171168
        %v2418 = vunpack.c.0.s8 %v2417
        %v2419 = vlaneseq
        %v2420 = vshrl.u32 %v2419, 7
        %v2421 = vsub.s32 %v2418, %v2420
        %v2422 = vrot.slane %v2400, %v2421
        %v2424 = vunpack.c.l.s4 1966171168
        %v2425 = vunpack.c.0.s8 %v2424
        %v2426 = vlaneseq
        %v2427 = vshrl.u32 %v2426, 7
        %v2428 = vsub.s32 %v2425, %v2427
        %v2429 = vrot.slane %v2401, %v2428
        %v2430 = vcombine.high %v2408, %v2408
        %v2431 = vcombine.high %v2415, %v2415
        %v2432 = vcombine.high %v2422, %v2422
        %v2433 = vcombine.high %v2429, %v2429
        %v2434 = vlaneseq
        %v2435 = vshrl.u32 %v2434, 7
        %v2436 = vsub.s32 0, %v2435
        %v2437 = vrot.slane %v1700, %v2436
        %v2438 = vlaneseq
        %v2439 = vshrl.u32 %v2438, 7
        %v2440 = vsub.s32 0, %v2439
        %v2441 = vrot.slane %v1714, %v2440
        %v2442 = vlaneseq
        %v2443 = vshrl.u32 %v2442, 7
        %v2444 = vsub.s32 0, %v2443
        %v2445 = vrot.slane %v1722, %v2444
        %v2446 = vlaneseq
        %v2447 = vshrl.u32 %v2446, 7
        %v2448 = vsub.s32 0, %v2447
        %v2449 = vrot.slane %v1724, %v2448
        %v2450 = vlaneseq
        %v2451 = vshrl.u32 %v2450, 7
        %v2452 = vsub.s32 0, %v2451
        %v2453 = vrot.slane %v1707, %v2452
        %v2454 = vlaneseq
        %v2455 = vshrl.u32 %v2454, 7
        %v2456 = vsub.s32 0, %v2455
        %v2457 = vrot.slane %v1721, %v2456
        %v2458 = vlaneseq
        %v2459 = vshrl.u32 %v2458, 7
        %v2460 = vsub.s32 0, %v2459
        %v2461 = vrot.slane %v1723, %v2460
        %v2462 = vlaneseq
        %v2463 = vshrl.u32 %v2462, 7
        %v2464 = vsub.s32 0, %v2463
        %v2465 = vrot.slane %v1725, %v2464
        %v2474 = vlaneseq
        %v2475 = vshrl.u32 %v2474, 7
        %v2476 = vsub.s32 0, %v2475
        %v2477 = vrot.slane %v1750, %v2476
        %v2478 = vlaneseq
        %v2479 = vshrl.u32 %v2478, 7
        %v2480 = vsub.s32 0, %v2479
        %v2481 = vrot.slane %v1764, %v2480
        %v2482 = vlaneseq
        %v2483 = vshrl.u32 %v2482, 7
        %v2484 = vsub.s32 0, %v2483
        %v2485 = vrot.slane %v1772, %v2484
        %v2486 = vlaneseq
        %v2487 = vshrl.u32 %v2486, 7
        %v2488 = vsub.s32 0, %v2487
        %v2489 = vrot.slane %v1774, %v2488
        %v2490 = vlaneseq
        %v2491 = vshrl.u32 %v2490, 7
        %v2492 = vsub.s32 0, %v2491
        %v2493 = vrot.slane %v1757, %v2492
        %v2494 = vlaneseq
        %v2495 = vshrl.u32 %v2494, 7
        %v2496 = vsub.s32 0, %v2495
        %v2497 = vrot.slane %v1771, %v2496
        %v2498 = vlaneseq
        %v2499 = vshrl.u32 %v2498, 7
        %v2500 = vsub.s32 0, %v2499
        %v2501 = vrot.slane %v1773, %v2500
        %v2502 = vlaneseq
        %v2503 = vshrl.u32 %v2502, 7
        %v2504 = vsub.s32 0, %v2503
        %v2505 = vrot.slane %v1775, %v2504
        %v2514 = vlaneseq
        %v2515 = vshrl.u32 %v2514, 7
        %v2516 = vsub.s32 0, %v2515
        %v2517 = vrot.slane %v1800, %v2516
        %v2518 = vlaneseq
        %v2519 = vshrl.u32 %v2518, 7
        %v2520 = vsub.s32 0, %v2519
        %v2521 = vrot.slane %v1814, %v2520
        %v2522 = vlaneseq
        %v2523 = vshrl.u32 %v2522, 7
        %v2524 = vsub.s32 0, %v2523
        %v2525 = vrot.slane %v1822, %v2524
        %v2526 = vlaneseq
        %v2527 = vshrl.u32 %v2526, 7
        %v2528 = vsub.s32 0, %v2527
        %v2529 = vrot.slane %v1824, %v2528
        %v2530 = vlaneseq
        %v2531 = vshrl.u32 %v2530, 7
        %v2532 = vsub.s32 0, %v2531
        %v2533 = vrot.slane %v1807, %v2532
        %v2534 = vlaneseq
        %v2535 = vshrl.u32 %v2534, 7
        %v2536 = vsub.s32 0, %v2535
        %v2537 = vrot.slane %v1821, %v2536
        %v2538 = vlaneseq
        %v2539 = vshrl.u32 %v2538, 7
        %v2540 = vsub.s32 0, %v2539
        %v2541 = vrot.slane %v1823, %v2540
        %v2542 = vlaneseq
        %v2543 = vshrl.u32 %v2542, 7
        %v2544 = vsub.s32 0, %v2543
        %v2545 = vrot.slane %v1825, %v2544
        %v2554 = vlaneseq
        %v2555 = vshrl.u32 %v2554, 7
        %v2556 = vsub.s32 0, %v2555
        %v2557 = vrot.slane %v1850, %v2556
        %v2558 = vlaneseq
        %v2559 = vshrl.u32 %v2558, 7
        %v2560 = vsub.s32 0, %v2559
        %v2561 = vrot.slane %v1864, %v2560
        %v2562 = vlaneseq
        %v2563 = vshrl.u32 %v2562, 7
        %v2564 = vsub.s32 0, %v2563
        %v2565 = vrot.slane %v1872, %v2564
        %v2566 = vlaneseq
        %v2567 = vshrl.u32 %v2566, 7
        %v2568 = vsub.s32 0, %v2567
        %v2569 = vrot.slane %v1874, %v2568
        %v2570 = vlaneseq
        %v2571 = vshrl.u32 %v2570, 7
        %v2572 = vsub.s32 0, %v2571
        %v2573 = vrot.slane %v1857, %v2572
        %v2574 = vlaneseq
        %v2575 = vshrl.u32 %v2574, 7
        %v2576 = vsub.s32 0, %v2575
        %v2577 = vrot.slane %v1871, %v2576
        %v2578 = vlaneseq
        %v2579 = vshrl.u32 %v2578, 7
        %v2580 = vsub.s32 0, %v2579
        %v2581 = vrot.slane %v1873, %v2580
        %v2582 = vlaneseq
        %v2583 = vshrl.u32 %v2582, 7
        %v2584 = vsub.s32 0, %v2583
        %v2585 = vrot.slane %v1875, %v2584
        %v2594 = vlaneseq
        %v2595 = vshrl.u32 %v2594, 7
        %v2596 = vsub.s32 0, %v2595
        %v2597 = vrot.slane %v1900, %v2596
        %v2598 = vlaneseq
        %v2599 = vshrl.u32 %v2598, 7
        %v2600 = vsub.s32 0, %v2599
        %v2601 = vrot.slane %v1914, %v2600
        %v2602 = vlaneseq
        %v2603 = vshrl.u32 %v2602, 7
        %v2604 = vsub.s32 0, %v2603
        %v2605 = vrot.slane %v1922, %v2604
        %v2606 = vlaneseq
        %v2607 = vshrl.u32 %v2606, 7
        %v2608 = vsub.s32 0, %v2607
        %v2609 = vrot.slane %v1924, %v2608
        %v2610 = vlaneseq
        %v2611 = vshrl.u32 %v2610, 7
        %v2612 = vsub.s32 0, %v2611
        %v2613 = vrot.slane %v1907, %v2612
        %v2614 = vlaneseq
        %v2615 = vshrl.u32 %v2614, 7
        %v2616 = vsub.s32 0, %v2615
        %v2617 = vrot.slane %v1921, %v2616
        %v2618 = vlaneseq
        %v2619 = vshrl.u32 %v2618, 7
        %v2620 = vsub.s32 0, %v2619
        %v2621 = vrot.slane %v1923, %v2620
        %v2622 = vlaneseq
        %v2623 = vshrl.u32 %v2622, 7
        %v2624 = vsub.s32 0, %v2623
        %v2625 = vrot.slane %v1925, %v2624
        %v2634 = vlaneseq
        %v2635 = vshrl.u32 %v2634, 7
        %v2636 = vsub.s32 0, %v2635
        %v2637 = vrot.slane %v1950, %v2636
        %v2638 = vlaneseq
        %v2639 = vshrl.u32 %v2638, 7
        %v2640 = vsub.s32 0, %v2639
        %v2641 = vrot.slane %v1964, %v2640
        %v2642 = vlaneseq
        %v2643 = vshrl.u32 %v2642, 7
        %v2644 = vsub.s32 0, %v2643
        %v2645 = vrot.slane %v1972, %v2644
        %v2646 = vlaneseq
        %v2647 = vshrl.u32 %v2646, 7
        %v2648 = vsub.s32 0, %v2647
        %v2649 = vrot.slane %v1974, %v2648
        %v2650 = vlaneseq
        %v2651 = vshrl.u32 %v2650, 7
        %v2652 = vsub.s32 0, %v2651
        %v2653 = vrot.slane %v1957, %v2652
        %v2654 = vlaneseq
        %v2655 = vshrl.u32 %v2654, 7
        %v2656 = vsub.s32 0, %v2655
        %v2657 = vrot.slane %v1971, %v2656
        %v2658 = vlaneseq
        %v2659 = vshrl.u32 %v2658, 7
        %v2660 = vsub.s32 0, %v2659
        %v2661 = vrot.slane %v1973, %v2660
        %v2662 = vlaneseq
        %v2663 = vshrl.u32 %v2662, 7
        %v2664 = vsub.s32 0, %v2663
        %v2665 = vrot.slane %v1975, %v2664
        %v2674 = vlaneseq
        %v2675 = vshrl.u32 %v2674, 7
        %v2676 = vsub.s32 0, %v2675
        %v2677 = vrot.slane %v2000, %v2676
        %v2678 = vlaneseq
        %v2679 = vshrl.u32 %v2678, 7
        %v2680 = vsub.s32 0, %v2679
        %v2681 = vrot.slane %v2014, %v2680
        %v2682 = vlaneseq
        %v2683 = vshrl.u32 %v2682, 7
        %v2684 = vsub.s32 0, %v2683
        %v2685 = vrot.slane %v2022, %v2684
        %v2686 = vlaneseq
        %v2687 = vshrl.u32 %v2686, 7
        %v2688 = vsub.s32 0, %v2687
        %v2689 = vrot.slane %v2024, %v2688
        %v2690 = vlaneseq
        %v2691 = vshrl.u32 %v2690, 7
        %v2692 = vsub.s32 0, %v2691
        %v2693 = vrot.slane %v2007, %v2692
        %v2694 = vlaneseq
        %v2695 = vshrl.u32 %v2694, 7
        %v2696 = vsub.s32 0, %v2695
        %v2697 = vrot.slane %v2021, %v2696
        %v2698 = vlaneseq
        %v2699 = vshrl.u32 %v2698, 7
        %v2700 = vsub.s32 0, %v2699
        %v2701 = vrot.slane %v2023, %v2700
        %v2702 = vlaneseq
        %v2703 = vshrl.u32 %v2702, 7
        %v2704 = vsub.s32 0, %v2703
        %v2705 = vrot.slane %v2025, %v2704
        %v2714 = vlaneseq
        %v2715 = vshrl.u32 %v2714, 7
        %v2716 = vsub.s32 0, %v2715
        %v2717 = vrot.slane %v2108, %v2716
        %v2718 = vlaneseq
        %v2719 = vshrl.u32 %v2718, 7
        %v2720 = vsub.s32 0, %v2719
        %v2721 = vrot.slane %v2122, %v2720
        %v2722 = vlaneseq
        %v2723 = vshrl.u32 %v2722, 7
        %v2724 = vsub.s32 0, %v2723
        %v2725 = vrot.slane %v2130, %v2724
        %v2726 = vlaneseq
        %v2727 = vshrl.u32 %v2726, 7
        %v2728 = vsub.s32 0, %v2727
        %v2729 = vrot.slane %v2132, %v2728
        %v2730 = vlaneseq
        %v2731 = vshrl.u32 %v2730, 7
        %v2732 = vsub.s32 0, %v2731
        %v2733 = vrot.slane %v2115, %v2732
        %v2734 = vlaneseq
        %v2735 = vshrl.u32 %v2734, 7
        %v2736 = vsub.s32 0, %v2735
        %v2737 = vrot.slane %v2129, %v2736
        %v2738 = vlaneseq
        %v2739 = vshrl.u32 %v2738, 7
        %v2740 = vsub.s32 0, %v2739
        %v2741 = vrot.slane %v2131, %v2740
        %v2742 = vlaneseq
        %v2743 = vshrl.u32 %v2742, 7
        %v2744 = vsub.s32 0, %v2743
        %v2745 = vrot.slane %v2133, %v2744
        %v2754 = vlaneseq
        %v2755 = vshrl.u32 %v2754, 7
        %v2756 = vsub.s32 0, %v2755
        %v2757 = vrot.slane %v2158, %v2756
        %v2758 = vlaneseq
        %v2759 = vshrl.u32 %v2758, 7
        %v2760 = vsub.s32 0, %v2759
        %v2761 = vrot.slane %v2172, %v2760
        %v2762 = vlaneseq
        %v2763 = vshrl.u32 %v2762, 7
        %v2764 = vsub.s32 0, %v2763
        %v2765 = vrot.slane %v2180, %v2764
        %v2766 = vlaneseq
        %v2767 = vshrl.u32 %v2766, 7
        %v2768 = vsub.s32 0, %v2767
        %v2769 = vrot.slane %v2182, %v2768
        %v2770 = vlaneseq
        %v2771 = vshrl.u32 %v2770, 7
        %v2772 = vsub.s32 0, %v2771
        %v2773 = vrot.slane %v2165, %v2772
        %v2774 = vlaneseq
        %v2775 = vshrl.u32 %v2774, 7
        %v2776 = vsub.s32 0, %v2775
        %v2777 = vrot.slane %v2179, %v2776
        %v2778 = vlaneseq
        %v2779 = vshrl.u32 %v2778, 7
        %v2780 = vsub.s32 0, %v2779
        %v2781 = vrot.slane %v2181, %v2780
        %v2782 = vlaneseq
        %v2783 = vshrl.u32 %v2782, 7
        %v2784 = vsub.s32 0, %v2783
        %v2785 = vrot.slane %v2183, %v2784
        %v2794 = vlaneseq
        %v2795 = vshrl.u32 %v2794, 7
        %v2796 = vsub.s32 0, %v2795
        %v2797 = vrot.slane %v2208, %v2796
        %v2798 = vlaneseq
        %v2799 = vshrl.u32 %v2798, 7
        %v2800 = vsub.s32 0, %v2799
        %v2801 = vrot.slane %v2222, %v2800
        %v2802 = vlaneseq
        %v2803 = vshrl.u32 %v2802, 7
        %v2804 = vsub.s32 0, %v2803
        %v2805 = vrot.slane %v2230, %v2804
        %v2806 = vlaneseq
        %v2807 = vshrl.u32 %v2806, 7
        %v2808 = vsub.s32 0, %v2807
        %v2809 = vrot.slane %v2232, %v2808
        %v2810 = vlaneseq
        %v2811 = vshrl.u32 %v2810, 7
        %v2812 = vsub.s32 0, %v2811
        %v2813 = vrot.slane %v2215, %v2812
        %v2814 = vlaneseq
        %v2815 = vshrl.u32 %v2814, 7
        %v2816 = vsub.s32 0, %v2815
        %v2817 = vrot.slane %v2229, %v2816
        %v2818 = vlaneseq
        %v2819 = vshrl.u32 %v2818, 7
        %v2820 = vsub.s32 0, %v2819
        %v2821 = vrot.slane %v2231, %v2820
        %v2822 = vlaneseq
        %v2823 = vshrl.u32 %v2822, 7
        %v2824 = vsub.s32 0, %v2823
        %v2825 = vrot.slane %v2233, %v2824
        %v2834 = vlaneseq
        %v2835 = vshrl.u32 %v2834, 7
        %v2836 = vsub.s32 0, %v2835
        %v2837 = vrot.slane %v2258, %v2836
        %v2838 = vlaneseq
        %v2839 = vshrl.u32 %v2838, 7
        %v2840 = vsub.s32 0, %v2839
        %v2841 = vrot.slane %v2272, %v2840
        %v2842 = vlaneseq
        %v2843 = vshrl.u32 %v2842, 7
        %v2844 = vsub.s32 0, %v2843
        %v2845 = vrot.slane %v2280, %v2844
        %v2846 = vlaneseq
        %v2847 = vshrl.u32 %v2846, 7
        %v2848 = vsub.s32 0, %v2847
        %v2849 = vrot.slane %v2282, %v2848
        %v2850 = vlaneseq
        %v2851 = vshrl.u32 %v2850, 7
        %v2852 = vsub.s32 0, %v2851
        %v2853 = vrot.slane %v2265, %v2852
        %v2854 = vlaneseq
        %v2855 = vshrl.u32 %v2854, 7
        %v2856 = vsub.s32 0, %v2855
        %v2857 = vrot.slane %v2279, %v2856
        %v2858 = vlaneseq
        %v2859 = vshrl.u32 %v2858, 7
        %v2860 = vsub.s32 0, %v2859
        %v2861 = vrot.slane %v2281, %v2860
        %v2862 = vlaneseq
        %v2863 = vshrl.u32 %v2862, 7
        %v2864 = vsub.s32 0, %v2863
        %v2865 = vrot.slane %v2283, %v2864
        %v2874 = vlaneseq
        %v2875 = vshrl.u32 %v2874, 7
        %v2876 = vsub.s32 0, %v2875
        %v2877 = vrot.slane %v2308, %v2876
        %v2878 = vlaneseq
        %v2879 = vshrl.u32 %v2878, 7
        %v2880 = vsub.s32 0, %v2879
        %v2881 = vrot.slane %v2322, %v2880
        %v2882 = vlaneseq
        %v2883 = vshrl.u32 %v2882, 7
        %v2884 = vsub.s32 0, %v2883
        %v2885 = vrot.slane %v2330, %v2884
        %v2886 = vlaneseq
        %v2887 = vshrl.u32 %v2886, 7
        %v2888 = vsub.s32 0, %v2887
        %v2889 = vrot.slane %v2332, %v2888
        %v2890 = vlaneseq
        %v2891 = vshrl.u32 %v2890, 7
        %v2892 = vsub.s32 0, %v2891
        %v2893 = vrot.slane %v2315, %v2892
        %v2894 = vlaneseq
        %v2895 = vshrl.u32 %v2894, 7
        %v2896 = vsub.s32 0, %v2895
        %v2897 = vrot.slane %v2329, %v2896
        %v2898 = vlaneseq
        %v2899 = vshrl.u32 %v2898, 7
        %v2900 = vsub.s32 0, %v2899
        %v2901 = vrot.slane %v2331, %v2900
        %v2902 = vlaneseq
        %v2903 = vshrl.u32 %v2902, 7
        %v2904 = vsub.s32 0, %v2903
        %v2905 = vrot.slane %v2333, %v2904
        %v2914 = vlaneseq
        %v2915 = vshrl.u32 %v2914, 7
        %v2916 = vsub.s32 0, %v2915
        %v2917 = vrot.slane %v2358, %v2916
        %v2918 = vlaneseq
        %v2919 = vshrl.u32 %v2918, 7
        %v2920 = vsub.s32 0, %v2919
        %v2921 = vrot.slane %v2372, %v2920
        %v2922 = vlaneseq
        %v2923 = vshrl.u32 %v2922, 7
        %v2924 = vsub.s32 0, %v2923
        %v2925 = vrot.slane %v2380, %v2924
        %v2926 = vlaneseq
        %v2927 = vshrl.u32 %v2926, 7
        %v2928 = vsub.s32 0, %v2927
        %v2929 = vrot.slane %v2382, %v2928
        %v2930 = vlaneseq
        %v2931 = vshrl.u32 %v2930, 7
        %v2932 = vsub.s32 0, %v2931
        %v2933 = vrot.slane %v2365, %v2932
        %v2934 = vlaneseq
        %v2935 = vshrl.u32 %v2934, 7
        %v2936 = vsub.s32 0, %v2935
        %v2937 = vrot.slane %v2379, %v2936
        %v2938 = vlaneseq
        %v2939 = vshrl.u32 %v2938, 7
        %v2940 = vsub.s32 0, %v2939
        %v2941 = vrot.slane %v2381, %v2940
        %v2942 = vlaneseq
        %v2943 = vshrl.u32 %v2942, 7
        %v2944 = vsub.s32 0, %v2943
        %v2945 = vrot.slane %v2383, %v2944
        %v2954 = vlaneseq
        %v2955 = vshrl.u32 %v2954, 7
        %v2956 = vsub.s32 0, %v2955
        %v2957 = vrot.slane %v2408, %v2956
        %v2958 = vlaneseq
        %v2959 = vshrl.u32 %v2958, 7
        %v2960 = vsub.s32 0, %v2959
        %v2961 = vrot.slane %v2422, %v2960
        %v2962 = vlaneseq
        %v2963 = vshrl.u32 %v2962, 7
        %v2964 = vsub.s32 0, %v2963
        %v2965 = vrot.slane %v2430, %v2964
        %v2966 = vlaneseq
        %v2967 = vshrl.u32 %v2966, 7
        %v2968 = vsub.s32 0, %v2967
        %v2969 = vrot.slane %v2432, %v2968
        %v2970 = vlaneseq
        %v2971 = vshrl.u32 %v2970, 7
        %v2972 = vsub.s32 0, %v2971
        %v2973 = vrot.slane %v2415, %v2972
        %v2974 = vlaneseq
        %v2975 = vshrl.u32 %v2974, 7
        %v2976 = vsub.s32 0, %v2975
        %v2977 = vrot.slane %v2429, %v2976
        %v2978 = vlaneseq
        %v2979 = vshrl.u32 %v2978, 7
        %v2980 = vsub.s32 0, %v2979
        %v2981 = vrot.slane %v2431, %v2980
        %v2982 = vlaneseq
        %v2983 = vshrl.u32 %v2982, 7
        %v2984 = vsub.s32 0, %v2983
        %v2985 = vrot.slane %v2433, %v2984
        %vm2994 = vcmask 1040384
        %v2995 = vsel %vm2994, %v1642, %v2437
        %v2996 = vsel %vm2994, %v1656, %v2441
        %v2997 = vsel %vm2994, %v1664, %v2445
        %v2998 = vsel %vm2994, %v1666, %v2449
        %v2999 = vsel %vm2994, %v1649, %v2453
        %v3000 = vsel %vm2994, %v1663, %v2457
        %v3001 = vsel %vm2994, %v1665, %v2461
        %v3002 = vsel %vm2994, %v1667, %v2465
        %v3003 = vsel %vm339, %v2995, %v2477
        %v3004 = vsel %vm339, %v2996, %v2481
        %v3005 = vsel %vm339, %v2997, %v2485
        %v3006 = vsel %vm339, %v2998, %v2489
        %v3007 = vsel %vm339, %v2999, %v2493
        %v3008 = vsel %vm339, %v3000, %v2497
        %v3009 = vsel %vm339, %v3001, %v2501
        %v3010 = vsel %vm339, %v3002, %v2505
        %vm3011 = vcmask 1042432
        %v3012 = vsel %vm3011, %v3003, %v2517
        %v3013 = vsel %vm3011, %v3004, %v2521
        %v3014 = vsel %vm3011, %v3005, %v2525
        %v3015 = vsel %vm3011, %v3006, %v2529
        %v3016 = vsel %vm3011, %v3007, %v2533
        %v3017 = vsel %vm3011, %v3008, %v2537
        %v3018 = vsel %vm3011, %v3009, %v2541
        %v3019 = vsel %vm3011, %v3010, %v2545
        %v3020 = vsel %vm343, %v3012, %v2557
        %v3021 = vsel %vm343, %v3013, %v2561
        %v3022 = vsel %vm343, %v3014, %v2565
        %v3023 = vsel %vm343, %v3015, %v2569
        %v3024 = vsel %vm343, %v3016, %v2573
        %v3025 = vsel %vm343, %v3017, %v2577
        %v3026 = vsel %vm343, %v3018, %v2581
        %v3027 = vsel %vm343, %v3019, %v2585
        %vm3028 = vcmask 1044480
        %v3029 = vsel %vm3028, %v3020, %v2597
        %v3030 = vsel %vm3028, %v3021, %v2601
        %v3031 = vsel %vm3028, %v3022, %v2605
        %v3032 = vsel %vm3028, %v3023, %v2609
        %v3033 = vsel %vm3028, %v3024, %v2613
        %v3034 = vsel %vm3028, %v3025, %v2617
        %v3035 = vsel %vm3028, %v3026, %v2621
        %v3036 = vsel %vm3028, %v3027, %v2625
        %v3037 = vsel %vm346, %v3029, %v2637
        %v3038 = vsel %vm346, %v3030, %v2641
        %v3039 = vsel %vm346, %v3031, %v2645
        %v3040 = vsel %vm346, %v3032, %v2649
        %v3041 = vsel %vm346, %v3033, %v2653
        %v3042 = vsel %vm346, %v3034, %v2657
        %v3043 = vsel %vm346, %v3035, %v2661
        %v3044 = vsel %vm346, %v3036, %v2665
        %vm3045 = vcmask 1046528
        %v3046 = vsel %vm3045, %v3037, %v2677
        %v3047 = vsel %vm3045, %v3038, %v2681
        %v3048 = vsel %vm3045, %v3039, %v2685
        %v3049 = vsel %vm3045, %v3040, %v2689
        %v3050 = vsel %vm3045, %v3041, %v2693
        %v3051 = vsel %vm3045, %v3042, %v2697
        %v3052 = vsel %vm3045, %v3043, %v2701
        %v3053 = vsel %vm3045, %v3044, %v2705
        %v3054 = vsel %vm2994, %v2050, %v2717
        %v3055 = vsel %vm2994, %v2064, %v2721
        %v3056 = vsel %vm2994, %v2072, %v2725
        %v3057 = vsel %vm2994, %v2074, %v2729
        %v3058 = vsel %vm2994, %v2057, %v2733
        %v3059 = vsel %vm2994, %v2071, %v2737
        %v3060 = vsel %vm2994, %v2073, %v2741
        %v3061 = vsel %vm2994, %v2075, %v2745
        %v3062 = vsel %vm339, %v3054, %v2757
        %v3063 = vsel %vm339, %v3055, %v2761
        %v3064 = vsel %vm339, %v3056, %v2765
        %v3065 = vsel %vm339, %v3057, %v2769
        %v3066 = vsel %vm339, %v3058, %v2773
        %v3067 = vsel %vm339, %v3059, %v2777
        %v3068 = vsel %vm339, %v3060, %v2781
        %v3069 = vsel %vm339, %v3061, %v2785
        %v3070 = vsel %vm3011, %v3062, %v2797
        %v3071 = vsel %vm3011, %v3063, %v2801
        %v3072 = vsel %vm3011, %v3064, %v2805
        %v3073 = vsel %vm3011, %v3065, %v2809
        %v3074 = vsel %vm3011, %v3066, %v2813
        %v3075 = vsel %vm3011, %v3067, %v2817
        %v3076 = vsel %vm3011, %v3068, %v2821
        %v3077 = vsel %vm3011, %v3069, %v2825
        %v3078 = vsel %vm343, %v3070, %v2837
        %v3079 = vsel %vm343, %v3071, %v2841
        %v3080 = vsel %vm343, %v3072, %v2845
        %v3081 = vsel %vm343, %v3073, %v2849
        %v3082 = vsel %vm343, %v3074, %v2853
        %v3083 = vsel %vm343, %v3075, %v2857
        %v3084 = vsel %vm343, %v3076, %v2861
        %v3085 = vsel %vm343, %v3077, %v2865
        %v3086 = vsel %vm3028, %v3078, %v2877
        %v3087 = vsel %vm3028, %v3079, %v2881
        %v3088 = vsel %vm3028, %v3080, %v2885
        %v3089 = vsel %vm3028, %v3081, %v2889
        %v3090 = vsel %vm3028, %v3082, %v2893
        %v3091 = vsel %vm3028, %v3083, %v2897
        %v3092 = vsel %vm3028, %v3084, %v2901
        %v3093 = vsel %vm3028, %v3085, %v2905
        %v3094 = vsel %vm346, %v3086, %v2917
        %v3095 = vsel %vm346, %v3087, %v2921
        %v3096 = vsel %vm346, %v3088, %v2925
        %v3097 = vsel %vm346, %v3089, %v2929
        %v3098 = vsel %vm346, %v3090, %v2933
        %v3099 = vsel %vm346, %v3091, %v2937
        %v3100 = vsel %vm346, %v3092, %v2941
        %v3101 = vsel %vm346, %v3093, %v2945
        %v3102 = vsel %vm3045, %v3094, %v2957
        %v3103 = vsel %vm3045, %v3095, %v2961
        %v3104 = vsel %vm3045, %v3096, %v2965
        %v3105 = vsel %vm3045, %v3097, %v2969
        %v3106 = vsel %vm3045, %v3098, %v2973
        %v3107 = vsel %vm3045, %v3099, %v2977
        %v3108 = vsel %vm3045, %v3100, %v2981
        %v3109 = vsel %vm3045, %v3101, %v2985
        %vm3110 = vcmask 261120
        %3111 = vst.msk [vmem:[%s227] sm:$0xff] %vm3110, %v3046
        %3112 = vst.msk [vmem:[%s227 + $0x8] sm:$0xff] %vm3110, %v3102
        %3113 = vst.msk [vmem:[%s227 + $0x10] sm:$0xff] %vm3110, %v3047
        %3114 = vst.msk [vmem:[%s227 + $0x18] sm:$0xff] %vm3110, %v3103
        %3115 = vst.msk [vmem:[%s227 + $0x20] sm:$0xff] %vm3110, %v3048
        %3116 = vst.msk [vmem:[%s227 + $0x28] sm:$0xff] %vm3110, %v3104
        %3117 = vst.msk [vmem:[%s227 + $0x30] sm:$0xff] %vm3110, %v3049
        %3118 = vst.msk [vmem:[%s227 + $0x38] sm:$0xff] %vm3110, %v3105
        %3119 = vst.msk [vmem:[%s227 + $0x40] sm:$0xff] %vm3110, %v3050
        %3120 = vst.msk [vmem:[%s227 + $0x48] sm:$0xff] %vm3110, %v3106
        %3121 = vst.msk [vmem:[%s227 + $0x50] sm:$0xff] %vm3110, %v3051
        %3122 = vst.msk [vmem:[%s227 + $0x58] sm:$0xff] %vm3110, %v3107
        %3123 = vst.msk [vmem:[%s227 + $0x60] sm:$0xff] %vm3110, %v3052
        %3124 = vst.msk [vmem:[%s227 + $0x68] sm:$0xff] %vm3110, %v3108
        %3125 = vst.msk [vmem:[%s227 + $0x70] sm:$0xff] %vm3110, %v3053
        %3126 = vst.msk [vmem:[%s227 + $0x78] sm:$0xff] %vm3110, %v3109
        %s3127 = sand.u32 %s111, 1
        %s3128 = scalar_lea.sflag [#allocation4], %s3127
        %s3129 = sand.u32 %s111, 1
        %s3130 = smul.addr %s3129, 128
        %s3131 = scalar_lea.vmem [#allocation8], %s3130
        // Predicated region
        $region45: #{tpu_custom_call.1} parent=31 // pred_check
          %p3132 = pneg %p121
        $region46: #{tpu_custom_call.1} parent=31 // pred_check_branch
          %3134 = sbr.rel (%p3132) target = $region48
        $region47: #{tpu_custom_call.1} parent=31 // pred_region
          #allocation10 [shape = 'u32[6]{0}', space=smem, size = 0x18, scoped, tag = 'DMA stride descriptor']
          %s3135 = smul.u32 2, %s26
          %s3137 = ssub.s32 2048, 2048
          %3138 = vsyncadd %s3128, %s3137
          %s3139 = smul.addr %s25, 32
          %s3140 = sadd.s32 %s3135, %s3139
          %s3141 = smul.addr %s3140, 128
          %s3142 = scalar_lea.hbm %s3, %s3141
          %s3144 = sshll.u32 1, 14
          %s3145 = sxor.u32 4294967295, %s3144
          %s3148 = sshll.u32 7, 18
          %s3149 = sxor.u32 4294967295, %s3148
          %s3150 = sand.u32 0, %s3149
          %s3152 = sor.u32 %s3150, 0
          %s3154 = sshll.u32 3, 24
          %s3155 = sxor.u32 4294967295, %s3154
          %s3156 = sand.u32 %s3152, %s3155
          %s3158 = sor.u32 %s3156, 0
          %s3159 = sshll.u32 %s3131, 4
          %s3160 = int_to_ptr.vmem [resolvable:$true] %s3159
          %3166 = sst [smem:[#allocation10]] 256
          %s3167 = scalar_lea.smem [#allocation10], 1
          %3168 = sst [smem:[%s3167]] 512
          %s3169 = scalar_lea.smem [#allocation10], 2
          %3170 = sst [smem:[%s3169]] 2
          %s3171 = scalar_lea.smem [#allocation10], 3
          %3172 = sst [smem:[%s3171]] 128
          %s3173 = scalar_lea.smem [#allocation10], 4
          %3174 = sst [smem:[%s3173]] 128
          %s3175 = scalar_lea.smem [#allocation10], 5
          %3176 = sst [smem:[%s3175]] 8
          %3178 = dma.general %s3160, 2048, %s3142, %s3128, [#allocation9], [#allocation10], %s3158, 0
        $region48: #{tpu_custom_call.1} parent=31 // pred_fallthru
          _
      $region32: #{tpu_custom_call.1} parent=5 // pred_fallthru
        _
      %p3179 = scmp.le.s32.totalorder 2, %s16
      // Predicated region
      $region49: #{tpu_custom_call.1} parent=5 // pred_check
        %p3180 = pneg %p3179
      $region50: #{tpu_custom_call.1} parent=5 // pred_check_branch
        %3182 = sbr.rel (%p3180) target = $region52
      $region51: #{tpu_custom_call.1} parent=5 // pred_region
        %s3183 = ssub.s32 %s16, 2
        // Predicated region
        $region53: #{tpu_custom_call.1} parent=51 // pred_check
          %p3184 = pneg %p127
        $region54: #{tpu_custom_call.1} parent=51 // pred_check_branch
          %3186 = sbr.rel (%p3184) target = $region56
        $region55: #{tpu_custom_call.1} parent=51 // pred_region
          %s3187 = sand.u32 %s112, 1
          %s3188 = scalar_lea.sflag [#allocation4], %s3187
          %s3189 = sand.u32 %s112, 1
          %s3190 = smul.addr %s3189, 128
          %s3191 = scalar_lea.vmem [#allocation8], %s3190
          %3192 = dma.done %s3188, 2048
        $region56: #{tpu_custom_call.1} parent=51 // pred_fallthru
          _
      $region52: #{tpu_custom_call.1} parent=5 // pred_fallthru
        _
    $region6: #{tpu_custom_call.1} parent=1 // loop_footer
      %s20 = sadd.s32 1, %s16
    $region7: #{tpu_custom_call.1} parent=1 // loop_footer_branch
      %15 = sbr.rel target = $region3
    $region8: #{tpu_custom_call.1} parent=1 // loop_exit
      _
    %3193 = vsyncpa [#allocation3], 1
    %s3194 = scalar_lea.sflag [#allocation3], 1
    %3195 = vsyncpa %s3194, 1
    %3196 = vsyncpa [#allocation6], 1
    %3197 = vsyncpa [#allocation4], 1
    %s3198 = scalar_lea.sflag [#allocation4], 1
    %3199 = vsyncpa %s3198, 1

</llo_original>
